<compile_context>
chip_gen: v7x
topology: tpu7x:2x2x1
jax: 0.10.0
libtpu: 0.0.40
codegen_flags: <defaults>
</compile_context>

<pallas_src>
import jax
import jax.numpy as jnp
from jax import lax
from jax.experimental import pallas as pl
from jax.experimental.pallas import tpu as pltpu


# ----------------------------------------------------------------------------
# Fused kernel factory
# ----------------------------------------------------------------------------
def _make_fused_kernel(num_layers, S, Bp, H, unroll_static):
    """Single kernel: num_layers LSTM layers + final Linear, everything in VMEM.

    Ref layout (positional):
      x_ref                       : (S*Bp, F)        time-major, batch-padded, flattened
      per layer l: wih_l, whh_l, b_l : (F_in, 4H), (H, 4H), (1, 4H)
      fc_w_ref, fc_b_ref          : (H, O), (1, O)
      out_ref                     : (Bp, O)
      scratch: pre_sc (S*Bp, 4H), seq_sc (S*Bp, H), h_sc (Bp, H), c_sc (Bp, H)
    """

    def kernel(*refs):
        x_ref = refs[0]
        idx = 1
        layer_refs = []
        for _ in range(num_layers):
            layer_refs.append((refs[idx], refs[idx + 1], refs[idx + 2]))
            idx += 3
        fc_w_ref, fc_b_ref = refs[idx], refs[idx + 1]
        out_ref = refs[idx + 2]
        pre_sc, seq_sc, h_sc, c_sc = refs[idx + 3: idx + 7]

        def gate_math(gates, c_prev):
            i_g = jax.nn.sigmoid(gates[:, 0 * H:1 * H])
            f_g = jax.nn.sigmoid(gates[:, 1 * H:2 * H])
            g_g = jnp.tanh(gates[:, 2 * H:3 * H])
            o_g = jax.nn.sigmoid(gates[:, 3 * H:4 * H])
            c_new = f_g * c_prev + i_g * g_g
            h_new = o_g * jnp.tanh(c_new)
            return h_new, c_new

        for l, (wih_ref, whh_ref, b_ref) in enumerate(layer_refs):
            # ---- hoisted input projection for ALL timesteps at once (off critical path)
            inp = x_ref[...] if l == 0 else seq_sc[...]          # (S*Bp, F_in)
            pre_sc[...] = (
                jnp.dot(inp, wih_ref[...], preferred_element_type=jnp.float32)
                + b_ref[...]
            )                                                    # (S*Bp, 4H)

            # ---- recurrence: only h @ W_hh remains per step
            h_sc[...] = jnp.zeros_like(h_sc)
            c_sc[...] = jnp.zeros_like(c_sc)
            whh = whh_ref[...]                                   # hoisted weight read
            is_last_layer = (l == num_layers - 1)

            def one_step(row, _whh=whh, _last=is_last_layer):
                gates = pre_sc[pl.ds(row, Bp), :] + jnp.dot(
                    h_sc[...], _whh, preferred_element_type=jnp.float32
                )
                h_new, c_new = gate_math(gates, c_sc[...])
                h_sc[...] = h_new
                c_sc[...] = c_new
                if not _last:
                    # next layer's hoisted projection reads this slab
                    seq_sc[pl.ds(row, Bp), :] = h_new

            if unroll_static:
                for t in range(S):                               # static, fully unrolled
                    one_step(t * Bp)
            else:
                def body(t, carry):
                    one_step(pl.multiple_of(t * Bp, Bp))
                    return carry
                lax.fori_loop(0, S, body, 0, unroll=True)

        # ---- final FC on the last-timestep hidden state of the last layer
        out_ref[...] = (
            jnp.dot(h_sc[...], fc_w_ref[...], preferred_element_type=jnp.float32)
            + fc_b_ref[...]
        ).astype(out_ref.dtype)

    return kernel


# ----------------------------------------------------------------------------
# Wrapper (accepts PyTorch batch_first layout (B, S, F))
# ----------------------------------------------------------------------------
def lstm_model_forward(x_bsf, params):
    """x_bsf: (batch, seq, input_size). Returns (batch, output_size)."""
    B, S, F = x_bsf.shape
    H = params["lstm"][0][1].shape[0]
    O = params["fc_w_t"].shape[1]
    Bp = ((B + 7) // 8) * 8  # pad batch to f32 sublane multiple (8)

    xt = jnp.transpose(x_bsf, (1, 0, 2)).astype(jnp.float32)     # (S, B, F) time-major
    if Bp != B:
        xt = jnp.pad(xt, ((0, 0), (0, Bp - B), (0, 0)))
    x2d = xt.reshape(S * Bp, F)                                   # (S*Bp, F)

    args = [x2d]
    for (wih_t, whh_t, b) in params["lstm"]:
        args.extend([wih_t, whh_t, b])
    args.extend([params["fc_w_t"], params["fc_b"]])

    kernel = _make_fused_kernel(
        num_layers=len(params["lstm"]), S=S, Bp=Bp, H=H,
        unroll_static=(S <= 32),
    )
    out = pl.pallas_call(
        kernel,
        out_shape=jax.ShapeDtypeStruct((Bp, O), jnp.float32),
        scratch_shapes=[
            pltpu.VMEM((S * Bp, 4 * H), jnp.float32),  # hoisted preactivations
            pltpu.VMEM((S * Bp, H), jnp.float32),      # per-layer sequence output slab
            pltpu.VMEM((Bp, H), jnp.float32),          # h state
            pltpu.VMEM((Bp, H), jnp.float32),          # c state
        ],
    )(*args)
    return out[:B]


# ----------------------------------------------------------------------------
# Deterministic parameter init (matches nn.LSTM / nn.Linear shapes)
# ----------------------------------------------------------------------------
def init_params(key, input_size, hidden_size, num_layers, output_size):
    bound = 1.0 / jnp.sqrt(jnp.float32(hidden_size))
    layers = []
    for layer in range(num_layers):
        in_f = input_size if layer == 0 else hidden_size
        key, k1, k2, k3, k4 = jax.random.split(key, 5)
        w_ih = jax.random.uniform(k1, (4 * hidden_size, in_f), jnp.float32, -bound, bound)
        w_hh = jax.random.uniform(k2, (4 * hidden_size, hidden_size), jnp.float32, -bound, bound)
        b_ih = jax.random.uniform(k3, (4 * hidden_size,), jnp.float32, -bound, bound)
        b_hh = jax.random.uniform(k4, (4 * hidden_size,), jnp.float32, -bound, bound)
        layers.append((w_ih.T, w_hh.T, (b_ih + b_hh).reshape(1, 4 * hidden_size)))
    key, k5, k6 = jax.random.split(key, 3)
    fc_bound = 1.0 / jnp.sqrt(jnp.float32(hidden_size))
    fc_w = jax.random.uniform(k5, (output_size, hidden_size), jnp.float32, -fc_bound, fc_bound)
    fc_b = jax.random.uniform(k6, (output_size,), jnp.float32, -fc_bound, fc_bound)
    return {"lstm": layers, "fc_w_t": fc_w.T, "fc_b": fc_b.reshape(1, output_size)}


# ----------------------------------------------------------------------------
# Pure-JAX reference (for correctness assertion)
# ----------------------------------------------------------------------------
def reference_forward(x_bsf, params):
    B = x_bsf.shape[0]
    xt = jnp.transpose(x_bsf, (1, 0, 2))
    for (wih_t, whh_t, b) in params["lstm"]:
        H = whh_t.shape[0]
        h = jnp.zeros((B, H), jnp.float32)
        c = jnp.zeros((B, H), jnp.float32)

        def step(carry, x_t):
            h, c = carry
            g = (x_t @ wih_t + b) + h @ whh_t
            i = jax.nn.sigmoid(g[:, 0 * H:1 * H])
            f = jax.nn.sigmoid(g[:, 1 * H:2 * H])
            gg = jnp.tanh(g[:, 2 * H:3 * H])
            o = jax.nn.sigmoid(g[:, 3 * H:4 * H])
            c = f * c + i * gg
            h = o * jnp.tanh(c)
            return (h, c), h

        (_, _), ys = jax.lax.scan(step, (h, c), xt)
        xt = ys
    return xt[-1] @ params["fc_w_t"] + params["fc_b"]


# ----------------------------------------------------------------------------
if __name__ == "__main__":
    batch, seq, input_size = 2, 8, 4
    hidden_size, num_layers, output_size = 32, 2, 4

    key = jax.random.PRNGKey(0)
    key, xk = jax.random.split(key)
    x = jax.random.normal(xk, (batch, seq, input_size), jnp.float32)

    params = init_params(key, input_size, hidden_size, num_layers, output_size)

    out = lstm_model_forward(x, params)
    out = jax.block_until_ready(out)

    ref = jax.block_until_ready(reference_forward(x, params))
    assert out.shape == (batch, output_size)
    assert jnp.allclose(out, ref, atol=2e-5, rtol=2e-5)

    print("KERNEL_OK")
</pallas_src>

<mosaic_0001>
module attributes {stable_mosaic.version = 11 : i64} {
  func.func @kernel(%arg0: memref<64x4xf32, #tpu.memory_space<vmem>>, %arg1: memref<4x128xf32, #tpu.memory_space<vmem>>, %arg2: memref<32x128xf32, #tpu.memory_space<vmem>>, %arg3: memref<1x128xf32, #tpu.memory_space<vmem>>, %arg4: memref<32x128xf32, #tpu.memory_space<vmem>>, %arg5: memref<32x128xf32, #tpu.memory_space<vmem>>, %arg6: memref<1x128xf32, #tpu.memory_space<vmem>>, %arg7: memref<32x4xf32, #tpu.memory_space<vmem>>, %arg8: memref<1x4xf32, #tpu.memory_space<vmem>>, %arg9: memref<8x4xf32, #tpu.memory_space<vmem>>, %arg10: memref<64x128xf32, #tpu.memory_space<vmem>>, %arg11: memref<64x32xf32, #tpu.memory_space<vmem>>, %arg12: memref<8x32xf32, #tpu.memory_space<vmem>>, %arg13: memref<8x32xf32, #tpu.memory_space<vmem>>) attributes {dimension_semantics = [], scalar_prefetch = 0 : i64, scratch_operands = 4 : i64, tpu.core_type = #tpu.core_type<tc>} {
    %c0 = arith.constant 0 : index
    %c0_0 = arith.constant 0 : index
    %0 = vector.load %arg0[%c0, %c0_0] : memref<64x4xf32, #tpu.memory_space<vmem>>, vector<64x4xf32>
    %c0_1 = arith.constant 0 : index
    %c0_2 = arith.constant 0 : index
    %1 = vector.load %arg1[%c0_1, %c0_2] : memref<4x128xf32, #tpu.memory_space<vmem>>, vector<4x128xf32>
    %cst = arith.constant dense<0.000000e+00> : vector<64x128xf32>
    %2 = tpu.matmul %0, %1, %cst {dimension_numbers = #tpu.dot_dimension_numbers<[1], [0], [0], [1], [0, 0, 1, 1], [], []>} : vector<64x4xf32>, vector<4x128xf32>, vector<64x128xf32> -> vector<64x128xf32>
    %c0_3 = arith.constant 0 : index
    %c0_4 = arith.constant 0 : index
    %3 = vector.load %arg3[%c0_3, %c0_4] : memref<1x128xf32, #tpu.memory_space<vmem>>, vector<1x128xf32>
    %4 = vector.broadcast %3 : vector<1x128xf32> to vector<64x128xf32>
    %5 = arith.addf %2, %4 : vector<64x128xf32>
    %c0_5 = arith.constant 0 : index
    %c0_6 = arith.constant 0 : index
    %6 = vector.load %arg10[%c0_5, %c0_6] : memref<64x128xf32, #tpu.memory_space<vmem>>, vector<64x128xf32>
    tpu.vector_store %arg10[%c0_5, %c0_6], %5 {strides = array<i32>} : memref<64x128xf32, #tpu.memory_space<vmem>>, vector<64x128xf32>,
    %cst_7 = arith.constant 0.000000e+00 : f32
    %7 = vector.broadcast %cst_7 : f32 to vector<8x32xf32>
    %c0_8 = arith.constant 0 : index
    %c0_9 = arith.constant 0 : index
    %8 = vector.load %arg12[%c0_8, %c0_9] : memref<8x32xf32, #tpu.memory_space<vmem>>, vector<8x32xf32>
    tpu.vector_store %arg12[%c0_8, %c0_9], %7 {strides = array<i32>} : memref<8x32xf32, #tpu.memory_space<vmem>>, vector<8x32xf32>,
    %cst_10 = arith.constant 0.000000e+00 : f32
    %9 = vector.broadcast %cst_10 : f32 to vector<8x32xf32>
    %c0_11 = arith.constant 0 : index
    %c0_12 = arith.constant 0 : index
    %10 = vector.load %arg13[%c0_11, %c0_12] : memref<8x32xf32, #tpu.memory_space<vmem>>, vector<8x32xf32>
    tpu.vector_store %arg13[%c0_11, %c0_12], %9 {strides = array<i32>} : memref<8x32xf32, #tpu.memory_space<vmem>>, vector<8x32xf32>,
    %c0_13 = arith.constant 0 : index
    %c0_14 = arith.constant 0 : index
    %11 = vector.load %arg2[%c0_13, %c0_14] : memref<32x128xf32, #tpu.memory_space<vmem>>, vector<32x128xf32>
    %c0_15 = arith.constant 0 : index
    %c0_16 = arith.constant 0 : index
    %12 = vector.load %arg10[%c0_15, %c0_16] : memref<64x128xf32, #tpu.memory_space<vmem>>, vector<8x128xf32>
    %c0_17 = arith.constant 0 : index
    %c0_18 = arith.constant 0 : index
    %13 = vector.load %arg12[%c0_17, %c0_18] : memref<8x32xf32, #tpu.memory_space<vmem>>, vector<8x32xf32>
    %cst_19 = arith.constant dense<0.000000e+00> : vector<8x128xf32>
    %14 = tpu.matmul %13, %11, %cst_19 {dimension_numbers = #tpu.dot_dimension_numbers<[1], [0], [0], [1], [0, 0, 1, 1], [], []>} : vector<8x32xf32>, vector<32x128xf32>, vector<8x128xf32> -> vector<8x128xf32>
    %15 = arith.addf %12, %14 : vector<8x128xf32>
    %c0_20 = arith.constant 0 : index
    %c0_21 = arith.constant 0 : index
    %16 = vector.load %arg13[%c0_20, %c0_21] : memref<8x32xf32, #tpu.memory_space<vmem>>, vector<8x32xf32>
    %17 = vector.extract_strided_slice %15 {offsets = [0, 0], sizes = [8, 32], strides = [1, 1]} : vector<8x128xf32> to vector<8x32xf32>
    %18 = arith.negf %17 : vector<8x32xf32>
    %19 = math.exp %18 : vector<8x32xf32>
    %cst_22 = arith.constant 1.000000e+00 : f32
    %20 = vector.broadcast %cst_22 : f32 to vector<8x32xf32>
    %21 = arith.addf %20, %19 : vector<8x32xf32>
    %22 = arith.divf %20, %21 : vector<8x32xf32>
    %23 = vector.extract_strided_slice %15 {offsets = [0, 32], sizes = [8, 32], strides = [1, 1]} : vector<8x128xf32> to vector<8x32xf32>
    %24 = arith.negf %23 : vector<8x32xf32>
    %25 = math.exp %24 : vector<8x32xf32>
    %cst_23 = arith.constant 1.000000e+00 : f32
    %26 = vector.broadcast %cst_23 : f32 to vector<8x32xf32>
    %27 = arith.addf %26, %25 : vector<8x32xf32>
    %28 = arith.divf %26, %27 : vector<8x32xf32>
    %29 = vector.extract_strided_slice %15 {offsets = [0, 64], sizes = [8, 32], strides = [1, 1]} : vector<8x128xf32> to vector<8x32xf32>
    %30 = math.tanh %29 : vector<8x32xf32>
    %31 = vector.extract_strided_slice %15 {offsets = [0, 96], sizes = [8, 32], strides = [1, 1]} : vector<8x128xf32> to vector<8x32xf32>
    %32 = arith.negf %31 : vector<8x32xf32>
    %33 = math.exp %32 : vector<8x32xf32>
    %cst_24 = arith.constant 1.000000e+00 : f32
    %34 = vector.broadcast %cst_24 : f32 to vector<8x32xf32>
    %35 = arith.addf %34, %33 : vector<8x32xf32>
    %36 = arith.divf %34, %35 : vector<8x32xf32>
    %37 = arith.mulf %28, %16 : vector<8x32xf32>
    %38 = arith.mulf %22, %30 : vector<8x32xf32>
    %39 = arith.addf %37, %38 : vector<8x32xf32>
    %40 = math.tanh %39 : vector<8x32xf32>
    %41 = arith.mulf %36, %40 : vector<8x32xf32>
    %c0_25 = arith.constant 0 : index
    %c0_26 = arith.constant 0 : index
    %42 = vector.load %arg12[%c0_25, %c0_26] : memref<8x32xf32, #tpu.memory_space<vmem>>, vector<8x32xf32>
    tpu.vector_store %arg12[%c0_25, %c0_26], %41 {strides = array<i32>} : memref<8x32xf32, #tpu.memory_space<vmem>>, vector<8x32xf32>,
    %c0_27 = arith.constant 0 : index
    %c0_28 = arith.constant 0 : index
    %43 = vector.load %arg13[%c0_27, %c0_28] : memref<8x32xf32, #tpu.memory_space<vmem>>, vector<8x32xf32>
    tpu.vector_store %arg13[%c0_27, %c0_28], %39 {strides = array<i32>} : memref<8x32xf32, #tpu.memory_space<vmem>>, vector<8x32xf32>,
    %c0_29 = arith.constant 0 : index
    %c0_30 = arith.constant 0 : index
    %44 = vector.load %arg11[%c0_29, %c0_30] : memref<64x32xf32, #tpu.memory_space<vmem>>, vector<8x32xf32>
    tpu.vector_store %arg11[%c0_29, %c0_30], %41 {strides = array<i32>} : memref<64x32xf32, #tpu.memory_space<vmem>>, vector<8x32xf32>,
    %c8 = arith.constant 8 : index
    %c0_31 = arith.constant 0 : index
    %45 = vector.load %arg10[%c8, %c0_31] : memref<64x128xf32, #tpu.memory_space<vmem>>, vector<8x128xf32>
    %c0_32 = arith.constant 0 : index
    %c0_33 = arith.constant 0 : index
    %46 = vector.load %arg12[%c0_32, %c0_33] : memref<8x32xf32, #tpu.memory_space<vmem>>, vector<8x32xf32>
    %cst_34 = arith.constant dense<0.000000e+00> : vector<8x128xf32>
    %47 = tpu.matmul %46, %11, %cst_34 {dimension_numbers = #tpu.dot_dimension_numbers<[1], [0], [0], [1], [0, 0, 1, 1], [], []>} : vector<8x32xf32>, vector<32x128xf32>, vector<8x128xf32> -> vector<8x128xf32>
    %48 = arith.addf %45, %47 : vector<8x128xf32>
    %c0_35 = arith.constant 0 : index
    %c0_36 = arith.constant 0 : index
    %49 = vector.load %arg13[%c0_35, %c0_36] : memref<8x32xf32, #tpu.memory_space<vmem>>, vector<8x32xf32>
    %50 = vector.extract_strided_slice %48 {offsets = [0, 0], sizes = [8, 32], strides = [1, 1]} : vector<8x128xf32> to vector<8x32xf32>
    %51 = arith.negf %50 : vector<8x32xf32>
    %52 = math.exp %51 : vector<8x32xf32>
    %cst_37 = arith.constant 1.000000e+00 : f32
    %53 = vector.broadcast %cst_37 : f32 to vector<8x32xf32>
    %54 = arith.addf %53, %52 : vector<8x32xf32>
    %55 = arith.divf %53, %54 : vector<8x32xf32>
    %56 = vector.extract_strided_slice %48 {offsets = [0, 32], sizes = [8, 32], strides = [1, 1]} : vector<8x128xf32> to vector<8x32xf32>
    %57 = arith.negf %56 : vector<8x32xf32>
    %58 = math.exp %57 : vector<8x32xf32>
    %cst_38 = arith.constant 1.000000e+00 : f32
    %59 = vector.broadcast %cst_38 : f32 to vector<8x32xf32>
    %60 = arith.addf %59, %58 : vector<8x32xf32>
    %61 = arith.divf %59, %60 : vector<8x32xf32>
    %62 = vector.extract_strided_slice %48 {offsets = [0, 64], sizes = [8, 32], strides = [1, 1]} : vector<8x128xf32> to vector<8x32xf32>
    %63 = math.tanh %62 : vector<8x32xf32>
    %64 = vector.extract_strided_slice %48 {offsets = [0, 96], sizes = [8, 32], strides = [1, 1]} : vector<8x128xf32> to vector<8x32xf32>
    %65 = arith.negf %64 : vector<8x32xf32>
    %66 = math.exp %65 : vector<8x32xf32>
    %cst_39 = arith.constant 1.000000e+00 : f32
    %67 = vector.broadcast %cst_39 : f32 to vector<8x32xf32>
    %68 = arith.addf %67, %66 : vector<8x32xf32>
    %69 = arith.divf %67, %68 : vector<8x32xf32>
    %70 = arith.mulf %61, %49 : vector<8x32xf32>
    %71 = arith.mulf %55, %63 : vector<8x32xf32>
    %72 = arith.addf %70, %71 : vector<8x32xf32>
    %73 = math.tanh %72 : vector<8x32xf32>
    %74 = arith.mulf %69, %73 : vector<8x32xf32>
    %c0_40 = arith.constant 0 : index
    %c0_41 = arith.constant 0 : index
    %75 = vector.load %arg12[%c0_40, %c0_41] : memref<8x32xf32, #tpu.memory_space<vmem>>, vector<8x32xf32>
    tpu.vector_store %arg12[%c0_40, %c0_41], %74 {strides = array<i32>} : memref<8x32xf32, #tpu.memory_space<vmem>>, vector<8x32xf32>,
    %c0_42 = arith.constant 0 : index
    %c0_43 = arith.constant 0 : index
    %76 = vector.load %arg13[%c0_42, %c0_43] : memref<8x32xf32, #tpu.memory_space<vmem>>, vector<8x32xf32>
    tpu.vector_store %arg13[%c0_42, %c0_43], %72 {strides = array<i32>} : memref<8x32xf32, #tpu.memory_space<vmem>>, vector<8x32xf32>,
    %c8_44 = arith.constant 8 : index
    %c0_45 = arith.constant 0 : index
    %77 = vector.load %arg11[%c8_44, %c0_45] : memref<64x32xf32, #tpu.memory_space<vmem>>, vector<8x32xf32>
    tpu.vector_store %arg11[%c8_44, %c0_45], %74 {strides = array<i32>} : memref<64x32xf32, #tpu.memory_space<vmem>>, vector<8x32xf32>,
    %c16 = arith.constant 16 : index
    %c0_46 = arith.constant 0 : index
    %78 = vector.load %arg10[%c16, %c0_46] : memref<64x128xf32, #tpu.memory_space<vmem>>, vector<8x128xf32>
    %c0_47 = arith.constant 0 : index
    %c0_48 = arith.constant 0 : index
    %79 = vector.load %arg12[%c0_47, %c0_48] : memref<8x32xf32, #tpu.memory_space<vmem>>, vector<8x32xf32>
    %cst_49 = arith.constant dense<0.000000e+00> : vector<8x128xf32>
    %80 = tpu.matmul %79, %11, %cst_49 {dimension_numbers = #tpu.dot_dimension_numbers<[1], [0], [0], [1], [0, 0, 1, 1], [], []>} : vector<8x32xf32>, vector<32x128xf32>, vector<8x128xf32> -> vector<8x128xf32>
    %81 = arith.addf %78, %80 : vector<8x128xf32>
    %c0_50 = arith.constant 0 : index
    %c0_51 = arith.constant 0 : index
    %82 = vector.load %arg13[%c0_50, %c0_51] : memref<8x32xf32, #tpu.memory_space<vmem>>, vector<8x32xf32>
    %83 = vector.extract_strided_slice %81 {offsets = [0, 0], sizes = [8, 32], strides = [1, 1]} : vector<8x128xf32> to vector<8x32xf32>
    %84 = arith.negf %83 : vector<8x32xf32>
    %85 = math.exp %84 : vector<8x32xf32>
    %cst_52 = arith.constant 1.000000e+00 : f32
    %86 = vector.broadcast %cst_52 : f32 to vector<8x32xf32>
    %87 = arith.addf %86, %85 : vector<8x32xf32>
    %88 = arith.divf %86, %87 : vector<8x32xf32>
    %89 = vector.extract_strided_slice %81 {offsets = [0, 32], sizes = [8, 32], strides = [1, 1]} : vector<8x128xf32> to vector<8x32xf32>
    %90 = arith.negf %89 : vector<8x32xf32>
    %91 = math.exp %90 : vector<8x32xf32>
    %cst_53 = arith.constant 1.000000e+00 : f32
    %92 = vector.broadcast %cst_53 : f32 to vector<8x32xf32>
    %93 = arith.addf %92, %91 : vector<8x32xf32>
    %94 = arith.divf %92, %93 : vector<8x32xf32>
    %95 = vector.extract_strided_slice %81 {offsets = [0, 64], sizes = [8, 32], strides = [1, 1]} : vector<8x128xf32> to vector<8x32xf32>
    %96 = math.tanh %95 : vector<8x32xf32>
    %97 = vector.extract_strided_slice %81 {offsets = [0, 96], sizes = [8, 32], strides = [1, 1]} : vector<8x128xf32> to vector<8x32xf32>
    %98 = arith.negf %97 : vector<8x32xf32>
    %99 = math.exp %98 : vector<8x32xf32>
    %cst_54 = arith.constant 1.000000e+00 : f32
    %100 = vector.broadcast %cst_54 : f32 to vector<8x32xf32>
    %101 = arith.addf %100, %99 : vector<8x32xf32>
    %102 = arith.divf %100, %101 : vector<8x32xf32>
    %103 = arith.mulf %94, %82 : vector<8x32xf32>
    %104 = arith.mulf %88, %96 : vector<8x32xf32>
    %105 = arith.addf %103, %104 : vector<8x32xf32>
    %106 = math.tanh %105 : vector<8x32xf32>
    %107 = arith.mulf %102, %106 : vector<8x32xf32>
    %c0_55 = arith.constant 0 : index
    %c0_56 = arith.constant 0 : index
    %108 = vector.load %arg12[%c0_55, %c0_56] : memref<8x32xf32, #tpu.memory_space<vmem>>, vector<8x32xf32>
    tpu.vector_store %arg12[%c0_55, %c0_56], %107 {strides = array<i32>} : memref<8x32xf32, #tpu.memory_space<vmem>>, vector<8x32xf32>,
    %c0_57 = arith.constant 0 : index
    %c0_58 = arith.constant 0 : index
    %109 = vector.load %arg13[%c0_57, %c0_58] : memref<8x32xf32, #tpu.memory_space<vmem>>, vector<8x32xf32>
    tpu.vector_store %arg13[%c0_57, %c0_58], %105 {strides = array<i32>} : memref<8x32xf32, #tpu.memory_space<vmem>>, vector<8x32xf32>,
    %c16_59 = arith.constant 16 : index
    %c0_60 = arith.constant 0 : index
    %110 = vector.load %arg11[%c16_59, %c0_60] : memref<64x32xf32, #tpu.memory_space<vmem>>, vector<8x32xf32>
    tpu.vector_store %arg11[%c16_59, %c0_60], %107 {strides = array<i32>} : memref<64x32xf32, #tpu.memory_space<vmem>>, vector<8x32xf32>,
    %c24 = arith.constant 24 : index
    %c0_61 = arith.constant 0 : index
    %111 = vector.load %arg10[%c24, %c0_61] : memref<64x128xf32, #tpu.memory_space<vmem>>, vector<8x128xf32>
    %c0_62 = arith.constant 0 : index
    %c0_63 = arith.constant 0 : index
    %112 = vector.load %arg12[%c0_62, %c0_63] : memref<8x32xf32, #tpu.memory_space<vmem>>, vector<8x32xf32>
    %cst_64 = arith.constant dense<0.000000e+00> : vector<8x128xf32>
    %113 = tpu.matmul %112, %11, %cst_64 {dimension_numbers = #tpu.dot_dimension_numbers<[1], [0], [0], [1], [0, 0, 1, 1], [], []>} : vector<8x32xf32>, vector<32x128xf32>, vector<8x128xf32> -> vector<8x128xf32>
    %114 = arith.addf %111, %113 : vector<8x128xf32>
    %c0_65 = arith.constant 0 : index
    %c0_66 = arith.constant 0 : index
    %115 = vector.load %arg13[%c0_65, %c0_66] : memref<8x32xf32, #tpu.memory_space<vmem>>, vector<8x32xf32>
    %116 = vector.extract_strided_slice %114 {offsets = [0, 0], sizes = [8, 32], strides = [1, 1]} : vector<8x128xf32> to vector<8x32xf32>
    %117 = arith.negf %116 : vector<8x32xf32>
    %118 = math.exp %117 : vector<8x32xf32>
    %cst_67 = arith.constant 1.000000e+00 : f32
    %119 = vector.broadcast %cst_67 : f32 to vector<8x32xf32>
    %120 = arith.addf %119, %118 : vector<8x32xf32>
    %121 = arith.divf %119, %120 : vector<8x32xf32>
    %122 = vector.extract_strided_slice %114 {offsets = [0, 32], sizes = [8, 32], strides = [1, 1]} : vector<8x128xf32> to vector<8x32xf32>
    %123 = arith.negf %122 : vector<8x32xf32>
    %124 = math.exp %123 : vector<8x32xf32>
    %cst_68 = arith.constant 1.000000e+00 : f32
    %125 = vector.broadcast %cst_68 : f32 to vector<8x32xf32>
    %126 = arith.addf %125, %124 : vector<8x32xf32>
    %127 = arith.divf %125, %126 : vector<8x32xf32>
    %128 = vector.extract_strided_slice %114 {offsets = [0, 64], sizes = [8, 32], strides = [1, 1]} : vector<8x128xf32> to vector<8x32xf32>
    %129 = math.tanh %128 : vector<8x32xf32>
    %130 = vector.extract_strided_slice %114 {offsets = [0, 96], sizes = [8, 32], strides = [1, 1]} : vector<8x128xf32> to vector<8x32xf32>
    %131 = arith.negf %130 : vector<8x32xf32>
    %132 = math.exp %131 : vector<8x32xf32>
    %cst_69 = arith.constant 1.000000e+00 : f32
    %133 = vector.broadcast %cst_69 : f32 to vector<8x32xf32>
    %134 = arith.addf %133, %132 : vector<8x32xf32>
    %135 = arith.divf %133, %134 : vector<8x32xf32>
    %136 = arith.mulf %127, %115 : vector<8x32xf32>
    %137 = arith.mulf %121, %129 : vector<8x32xf32>
    %138 = arith.addf %136, %137 : vector<8x32xf32>
    %139 = math.tanh %138 : vector<8x32xf32>
    %140 = arith.mulf %135, %139 : vector<8x32xf32>
    %c0_70 = arith.constant 0 : index
    %c0_71 = arith.constant 0 : index
    %141 = vector.load %arg12[%c0_70, %c0_71] : memref<8x32xf32, #tpu.memory_space<vmem>>, vector<8x32xf32>
    tpu.vector_store %arg12[%c0_70, %c0_71], %140 {strides = array<i32>} : memref<8x32xf32, #tpu.memory_space<vmem>>, vector<8x32xf32>,
    %c0_72 = arith.constant 0 : index
    %c0_73 = arith.constant 0 : index
    %142 = vector.load %arg13[%c0_72, %c0_73] : memref<8x32xf32, #tpu.memory_space<vmem>>, vector<8x32xf32>
    tpu.vector_store %arg13[%c0_72, %c0_73], %138 {strides = array<i32>} : memref<8x32xf32, #tpu.memory_space<vmem>>, vector<8x32xf32>,
    %c24_74 = arith.constant 24 : index
    %c0_75 = arith.constant 0 : index
    %143 = vector.load %arg11[%c24_74, %c0_75] : memref<64x32xf32, #tpu.memory_space<vmem>>, vector<8x32xf32>
    tpu.vector_store %arg11[%c24_74, %c0_75], %140 {strides = array<i32>} : memref<64x32xf32, #tpu.memory_space<vmem>>, vector<8x32xf32>,
    %c32 = arith.constant 32 : index
    %c0_76 = arith.constant 0 : index
    %144 = vector.load %arg10[%c32, %c0_76] : memref<64x128xf32, #tpu.memory_space<vmem>>, vector<8x128xf32>
    %c0_77 = arith.constant 0 : index
    %c0_78 = arith.constant 0 : index
    %145 = vector.load %arg12[%c0_77, %c0_78] : memref<8x32xf32, #tpu.memory_space<vmem>>, vector<8x32xf32>
    %cst_79 = arith.constant dense<0.000000e+00> : vector<8x128xf32>
    %146 = tpu.matmul %145, %11, %cst_79 {dimension_numbers = #tpu.dot_dimension_numbers<[1], [0], [0], [1], [0, 0, 1, 1], [], []>} : vector<8x32xf32>, vector<32x128xf32>, vector<8x128xf32> -> vector<8x128xf32>
    %147 = arith.addf %144, %146 : vector<8x128xf32>
    %c0_80 = arith.constant 0 : index
    %c0_81 = arith.constant 0 : index
    %148 = vector.load %arg13[%c0_80, %c0_81] : memref<8x32xf32, #tpu.memory_space<vmem>>, vector<8x32xf32>
    %149 = vector.extract_strided_slice %147 {offsets = [0, 0], sizes = [8, 32], strides = [1, 1]} : vector<8x128xf32> to vector<8x32xf32>
    %150 = arith.negf %149 : vector<8x32xf32>
    %151 = math.exp %150 : vector<8x32xf32>
    %cst_82 = arith.constant 1.000000e+00 : f32
    %152 = vector.broadcast %cst_82 : f32 to vector<8x32xf32>
    %153 = arith.addf %152, %151 : vector<8x32xf32>
    %154 = arith.divf %152, %153 : vector<8x32xf32>
    %155 = vector.extract_strided_slice %147 {offsets = [0, 32], sizes = [8, 32], strides = [1, 1]} : vector<8x128xf32> to vector<8x32xf32>
    %156 = arith.negf %155 : vector<8x32xf32>
    %157 = math.exp %156 : vector<8x32xf32>
    %cst_83 = arith.constant 1.000000e+00 : f32
    %158 = vector.broadcast %cst_83 : f32 to vector<8x32xf32>
    %159 = arith.addf %158, %157 : vector<8x32xf32>
    %160 = arith.divf %158, %159 : vector<8x32xf32>
    %161 = vector.extract_strided_slice %147 {offsets = [0, 64], sizes = [8, 32], strides = [1, 1]} : vector<8x128xf32> to vector<8x32xf32>
    %162 = math.tanh %161 : vector<8x32xf32>
    %163 = vector.extract_strided_slice %147 {offsets = [0, 96], sizes = [8, 32], strides = [1, 1]} : vector<8x128xf32> to vector<8x32xf32>
    %164 = arith.negf %163 : vector<8x32xf32>
    %165 = math.exp %164 : vector<8x32xf32>
    %cst_84 = arith.constant 1.000000e+00 : f32
    %166 = vector.broadcast %cst_84 : f32 to vector<8x32xf32>
    %167 = arith.addf %166, %165 : vector<8x32xf32>
    %168 = arith.divf %166, %167 : vector<8x32xf32>
    %169 = arith.mulf %160, %148 : vector<8x32xf32>
    %170 = arith.mulf %154, %162 : vector<8x32xf32>
    %171 = arith.addf %169, %170 : vector<8x32xf32>
    %172 = math.tanh %171 : vector<8x32xf32>
    %173 = arith.mulf %168, %172 : vector<8x32xf32>
    %c0_85 = arith.constant 0 : index
    %c0_86 = arith.constant 0 : index
    %174 = vector.load %arg12[%c0_85, %c0_86] : memref<8x32xf32, #tpu.memory_space<vmem>>, vector<8x32xf32>
    tpu.vector_store %arg12[%c0_85, %c0_86], %173 {strides = array<i32>} : memref<8x32xf32, #tpu.memory_space<vmem>>, vector<8x32xf32>,
    %c0_87 = arith.constant 0 : index
    %c0_88 = arith.constant 0 : index
    %175 = vector.load %arg13[%c0_87, %c0_88] : memref<8x32xf32, #tpu.memory_space<vmem>>, vector<8x32xf32>
    tpu.vector_store %arg13[%c0_87, %c0_88], %171 {strides = array<i32>} : memref<8x32xf32, #tpu.memory_space<vmem>>, vector<8x32xf32>,
    %c32_89 = arith.constant 32 : index
    %c0_90 = arith.constant 0 : index
    %176 = vector.load %arg11[%c32_89, %c0_90] : memref<64x32xf32, #tpu.memory_space<vmem>>, vector<8x32xf32>
    tpu.vector_store %arg11[%c32_89, %c0_90], %173 {strides = array<i32>} : memref<64x32xf32, #tpu.memory_space<vmem>>, vector<8x32xf32>,
    %c40 = arith.constant 40 : index
    %c0_91 = arith.constant 0 : index
    %177 = vector.load %arg10[%c40, %c0_91] : memref<64x128xf32, #tpu.memory_space<vmem>>, vector<8x128xf32>
    %c0_92 = arith.constant 0 : index
    %c0_93 = arith.constant 0 : index
    %178 = vector.load %arg12[%c0_92, %c0_93] : memref<8x32xf32, #tpu.memory_space<vmem>>, vector<8x32xf32>
    %cst_94 = arith.constant dense<0.000000e+00> : vector<8x128xf32>
    %179 = tpu.matmul %178, %11, %cst_94 {dimension_numbers = #tpu.dot_dimension_numbers<[1], [0], [0], [1], [0, 0, 1, 1], [], []>} : vector<8x32xf32>, vector<32x128xf32>, vector<8x128xf32> -> vector<8x128xf32>
    %180 = arith.addf %177, %179 : vector<8x128xf32>
    %c0_95 = arith.constant 0 : index
    %c0_96 = arith.constant 0 : index
    %181 = vector.load %arg13[%c0_95, %c0_96] : memref<8x32xf32, #tpu.memory_space<vmem>>, vector<8x32xf32>
    %182 = vector.extract_strided_slice %180 {offsets = [0, 0], sizes = [8, 32], strides = [1, 1]} : vector<8x128xf32> to vector<8x32xf32>
    %183 = arith.negf %182 : vector<8x32xf32>
    %184 = math.exp %183 : vector<8x32xf32>
    %cst_97 = arith.constant 1.000000e+00 : f32
    %185 = vector.broadcast %cst_97 : f32 to vector<8x32xf32>
    %186 = arith.addf %185, %184 : vector<8x32xf32>
    %187 = arith.divf %185, %186 : vector<8x32xf32>
    %188 = vector.extract_strided_slice %180 {offsets = [0, 32], sizes = [8, 32], strides = [1, 1]} : vector<8x128xf32> to vector<8x32xf32>
    %189 = arith.negf %188 : vector<8x32xf32>
    %190 = math.exp %189 : vector<8x32xf32>
    %cst_98 = arith.constant 1.000000e+00 : f32
    %191 = vector.broadcast %cst_98 : f32 to vector<8x32xf32>
    %192 = arith.addf %191, %190 : vector<8x32xf32>
    %193 = arith.divf %191, %192 : vector<8x32xf32>
    %194 = vector.extract_strided_slice %180 {offsets = [0, 64], sizes = [8, 32], strides = [1, 1]} : vector<8x128xf32> to vector<8x32xf32>
    %195 = math.tanh %194 : vector<8x32xf32>
    %196 = vector.extract_strided_slice %180 {offsets = [0, 96], sizes = [8, 32], strides = [1, 1]} : vector<8x128xf32> to vector<8x32xf32>
    %197 = arith.negf %196 : vector<8x32xf32>
    %198 = math.exp %197 : vector<8x32xf32>
    %cst_99 = arith.constant 1.000000e+00 : f32
    %199 = vector.broadcast %cst_99 : f32 to vector<8x32xf32>
    %200 = arith.addf %199, %198 : vector<8x32xf32>
    %201 = arith.divf %199, %200 : vector<8x32xf32>
    %202 = arith.mulf %193, %181 : vector<8x32xf32>
    %203 = arith.mulf %187, %195 : vector<8x32xf32>
    %204 = arith.addf %202, %203 : vector<8x32xf32>
    %205 = math.tanh %204 : vector<8x32xf32>
    %206 = arith.mulf %201, %205 : vector<8x32xf32>
    %c0_100 = arith.constant 0 : index
    %c0_101 = arith.constant 0 : index
    %207 = vector.load %arg12[%c0_100, %c0_101] : memref<8x32xf32, #tpu.memory_space<vmem>>, vector<8x32xf32>
    tpu.vector_store %arg12[%c0_100, %c0_101], %206 {strides = array<i32>} : memref<8x32xf32, #tpu.memory_space<vmem>>, vector<8x32xf32>,
    %c0_102 = arith.constant 0 : index
    %c0_103 = arith.constant 0 : index
    %208 = vector.load %arg13[%c0_102, %c0_103] : memref<8x32xf32, #tpu.memory_space<vmem>>, vector<8x32xf32>
    tpu.vector_store %arg13[%c0_102, %c0_103], %204 {strides = array<i32>} : memref<8x32xf32, #tpu.memory_space<vmem>>, vector<8x32xf32>,
    %c40_104 = arith.constant 40 : index
    %c0_105 = arith.constant 0 : index
    %209 = vector.load %arg11[%c40_104, %c0_105] : memref<64x32xf32, #tpu.memory_space<vmem>>, vector<8x32xf32>
    tpu.vector_store %arg11[%c40_104, %c0_105], %206 {strides = array<i32>} : memref<64x32xf32, #tpu.memory_space<vmem>>, vector<8x32xf32>,
    %c48 = arith.constant 48 : index
    %c0_106 = arith.constant 0 : index
    %210 = vector.load %arg10[%c48, %c0_106] : memref<64x128xf32, #tpu.memory_space<vmem>>, vector<8x128xf32>
    %c0_107 = arith.constant 0 : index
    %c0_108 = arith.constant 0 : index
    %211 = vector.load %arg12[%c0_107, %c0_108] : memref<8x32xf32, #tpu.memory_space<vmem>>, vector<8x32xf32>
    %cst_109 = arith.constant dense<0.000000e+00> : vector<8x128xf32>
    %212 = tpu.matmul %211, %11, %cst_109 {dimension_numbers = #tpu.dot_dimension_numbers<[1], [0], [0], [1], [0, 0, 1, 1], [], []>} : vector<8x32xf32>, vector<32x128xf32>, vector<8x128xf32> -> vector<8x128xf32>
    %213 = arith.addf %210, %212 : vector<8x128xf32>
    %c0_110 = arith.constant 0 : index
    %c0_111 = arith.constant 0 : index
    %214 = vector.load %arg13[%c0_110, %c0_111] : memref<8x32xf32, #tpu.memory_space<vmem>>, vector<8x32xf32>
    %215 = vector.extract_strided_slice %213 {offsets = [0, 0], sizes = [8, 32], strides = [1, 1]} : vector<8x128xf32> to vector<8x32xf32>
    %216 = arith.negf %215 : vector<8x32xf32>
    %217 = math.exp %216 : vector<8x32xf32>
    %cst_112 = arith.constant 1.000000e+00 : f32
    %218 = vector.broadcast %cst_112 : f32 to vector<8x32xf32>
    %219 = arith.addf %218, %217 : vector<8x32xf32>
    %220 = arith.divf %218, %219 : vector<8x32xf32>
    %221 = vector.extract_strided_slice %213 {offsets = [0, 32], sizes = [8, 32], strides = [1, 1]} : vector<8x128xf32> to vector<8x32xf32>
    %222 = arith.negf %221 : vector<8x32xf32>
    %223 = math.exp %222 : vector<8x32xf32>
    %cst_113 = arith.constant 1.000000e+00 : f32
    %224 = vector.broadcast %cst_113 : f32 to vector<8x32xf32>
    %225 = arith.addf %224, %223 : vector<8x32xf32>
    %226 = arith.divf %224, %225 : vector<8x32xf32>
    %227 = vector.extract_strided_slice %213 {offsets = [0, 64], sizes = [8, 32], strides = [1, 1]} : vector<8x128xf32> to vector<8x32xf32>
    %228 = math.tanh %227 : vector<8x32xf32>
    %229 = vector.extract_strided_slice %213 {offsets = [0, 96], sizes = [8, 32], strides = [1, 1]} : vector<8x128xf32> to vector<8x32xf32>
    %230 = arith.negf %229 : vector<8x32xf32>
    %231 = math.exp %230 : vector<8x32xf32>
    %cst_114 = arith.constant 1.000000e+00 : f32
    %232 = vector.broadcast %cst_114 : f32 to vector<8x32xf32>
    %233 = arith.addf %232, %231 : vector<8x32xf32>
    %234 = arith.divf %232, %233 : vector<8x32xf32>
    %235 = arith.mulf %226, %214 : vector<8x32xf32>
    %236 = arith.mulf %220, %228 : vector<8x32xf32>
    %237 = arith.addf %235, %236 : vector<8x32xf32>
    %238 = math.tanh %237 : vector<8x32xf32>
    %239 = arith.mulf %234, %238 : vector<8x32xf32>
    %c0_115 = arith.constant 0 : index
    %c0_116 = arith.constant 0 : index
    %240 = vector.load %arg12[%c0_115, %c0_116] : memref<8x32xf32, #tpu.memory_space<vmem>>, vector<8x32xf32>
    tpu.vector_store %arg12[%c0_115, %c0_116], %239 {strides = array<i32>} : memref<8x32xf32, #tpu.memory_space<vmem>>, vector<8x32xf32>,
    %c0_117 = arith.constant 0 : index
    %c0_118 = arith.constant 0 : index
    %241 = vector.load %arg13[%c0_117, %c0_118] : memref<8x32xf32, #tpu.memory_space<vmem>>, vector<8x32xf32>
    tpu.vector_store %arg13[%c0_117, %c0_118], %237 {strides = array<i32>} : memref<8x32xf32, #tpu.memory_space<vmem>>, vector<8x32xf32>,
    %c48_119 = arith.constant 48 : index
    %c0_120 = arith.constant 0 : index
    %242 = vector.load %arg11[%c48_119, %c0_120] : memref<64x32xf32, #tpu.memory_space<vmem>>, vector<8x32xf32>
    tpu.vector_store %arg11[%c48_119, %c0_120], %239 {strides = array<i32>} : memref<64x32xf32, #tpu.memory_space<vmem>>, vector<8x32xf32>,
    %c56 = arith.constant 56 : index
    %c0_121 = arith.constant 0 : index
    %243 = vector.load %arg10[%c56, %c0_121] : memref<64x128xf32, #tpu.memory_space<vmem>>, vector<8x128xf32>
    %c0_122 = arith.constant 0 : index
    %c0_123 = arith.constant 0 : index
    %244 = vector.load %arg12[%c0_122, %c0_123] : memref<8x32xf32, #tpu.memory_space<vmem>>, vector<8x32xf32>
    %cst_124 = arith.constant dense<0.000000e+00> : vector<8x128xf32>
    %245 = tpu.matmul %244, %11, %cst_124 {dimension_numbers = #tpu.dot_dimension_numbers<[1], [0], [0], [1], [0, 0, 1, 1], [], []>} : vector<8x32xf32>, vector<32x128xf32>, vector<8x128xf32> -> vector<8x128xf32>
    %246 = arith.addf %243, %245 : vector<8x128xf32>
    %c0_125 = arith.constant 0 : index
    %c0_126 = arith.constant 0 : index
    %247 = vector.load %arg13[%c0_125, %c0_126] : memref<8x32xf32, #tpu.memory_space<vmem>>, vector<8x32xf32>
    %248 = vector.extract_strided_slice %246 {offsets = [0, 0], sizes = [8, 32], strides = [1, 1]} : vector<8x128xf32> to vector<8x32xf32>
    %249 = arith.negf %248 : vector<8x32xf32>
    %250 = math.exp %249 : vector<8x32xf32>
    %cst_127 = arith.constant 1.000000e+00 : f32
    %251 = vector.broadcast %cst_127 : f32 to vector<8x32xf32>
    %252 = arith.addf %251, %250 : vector<8x32xf32>
    %253 = arith.divf %251, %252 : vector<8x32xf32>
    %254 = vector.extract_strided_slice %246 {offsets = [0, 32], sizes = [8, 32], strides = [1, 1]} : vector<8x128xf32> to vector<8x32xf32>
    %255 = arith.negf %254 : vector<8x32xf32>
    %256 = math.exp %255 : vector<8x32xf32>
    %cst_128 = arith.constant 1.000000e+00 : f32
    %257 = vector.broadcast %cst_128 : f32 to vector<8x32xf32>
    %258 = arith.addf %257, %256 : vector<8x32xf32>
    %259 = arith.divf %257, %258 : vector<8x32xf32>
    %260 = vector.extract_strided_slice %246 {offsets = [0, 64], sizes = [8, 32], strides = [1, 1]} : vector<8x128xf32> to vector<8x32xf32>
    %261 = math.tanh %260 : vector<8x32xf32>
    %262 = vector.extract_strided_slice %246 {offsets = [0, 96], sizes = [8, 32], strides = [1, 1]} : vector<8x128xf32> to vector<8x32xf32>
    %263 = arith.negf %262 : vector<8x32xf32>
    %264 = math.exp %263 : vector<8x32xf32>
    %cst_129 = arith.constant 1.000000e+00 : f32
    %265 = vector.broadcast %cst_129 : f32 to vector<8x32xf32>
    %266 = arith.addf %265, %264 : vector<8x32xf32>
    %267 = arith.divf %265, %266 : vector<8x32xf32>
    %268 = arith.mulf %259, %247 : vector<8x32xf32>
    %269 = arith.mulf %253, %261 : vector<8x32xf32>
    %270 = arith.addf %268, %269 : vector<8x32xf32>
    %271 = math.tanh %270 : vector<8x32xf32>
    %272 = arith.mulf %267, %271 : vector<8x32xf32>
    %c0_130 = arith.constant 0 : index
    %c0_131 = arith.constant 0 : index
    %273 = vector.load %arg12[%c0_130, %c0_131] : memref<8x32xf32, #tpu.memory_space<vmem>>, vector<8x32xf32>
    tpu.vector_store %arg12[%c0_130, %c0_131], %272 {strides = array<i32>} : memref<8x32xf32, #tpu.memory_space<vmem>>, vector<8x32xf32>,
    %c0_132 = arith.constant 0 : index
    %c0_133 = arith.constant 0 : index
    %274 = vector.load %arg13[%c0_132, %c0_133] : memref<8x32xf32, #tpu.memory_space<vmem>>, vector<8x32xf32>
    tpu.vector_store %arg13[%c0_132, %c0_133], %270 {strides = array<i32>} : memref<8x32xf32, #tpu.memory_space<vmem>>, vector<8x32xf32>,
    %c56_134 = arith.constant 56 : index
    %c0_135 = arith.constant 0 : index
    %275 = vector.load %arg11[%c56_134, %c0_135] : memref<64x32xf32, #tpu.memory_space<vmem>>, vector<8x32xf32>
    tpu.vector_store %arg11[%c56_134, %c0_135], %272 {strides = array<i32>} : memref<64x32xf32, #tpu.memory_space<vmem>>, vector<8x32xf32>,
    %c0_136 = arith.constant 0 : index
    %c0_137 = arith.constant 0 : index
    %276 = vector.load %arg11[%c0_136, %c0_137] : memref<64x32xf32, #tpu.memory_space<vmem>>, vector<64x32xf32>
    %c0_138 = arith.constant 0 : index
    %c0_139 = arith.constant 0 : index
    %277 = vector.load %arg4[%c0_138, %c0_139] : memref<32x128xf32, #tpu.memory_space<vmem>>, vector<32x128xf32>
    %cst_140 = arith.constant dense<0.000000e+00> : vector<64x128xf32>
    %278 = tpu.matmul %276, %277, %cst_140 {dimension_numbers = #tpu.dot_dimension_numbers<[1], [0], [0], [1], [0, 0, 1, 1], [], []>} : vector<64x32xf32>, vector<32x128xf32>, vector<64x128xf32> -> vector<64x128xf32>
    %c0_141 = arith.constant 0 : index
    %c0_142 = arith.constant 0 : index
    %279 = vector.load %arg6[%c0_141, %c0_142] : memref<1x128xf32, #tpu.memory_space<vmem>>, vector<1x128xf32>
    %280 = vector.broadcast %279 : vector<1x128xf32> to vector<64x128xf32>
    %281 = arith.addf %278, %280 : vector<64x128xf32>
    %c0_143 = arith.constant 0 : index
    %c0_144 = arith.constant 0 : index
    %282 = vector.load %arg10[%c0_143, %c0_144] : memref<64x128xf32, #tpu.memory_space<vmem>>, vector<64x128xf32>
    tpu.vector_store %arg10[%c0_143, %c0_144], %281 {strides = array<i32>} : memref<64x128xf32, #tpu.memory_space<vmem>>, vector<64x128xf32>,
    %cst_145 = arith.constant 0.000000e+00 : f32
    %283 = vector.broadcast %cst_145 : f32 to vector<8x32xf32>
    %c0_146 = arith.constant 0 : index
    %c0_147 = arith.constant 0 : index
    %284 = vector.load %arg12[%c0_146, %c0_147] : memref<8x32xf32, #tpu.memory_space<vmem>>, vector<8x32xf32>
    tpu.vector_store %arg12[%c0_146, %c0_147], %283 {strides = array<i32>} : memref<8x32xf32, #tpu.memory_space<vmem>>, vector<8x32xf32>,
    %cst_148 = arith.constant 0.000000e+00 : f32
    %285 = vector.broadcast %cst_148 : f32 to vector<8x32xf32>
    %c0_149 = arith.constant 0 : index
    %c0_150 = arith.constant 0 : index
    %286 = vector.load %arg13[%c0_149, %c0_150] : memref<8x32xf32, #tpu.memory_space<vmem>>, vector<8x32xf32>
    tpu.vector_store %arg13[%c0_149, %c0_150], %285 {strides = array<i32>} : memref<8x32xf32, #tpu.memory_space<vmem>>, vector<8x32xf32>,
    %c0_151 = arith.constant 0 : index
    %c0_152 = arith.constant 0 : index
    %287 = vector.load %arg5[%c0_151, %c0_152] : memref<32x128xf32, #tpu.memory_space<vmem>>, vector<32x128xf32>
    %c0_153 = arith.constant 0 : index
    %c0_154 = arith.constant 0 : index
    %288 = vector.load %arg10[%c0_153, %c0_154] : memref<64x128xf32, #tpu.memory_space<vmem>>, vector<8x128xf32>
    %c0_155 = arith.constant 0 : index
    %c0_156 = arith.constant 0 : index
    %289 = vector.load %arg12[%c0_155, %c0_156] : memref<8x32xf32, #tpu.memory_space<vmem>>, vector<8x32xf32>
    %cst_157 = arith.constant dense<0.000000e+00> : vector<8x128xf32>
    %290 = tpu.matmul %289, %287, %cst_157 {dimension_numbers = #tpu.dot_dimension_numbers<[1], [0], [0], [1], [0, 0, 1, 1], [], []>} : vector<8x32xf32>, vector<32x128xf32>, vector<8x128xf32> -> vector<8x128xf32>
    %291 = arith.addf %288, %290 : vector<8x128xf32>
    %c0_158 = arith.constant 0 : index
    %c0_159 = arith.constant 0 : index
    %292 = vector.load %arg13[%c0_158, %c0_159] : memref<8x32xf32, #tpu.memory_space<vmem>>, vector<8x32xf32>
    %293 = vector.extract_strided_slice %291 {offsets = [0, 0], sizes = [8, 32], strides = [1, 1]} : vector<8x128xf32> to vector<8x32xf32>
    %294 = arith.negf %293 : vector<8x32xf32>
    %295 = math.exp %294 : vector<8x32xf32>
    %cst_160 = arith.constant 1.000000e+00 : f32
    %296 = vector.broadcast %cst_160 : f32 to vector<8x32xf32>
    %297 = arith.addf %296, %295 : vector<8x32xf32>
    %298 = arith.divf %296, %297 : vector<8x32xf32>
    %299 = vector.extract_strided_slice %291 {offsets = [0, 32], sizes = [8, 32], strides = [1, 1]} : vector<8x128xf32> to vector<8x32xf32>
    %300 = arith.negf %299 : vector<8x32xf32>
    %301 = math.exp %300 : vector<8x32xf32>
    %cst_161 = arith.constant 1.000000e+00 : f32
    %302 = vector.broadcast %cst_161 : f32 to vector<8x32xf32>
    %303 = arith.addf %302, %301 : vector<8x32xf32>
    %304 = arith.divf %302, %303 : vector<8x32xf32>
    %305 = vector.extract_strided_slice %291 {offsets = [0, 64], sizes = [8, 32], strides = [1, 1]} : vector<8x128xf32> to vector<8x32xf32>
    %306 = math.tanh %305 : vector<8x32xf32>
    %307 = vector.extract_strided_slice %291 {offsets = [0, 96], sizes = [8, 32], strides = [1, 1]} : vector<8x128xf32> to vector<8x32xf32>
    %308 = arith.negf %307 : vector<8x32xf32>
    %309 = math.exp %308 : vector<8x32xf32>
    %cst_162 = arith.constant 1.000000e+00 : f32
    %310 = vector.broadcast %cst_162 : f32 to vector<8x32xf32>
    %311 = arith.addf %310, %309 : vector<8x32xf32>
    %312 = arith.divf %310, %311 : vector<8x32xf32>
    %313 = arith.mulf %304, %292 : vector<8x32xf32>
    %314 = arith.mulf %298, %306 : vector<8x32xf32>
    %315 = arith.addf %313, %314 : vector<8x32xf32>
    %316 = math.tanh %315 : vector<8x32xf32>
    %317 = arith.mulf %312, %316 : vector<8x32xf32>
    %c0_163 = arith.constant 0 : index
    %c0_164 = arith.constant 0 : index
    %318 = vector.load %arg12[%c0_163, %c0_164] : memref<8x32xf32, #tpu.memory_space<vmem>>, vector<8x32xf32>
    tpu.vector_store %arg12[%c0_163, %c0_164], %317 {strides = array<i32>} : memref<8x32xf32, #tpu.memory_space<vmem>>, vector<8x32xf32>,
    %c0_165 = arith.constant 0 : index
    %c0_166 = arith.constant 0 : index
    %319 = vector.load %arg13[%c0_165, %c0_166] : memref<8x32xf32, #tpu.memory_space<vmem>>, vector<8x32xf32>
    tpu.vector_store %arg13[%c0_165, %c0_166], %315 {strides = array<i32>} : memref<8x32xf32, #tpu.memory_space<vmem>>, vector<8x32xf32>,
    %c8_167 = arith.constant 8 : index
    %c0_168 = arith.constant 0 : index
    %320 = vector.load %arg10[%c8_167, %c0_168] : memref<64x128xf32, #tpu.memory_space<vmem>>, vector<8x128xf32>
    %c0_169 = arith.constant 0 : index
    %c0_170 = arith.constant 0 : index
    %321 = vector.load %arg12[%c0_169, %c0_170] : memref<8x32xf32, #tpu.memory_space<vmem>>, vector<8x32xf32>
    %cst_171 = arith.constant dense<0.000000e+00> : vector<8x128xf32>
    %322 = tpu.matmul %321, %287, %cst_171 {dimension_numbers = #tpu.dot_dimension_numbers<[1], [0], [0], [1], [0, 0, 1, 1], [], []>} : vector<8x32xf32>, vector<32x128xf32>, vector<8x128xf32> -> vector<8x128xf32>
    %323 = arith.addf %320, %322 : vector<8x128xf32>
    %c0_172 = arith.constant 0 : index
    %c0_173 = arith.constant 0 : index
    %324 = vector.load %arg13[%c0_172, %c0_173] : memref<8x32xf32, #tpu.memory_space<vmem>>, vector<8x32xf32>
    %325 = vector.extract_strided_slice %323 {offsets = [0, 0], sizes = [8, 32], strides = [1, 1]} : vector<8x128xf32> to vector<8x32xf32>
    %326 = arith.negf %325 : vector<8x32xf32>
    %327 = math.exp %326 : vector<8x32xf32>
    %cst_174 = arith.constant 1.000000e+00 : f32
    %328 = vector.broadcast %cst_174 : f32 to vector<8x32xf32>
    %329 = arith.addf %328, %327 : vector<8x32xf32>
    %330 = arith.divf %328, %329 : vector<8x32xf32>
    %331 = vector.extract_strided_slice %323 {offsets = [0, 32], sizes = [8, 32], strides = [1, 1]} : vector<8x128xf32> to vector<8x32xf32>
    %332 = arith.negf %331 : vector<8x32xf32>
    %333 = math.exp %332 : vector<8x32xf32>
    %cst_175 = arith.constant 1.000000e+00 : f32
    %334 = vector.broadcast %cst_175 : f32 to vector<8x32xf32>
    %335 = arith.addf %334, %333 : vector<8x32xf32>
    %336 = arith.divf %334, %335 : vector<8x32xf32>
    %337 = vector.extract_strided_slice %323 {offsets = [0, 64], sizes = [8, 32], strides = [1, 1]} : vector<8x128xf32> to vector<8x32xf32>
    %338 = math.tanh %337 : vector<8x32xf32>
    %339 = vector.extract_strided_slice %323 {offsets = [0, 96], sizes = [8, 32], strides = [1, 1]} : vector<8x128xf32> to vector<8x32xf32>
    %340 = arith.negf %339 : vector<8x32xf32>
    %341 = math.exp %340 : vector<8x32xf32>
    %cst_176 = arith.constant 1.000000e+00 : f32
    %342 = vector.broadcast %cst_176 : f32 to vector<8x32xf32>
    %343 = arith.addf %342, %341 : vector<8x32xf32>
    %344 = arith.divf %342, %343 : vector<8x32xf32>
    %345 = arith.mulf %336, %324 : vector<8x32xf32>
    %346 = arith.mulf %330, %338 : vector<8x32xf32>
    %347 = arith.addf %345, %346 : vector<8x32xf32>
    %348 = math.tanh %347 : vector<8x32xf32>
    %349 = arith.mulf %344, %348 : vector<8x32xf32>
    %c0_177 = arith.constant 0 : index
    %c0_178 = arith.constant 0 : index
    %350 = vector.load %arg12[%c0_177, %c0_178] : memref<8x32xf32, #tpu.memory_space<vmem>>, vector<8x32xf32>
    tpu.vector_store %arg12[%c0_177, %c0_178], %349 {strides = array<i32>} : memref<8x32xf32, #tpu.memory_space<vmem>>, vector<8x32xf32>,
    %c0_179 = arith.constant 0 : index
    %c0_180 = arith.constant 0 : index
    %351 = vector.load %arg13[%c0_179, %c0_180] : memref<8x32xf32, #tpu.memory_space<vmem>>, vector<8x32xf32>
    tpu.vector_store %arg13[%c0_179, %c0_180], %347 {strides = array<i32>} : memref<8x32xf32, #tpu.memory_space<vmem>>, vector<8x32xf32>,
    %c16_181 = arith.constant 16 : index
    %c0_182 = arith.constant 0 : index
    %352 = vector.load %arg10[%c16_181, %c0_182] : memref<64x128xf32, #tpu.memory_space<vmem>>, vector<8x128xf32>
    %c0_183 = arith.constant 0 : index
    %c0_184 = arith.constant 0 : index
    %353 = vector.load %arg12[%c0_183, %c0_184] : memref<8x32xf32, #tpu.memory_space<vmem>>, vector<8x32xf32>
    %cst_185 = arith.constant dense<0.000000e+00> : vector<8x128xf32>
    %354 = tpu.matmul %353, %287, %cst_185 {dimension_numbers = #tpu.dot_dimension_numbers<[1], [0], [0], [1], [0, 0, 1, 1], [], []>} : vector<8x32xf32>, vector<32x128xf32>, vector<8x128xf32> -> vector<8x128xf32>
    %355 = arith.addf %352, %354 : vector<8x128xf32>
    %c0_186 = arith.constant 0 : index
    %c0_187 = arith.constant 0 : index
    %356 = vector.load %arg13[%c0_186, %c0_187] : memref<8x32xf32, #tpu.memory_space<vmem>>, vector<8x32xf32>
    %357 = vector.extract_strided_slice %355 {offsets = [0, 0], sizes = [8, 32], strides = [1, 1]} : vector<8x128xf32> to vector<8x32xf32>
    %358 = arith.negf %357 : vector<8x32xf32>
    %359 = math.exp %358 : vector<8x32xf32>
    %cst_188 = arith.constant 1.000000e+00 : f32
    %360 = vector.broadcast %cst_188 : f32 to vector<8x32xf32>
    %361 = arith.addf %360, %359 : vector<8x32xf32>
    %362 = arith.divf %360, %361 : vector<8x32xf32>
    %363 = vector.extract_strided_slice %355 {offsets = [0, 32], sizes = [8, 32], strides = [1, 1]} : vector<8x128xf32> to vector<8x32xf32>
    %364 = arith.negf %363 : vector<8x32xf32>
    %365 = math.exp %364 : vector<8x32xf32>
    %cst_189 = arith.constant 1.000000e+00 : f32
    %366 = vector.broadcast %cst_189 : f32 to vector<8x32xf32>
    %367 = arith.addf %366, %365 : vector<8x32xf32>
    %368 = arith.divf %366, %367 : vector<8x32xf32>
    %369 = vector.extract_strided_slice %355 {offsets = [0, 64], sizes = [8, 32], strides = [1, 1]} : vector<8x128xf32> to vector<8x32xf32>
    %370 = math.tanh %369 : vector<8x32xf32>
    %371 = vector.extract_strided_slice %355 {offsets = [0, 96], sizes = [8, 32], strides = [1, 1]} : vector<8x128xf32> to vector<8x32xf32>
    %372 = arith.negf %371 : vector<8x32xf32>
    %373 = math.exp %372 : vector<8x32xf32>
    %cst_190 = arith.constant 1.000000e+00 : f32
    %374 = vector.broadcast %cst_190 : f32 to vector<8x32xf32>
    %375 = arith.addf %374, %373 : vector<8x32xf32>
    %376 = arith.divf %374, %375 : vector<8x32xf32>
    %377 = arith.mulf %368, %356 : vector<8x32xf32>
    %378 = arith.mulf %362, %370 : vector<8x32xf32>
    %379 = arith.addf %377, %378 : vector<8x32xf32>
    %380 = math.tanh %379 : vector<8x32xf32>
    %381 = arith.mulf %376, %380 : vector<8x32xf32>
    %c0_191 = arith.constant 0 : index
    %c0_192 = arith.constant 0 : index
    %382 = vector.load %arg12[%c0_191, %c0_192] : memref<8x32xf32, #tpu.memory_space<vmem>>, vector<8x32xf32>
    tpu.vector_store %arg12[%c0_191, %c0_192], %381 {strides = array<i32>} : memref<8x32xf32, #tpu.memory_space<vmem>>, vector<8x32xf32>,
    %c0_193 = arith.constant 0 : index
    %c0_194 = arith.constant 0 : index
    %383 = vector.load %arg13[%c0_193, %c0_194] : memref<8x32xf32, #tpu.memory_space<vmem>>, vector<8x32xf32>
    tpu.vector_store %arg13[%c0_193, %c0_194], %379 {strides = array<i32>} : memref<8x32xf32, #tpu.memory_space<vmem>>, vector<8x32xf32>,
    %c24_195 = arith.constant 24 : index
    %c0_196 = arith.constant 0 : index
    %384 = vector.load %arg10[%c24_195, %c0_196] : memref<64x128xf32, #tpu.memory_space<vmem>>, vector<8x128xf32>
    %c0_197 = arith.constant 0 : index
    %c0_198 = arith.constant 0 : index
    %385 = vector.load %arg12[%c0_197, %c0_198] : memref<8x32xf32, #tpu.memory_space<vmem>>, vector<8x32xf32>
    %cst_199 = arith.constant dense<0.000000e+00> : vector<8x128xf32>
    %386 = tpu.matmul %385, %287, %cst_199 {dimension_numbers = #tpu.dot_dimension_numbers<[1], [0], [0], [1], [0, 0, 1, 1], [], []>} : vector<8x32xf32>, vector<32x128xf32>, vector<8x128xf32> -> vector<8x128xf32>
    %387 = arith.addf %384, %386 : vector<8x128xf32>
    %c0_200 = arith.constant 0 : index
    %c0_201 = arith.constant 0 : index
    %388 = vector.load %arg13[%c0_200, %c0_201] : memref<8x32xf32, #tpu.memory_space<vmem>>, vector<8x32xf32>
    %389 = vector.extract_strided_slice %387 {offsets = [0, 0], sizes = [8, 32], strides = [1, 1]} : vector<8x128xf32> to vector<8x32xf32>
    %390 = arith.negf %389 : vector<8x32xf32>
    %391 = math.exp %390 : vector<8x32xf32>
    %cst_202 = arith.constant 1.000000e+00 : f32
    %392 = vector.broadcast %cst_202 : f32 to vector<8x32xf32>
    %393 = arith.addf %392, %391 : vector<8x32xf32>
    %394 = arith.divf %392, %393 : vector<8x32xf32>
    %395 = vector.extract_strided_slice %387 {offsets = [0, 32], sizes = [8, 32], strides = [1, 1]} : vector<8x128xf32> to vector<8x32xf32>
    %396 = arith.negf %395 : vector<8x32xf32>
    %397 = math.exp %396 : vector<8x32xf32>
    %cst_203 = arith.constant 1.000000e+00 : f32
    %398 = vector.broadcast %cst_203 : f32 to vector<8x32xf32>
    %399 = arith.addf %398, %397 : vector<8x32xf32>
    %400 = arith.divf %398, %399 : vector<8x32xf32>
    %401 = vector.extract_strided_slice %387 {offsets = [0, 64], sizes = [8, 32], strides = [1, 1]} : vector<8x128xf32> to vector<8x32xf32>
    %402 = math.tanh %401 : vector<8x32xf32>
    %403 = vector.extract_strided_slice %387 {offsets = [0, 96], sizes = [8, 32], strides = [1, 1]} : vector<8x128xf32> to vector<8x32xf32>
    %404 = arith.negf %403 : vector<8x32xf32>
    %405 = math.exp %404 : vector<8x32xf32>
    %cst_204 = arith.constant 1.000000e+00 : f32
    %406 = vector.broadcast %cst_204 : f32 to vector<8x32xf32>
    %407 = arith.addf %406, %405 : vector<8x32xf32>
    %408 = arith.divf %406, %407 : vector<8x32xf32>
    %409 = arith.mulf %400, %388 : vector<8x32xf32>
    %410 = arith.mulf %394, %402 : vector<8x32xf32>
    %411 = arith.addf %409, %410 : vector<8x32xf32>
    %412 = math.tanh %411 : vector<8x32xf32>
    %413 = arith.mulf %408, %412 : vector<8x32xf32>
    %c0_205 = arith.constant 0 : index
    %c0_206 = arith.constant 0 : index
    %414 = vector.load %arg12[%c0_205, %c0_206] : memref<8x32xf32, #tpu.memory_space<vmem>>, vector<8x32xf32>
    tpu.vector_store %arg12[%c0_205, %c0_206], %413 {strides = array<i32>} : memref<8x32xf32, #tpu.memory_space<vmem>>, vector<8x32xf32>,
    %c0_207 = arith.constant 0 : index
    %c0_208 = arith.constant 0 : index
    %415 = vector.load %arg13[%c0_207, %c0_208] : memref<8x32xf32, #tpu.memory_space<vmem>>, vector<8x32xf32>
    tpu.vector_store %arg13[%c0_207, %c0_208], %411 {strides = array<i32>} : memref<8x32xf32, #tpu.memory_space<vmem>>, vector<8x32xf32>,
    %c32_209 = arith.constant 32 : index
    %c0_210 = arith.constant 0 : index
    %416 = vector.load %arg10[%c32_209, %c0_210] : memref<64x128xf32, #tpu.memory_space<vmem>>, vector<8x128xf32>
    %c0_211 = arith.constant 0 : index
    %c0_212 = arith.constant 0 : index
    %417 = vector.load %arg12[%c0_211, %c0_212] : memref<8x32xf32, #tpu.memory_space<vmem>>, vector<8x32xf32>
    %cst_213 = arith.constant dense<0.000000e+00> : vector<8x128xf32>
    %418 = tpu.matmul %417, %287, %cst_213 {dimension_numbers = #tpu.dot_dimension_numbers<[1], [0], [0], [1], [0, 0, 1, 1], [], []>} : vector<8x32xf32>, vector<32x128xf32>, vector<8x128xf32> -> vector<8x128xf32>
    %419 = arith.addf %416, %418 : vector<8x128xf32>
    %c0_214 = arith.constant 0 : index
    %c0_215 = arith.constant 0 : index
    %420 = vector.load %arg13[%c0_214, %c0_215] : memref<8x32xf32, #tpu.memory_space<vmem>>, vector<8x32xf32>
    %421 = vector.extract_strided_slice %419 {offsets = [0, 0], sizes = [8, 32], strides = [1, 1]} : vector<8x128xf32> to vector<8x32xf32>
    %422 = arith.negf %421 : vector<8x32xf32>
    %423 = math.exp %422 : vector<8x32xf32>
    %cst_216 = arith.constant 1.000000e+00 : f32
    %424 = vector.broadcast %cst_216 : f32 to vector<8x32xf32>
    %425 = arith.addf %424, %423 : vector<8x32xf32>
    %426 = arith.divf %424, %425 : vector<8x32xf32>
    %427 = vector.extract_strided_slice %419 {offsets = [0, 32], sizes = [8, 32], strides = [1, 1]} : vector<8x128xf32> to vector<8x32xf32>
    %428 = arith.negf %427 : vector<8x32xf32>
    %429 = math.exp %428 : vector<8x32xf32>
    %cst_217 = arith.constant 1.000000e+00 : f32
    %430 = vector.broadcast %cst_217 : f32 to vector<8x32xf32>
    %431 = arith.addf %430, %429 : vector<8x32xf32>
    %432 = arith.divf %430, %431 : vector<8x32xf32>
    %433 = vector.extract_strided_slice %419 {offsets = [0, 64], sizes = [8, 32], strides = [1, 1]} : vector<8x128xf32> to vector<8x32xf32>
    %434 = math.tanh %433 : vector<8x32xf32>
    %435 = vector.extract_strided_slice %419 {offsets = [0, 96], sizes = [8, 32], strides = [1, 1]} : vector<8x128xf32> to vector<8x32xf32>
    %436 = arith.negf %435 : vector<8x32xf32>
    %437 = math.exp %436 : vector<8x32xf32>
    %cst_218 = arith.constant 1.000000e+00 : f32
    %438 = vector.broadcast %cst_218 : f32 to vector<8x32xf32>
    %439 = arith.addf %438, %437 : vector<8x32xf32>
    %440 = arith.divf %438, %439 : vector<8x32xf32>
    %441 = arith.mulf %432, %420 : vector<8x32xf32>
    %442 = arith.mulf %426, %434 : vector<8x32xf32>
    %443 = arith.addf %441, %442 : vector<8x32xf32>
    %444 = math.tanh %443 : vector<8x32xf32>
    %445 = arith.mulf %440, %444 : vector<8x32xf32>
    %c0_219 = arith.constant 0 : index
    %c0_220 = arith.constant 0 : index
    %446 = vector.load %arg12[%c0_219, %c0_220] : memref<8x32xf32, #tpu.memory_space<vmem>>, vector<8x32xf32>
    tpu.vector_store %arg12[%c0_219, %c0_220], %445 {strides = array<i32>} : memref<8x32xf32, #tpu.memory_space<vmem>>, vector<8x32xf32>,
    %c0_221 = arith.constant 0 : index
    %c0_222 = arith.constant 0 : index
    %447 = vector.load %arg13[%c0_221, %c0_222] : memref<8x32xf32, #tpu.memory_space<vmem>>, vector<8x32xf32>
    tpu.vector_store %arg13[%c0_221, %c0_222], %443 {strides = array<i32>} : memref<8x32xf32, #tpu.memory_space<vmem>>, vector<8x32xf32>,
    %c40_223 = arith.constant 40 : index
    %c0_224 = arith.constant 0 : index
    %448 = vector.load %arg10[%c40_223, %c0_224] : memref<64x128xf32, #tpu.memory_space<vmem>>, vector<8x128xf32>
    %c0_225 = arith.constant 0 : index
    %c0_226 = arith.constant 0 : index
    %449 = vector.load %arg12[%c0_225, %c0_226] : memref<8x32xf32, #tpu.memory_space<vmem>>, vector<8x32xf32>
    %cst_227 = arith.constant dense<0.000000e+00> : vector<8x128xf32>
    %450 = tpu.matmul %449, %287, %cst_227 {dimension_numbers = #tpu.dot_dimension_numbers<[1], [0], [0], [1], [0, 0, 1, 1], [], []>} : vector<8x32xf32>, vector<32x128xf32>, vector<8x128xf32> -> vector<8x128xf32>
    %451 = arith.addf %448, %450 : vector<8x128xf32>
    %c0_228 = arith.constant 0 : index
    %c0_229 = arith.constant 0 : index
    %452 = vector.load %arg13[%c0_228, %c0_229] : memref<8x32xf32, #tpu.memory_space<vmem>>, vector<8x32xf32>
    %453 = vector.extract_strided_slice %451 {offsets = [0, 0], sizes = [8, 32], strides = [1, 1]} : vector<8x128xf32> to vector<8x32xf32>
    %454 = arith.negf %453 : vector<8x32xf32>
    %455 = math.exp %454 : vector<8x32xf32>
    %cst_230 = arith.constant 1.000000e+00 : f32
    %456 = vector.broadcast %cst_230 : f32 to vector<8x32xf32>
    %457 = arith.addf %456, %455 : vector<8x32xf32>
    %458 = arith.divf %456, %457 : vector<8x32xf32>
    %459 = vector.extract_strided_slice %451 {offsets = [0, 32], sizes = [8, 32], strides = [1, 1]} : vector<8x128xf32> to vector<8x32xf32>
    %460 = arith.negf %459 : vector<8x32xf32>
    %461 = math.exp %460 : vector<8x32xf32>
    %cst_231 = arith.constant 1.000000e+00 : f32
    %462 = vector.broadcast %cst_231 : f32 to vector<8x32xf32>
    %463 = arith.addf %462, %461 : vector<8x32xf32>
    %464 = arith.divf %462, %463 : vector<8x32xf32>
    %465 = vector.extract_strided_slice %451 {offsets = [0, 64], sizes = [8, 32], strides = [1, 1]} : vector<8x128xf32> to vector<8x32xf32>
    %466 = math.tanh %465 : vector<8x32xf32>
    %467 = vector.extract_strided_slice %451 {offsets = [0, 96], sizes = [8, 32], strides = [1, 1]} : vector<8x128xf32> to vector<8x32xf32>
    %468 = arith.negf %467 : vector<8x32xf32>
    %469 = math.exp %468 : vector<8x32xf32>
    %cst_232 = arith.constant 1.000000e+00 : f32
    %470 = vector.broadcast %cst_232 : f32 to vector<8x32xf32>
    %471 = arith.addf %470, %469 : vector<8x32xf32>
    %472 = arith.divf %470, %471 : vector<8x32xf32>
    %473 = arith.mulf %464, %452 : vector<8x32xf32>
    %474 = arith.mulf %458, %466 : vector<8x32xf32>
    %475 = arith.addf %473, %474 : vector<8x32xf32>
    %476 = math.tanh %475 : vector<8x32xf32>
    %477 = arith.mulf %472, %476 : vector<8x32xf32>
    %c0_233 = arith.constant 0 : index
    %c0_234 = arith.constant 0 : index
    %478 = vector.load %arg12[%c0_233, %c0_234] : memref<8x32xf32, #tpu.memory_space<vmem>>, vector<8x32xf32>
    tpu.vector_store %arg12[%c0_233, %c0_234], %477 {strides = array<i32>} : memref<8x32xf32, #tpu.memory_space<vmem>>, vector<8x32xf32>,
    %c0_235 = arith.constant 0 : index
    %c0_236 = arith.constant 0 : index
    %479 = vector.load %arg13[%c0_235, %c0_236] : memref<8x32xf32, #tpu.memory_space<vmem>>, vector<8x32xf32>
    tpu.vector_store %arg13[%c0_235, %c0_236], %475 {strides = array<i32>} : memref<8x32xf32, #tpu.memory_space<vmem>>, vector<8x32xf32>,
    %c48_237 = arith.constant 48 : index
    %c0_238 = arith.constant 0 : index
    %480 = vector.load %arg10[%c48_237, %c0_238] : memref<64x128xf32, #tpu.memory_space<vmem>>, vector<8x128xf32>
    %c0_239 = arith.constant 0 : index
    %c0_240 = arith.constant 0 : index
    %481 = vector.load %arg12[%c0_239, %c0_240] : memref<8x32xf32, #tpu.memory_space<vmem>>, vector<8x32xf32>
    %cst_241 = arith.constant dense<0.000000e+00> : vector<8x128xf32>
    %482 = tpu.matmul %481, %287, %cst_241 {dimension_numbers = #tpu.dot_dimension_numbers<[1], [0], [0], [1], [0, 0, 1, 1], [], []>} : vector<8x32xf32>, vector<32x128xf32>, vector<8x128xf32> -> vector<8x128xf32>
    %483 = arith.addf %480, %482 : vector<8x128xf32>
    %c0_242 = arith.constant 0 : index
    %c0_243 = arith.constant 0 : index
    %484 = vector.load %arg13[%c0_242, %c0_243] : memref<8x32xf32, #tpu.memory_space<vmem>>, vector<8x32xf32>
    %485 = vector.extract_strided_slice %483 {offsets = [0, 0], sizes = [8, 32], strides = [1, 1]} : vector<8x128xf32> to vector<8x32xf32>
    %486 = arith.negf %485 : vector<8x32xf32>
    %487 = math.exp %486 : vector<8x32xf32>
    %cst_244 = arith.constant 1.000000e+00 : f32
    %488 = vector.broadcast %cst_244 : f32 to vector<8x32xf32>
    %489 = arith.addf %488, %487 : vector<8x32xf32>
    %490 = arith.divf %488, %489 : vector<8x32xf32>
    %491 = vector.extract_strided_slice %483 {offsets = [0, 32], sizes = [8, 32], strides = [1, 1]} : vector<8x128xf32> to vector<8x32xf32>
    %492 = arith.negf %491 : vector<8x32xf32>
    %493 = math.exp %492 : vector<8x32xf32>
    %cst_245 = arith.constant 1.000000e+00 : f32
    %494 = vector.broadcast %cst_245 : f32 to vector<8x32xf32>
    %495 = arith.addf %494, %493 : vector<8x32xf32>
    %496 = arith.divf %494, %495 : vector<8x32xf32>
    %497 = vector.extract_strided_slice %483 {offsets = [0, 64], sizes = [8, 32], strides = [1, 1]} : vector<8x128xf32> to vector<8x32xf32>
    %498 = math.tanh %497 : vector<8x32xf32>
    %499 = vector.extract_strided_slice %483 {offsets = [0, 96], sizes = [8, 32], strides = [1, 1]} : vector<8x128xf32> to vector<8x32xf32>
    %500 = arith.negf %499 : vector<8x32xf32>
    %501 = math.exp %500 : vector<8x32xf32>
    %cst_246 = arith.constant 1.000000e+00 : f32
    %502 = vector.broadcast %cst_246 : f32 to vector<8x32xf32>
    %503 = arith.addf %502, %501 : vector<8x32xf32>
    %504 = arith.divf %502, %503 : vector<8x32xf32>
    %505 = arith.mulf %496, %484 : vector<8x32xf32>
    %506 = arith.mulf %490, %498 : vector<8x32xf32>
    %507 = arith.addf %505, %506 : vector<8x32xf32>
    %508 = math.tanh %507 : vector<8x32xf32>
    %509 = arith.mulf %504, %508 : vector<8x32xf32>
    %c0_247 = arith.constant 0 : index
    %c0_248 = arith.constant 0 : index
    %510 = vector.load %arg12[%c0_247, %c0_248] : memref<8x32xf32, #tpu.memory_space<vmem>>, vector<8x32xf32>
    tpu.vector_store %arg12[%c0_247, %c0_248], %509 {strides = array<i32>} : memref<8x32xf32, #tpu.memory_space<vmem>>, vector<8x32xf32>,
    %c0_249 = arith.constant 0 : index
    %c0_250 = arith.constant 0 : index
    %511 = vector.load %arg13[%c0_249, %c0_250] : memref<8x32xf32, #tpu.memory_space<vmem>>, vector<8x32xf32>
    tpu.vector_store %arg13[%c0_249, %c0_250], %507 {strides = array<i32>} : memref<8x32xf32, #tpu.memory_space<vmem>>, vector<8x32xf32>,
    %c56_251 = arith.constant 56 : index
    %c0_252 = arith.constant 0 : index
    %512 = vector.load %arg10[%c56_251, %c0_252] : memref<64x128xf32, #tpu.memory_space<vmem>>, vector<8x128xf32>
    %c0_253 = arith.constant 0 : index
    %c0_254 = arith.constant 0 : index
    %513 = vector.load %arg12[%c0_253, %c0_254] : memref<8x32xf32, #tpu.memory_space<vmem>>, vector<8x32xf32>
    %cst_255 = arith.constant dense<0.000000e+00> : vector<8x128xf32>
    %514 = tpu.matmul %513, %287, %cst_255 {dimension_numbers = #tpu.dot_dimension_numbers<[1], [0], [0], [1], [0, 0, 1, 1], [], []>} : vector<8x32xf32>, vector<32x128xf32>, vector<8x128xf32> -> vector<8x128xf32>
    %515 = arith.addf %512, %514 : vector<8x128xf32>
    %c0_256 = arith.constant 0 : index
    %c0_257 = arith.constant 0 : index
    %516 = vector.load %arg13[%c0_256, %c0_257] : memref<8x32xf32, #tpu.memory_space<vmem>>, vector<8x32xf32>
    %517 = vector.extract_strided_slice %515 {offsets = [0, 0], sizes = [8, 32], strides = [1, 1]} : vector<8x128xf32> to vector<8x32xf32>
    %518 = arith.negf %517 : vector<8x32xf32>
    %519 = math.exp %518 : vector<8x32xf32>
    %cst_258 = arith.constant 1.000000e+00 : f32
    %520 = vector.broadcast %cst_258 : f32 to vector<8x32xf32>
    %521 = arith.addf %520, %519 : vector<8x32xf32>
    %522 = arith.divf %520, %521 : vector<8x32xf32>
    %523 = vector.extract_strided_slice %515 {offsets = [0, 32], sizes = [8, 32], strides = [1, 1]} : vector<8x128xf32> to vector<8x32xf32>
    %524 = arith.negf %523 : vector<8x32xf32>
    %525 = math.exp %524 : vector<8x32xf32>
    %cst_259 = arith.constant 1.000000e+00 : f32
    %526 = vector.broadcast %cst_259 : f32 to vector<8x32xf32>
    %527 = arith.addf %526, %525 : vector<8x32xf32>
    %528 = arith.divf %526, %527 : vector<8x32xf32>
    %529 = vector.extract_strided_slice %515 {offsets = [0, 64], sizes = [8, 32], strides = [1, 1]} : vector<8x128xf32> to vector<8x32xf32>
    %530 = math.tanh %529 : vector<8x32xf32>
    %531 = vector.extract_strided_slice %515 {offsets = [0, 96], sizes = [8, 32], strides = [1, 1]} : vector<8x128xf32> to vector<8x32xf32>
    %532 = arith.negf %531 : vector<8x32xf32>
    %533 = math.exp %532 : vector<8x32xf32>
    %cst_260 = arith.constant 1.000000e+00 : f32
    %534 = vector.broadcast %cst_260 : f32 to vector<8x32xf32>
    %535 = arith.addf %534, %533 : vector<8x32xf32>
    %536 = arith.divf %534, %535 : vector<8x32xf32>
    %537 = arith.mulf %528, %516 : vector<8x32xf32>
    %538 = arith.mulf %522, %530 : vector<8x32xf32>
    %539 = arith.addf %537, %538 : vector<8x32xf32>
    %540 = math.tanh %539 : vector<8x32xf32>
    %541 = arith.mulf %536, %540 : vector<8x32xf32>
    %c0_261 = arith.constant 0 : index
    %c0_262 = arith.constant 0 : index
    %542 = vector.load %arg12[%c0_261, %c0_262] : memref<8x32xf32, #tpu.memory_space<vmem>>, vector<8x32xf32>
    tpu.vector_store %arg12[%c0_261, %c0_262], %541 {strides = array<i32>} : memref<8x32xf32, #tpu.memory_space<vmem>>, vector<8x32xf32>,
    %c0_263 = arith.constant 0 : index
    %c0_264 = arith.constant 0 : index
    %543 = vector.load %arg13[%c0_263, %c0_264] : memref<8x32xf32, #tpu.memory_space<vmem>>, vector<8x32xf32>
    tpu.vector_store %arg13[%c0_263, %c0_264], %539 {strides = array<i32>} : memref<8x32xf32, #tpu.memory_space<vmem>>, vector<8x32xf32>,
    %c0_265 = arith.constant 0 : index
    %c0_266 = arith.constant 0 : index
    %544 = vector.load %arg12[%c0_265, %c0_266] : memref<8x32xf32, #tpu.memory_space<vmem>>, vector<8x32xf32>
    %c0_267 = arith.constant 0 : index
    %c0_268 = arith.constant 0 : index
    %545 = vector.load %arg7[%c0_267, %c0_268] : memref<32x4xf32, #tpu.memory_space<vmem>>, vector<32x4xf32>
    %cst_269 = arith.constant dense<0.000000e+00> : vector<8x4xf32>
    %546 = tpu.matmul %544, %545, %cst_269 {dimension_numbers = #tpu.dot_dimension_numbers<[1], [0], [0], [1], [0, 0, 1, 1], [], []>} : vector<8x32xf32>, vector<32x4xf32>, vector<8x4xf32> -> vector<8x4xf32>
    %c0_270 = arith.constant 0 : index
    %c0_271 = arith.constant 0 : index
    %547 = vector.load %arg8[%c0_270, %c0_271] : memref<1x4xf32, #tpu.memory_space<vmem>>, vector<1x4xf32>
    %548 = vector.broadcast %547 : vector<1x4xf32> to vector<8x4xf32>
    %549 = arith.addf %546, %548 : vector<8x4xf32>
    %c0_272 = arith.constant 0 : index
    %c0_273 = arith.constant 0 : index
    %550 = vector.load %arg9[%c0_272, %c0_273] : memref<8x4xf32, #tpu.memory_space<vmem>>, vector<8x4xf32>
    tpu.vector_store %arg9[%c0_272, %c0_273], %549 {strides = array<i32>} : memref<8x4xf32, #tpu.memory_space<vmem>>, vector<8x4xf32>,
    return
  }
}

</mosaic_0001>

<llo_original>
// kernel: tpu_custom_call.1
$region0: #{tpu_custom_call.1}
  #allocation0 [shape = 'u32[]', space=smem, size = 0x4, offset = 0x4, fixed_abs, tag = 'smem constant byte address 0x4 - core index']
  #allocation1 [shape = 'u32[144,128]{1,0:T(1,128)}', space=vmem, size = 0x12000, scoped, tag = 'internal scratch']
  #allocation2 [shape = 'f32[64,128]{1,0:T(8,128)}', space=vmem, size = 0x8000, scoped, tag = 'scratch operand']
  #allocation3 [shape = 'f32[64,32]{1,0:T(8,128)}', space=vmem, size = 0x8000, scoped, tag = 'scratch operand']
  #allocation4 [shape = 'f32[8,32]{1,0:T(8,128)}', space=vmem, size = 0x1000, scoped, tag = 'scratch operand']
  #allocation5 [shape = 'f32[8,32]{1,0:T(8,128)}', space=vmem, size = 0x1000, scoped, tag = 'scratch operand']
  %s0 = inlined_call_operand.vmem [shape: f32[64,4], index: 0, kind: input, shape index: {}]
  %s1 = inlined_call_operand.vmem [shape: f32[4,128], index: 1, kind: input, shape index: {}]
  %s2 = inlined_call_operand.vmem [shape: f32[32,128], index: 2, kind: input, shape index: {}]
  %s3 = inlined_call_operand.vmem [shape: f32[1,128], index: 3, kind: input, shape index: {}]
  %s4 = inlined_call_operand.vmem [shape: f32[32,128], index: 4, kind: input, shape index: {}]
  %s5 = inlined_call_operand.vmem [shape: f32[32,128], index: 5, kind: input, shape index: {}]
  %s6 = inlined_call_operand.vmem [shape: f32[1,128], index: 6, kind: input, shape index: {}]
  %s7 = inlined_call_operand.vmem [shape: f32[32,4], index: 7, kind: input, shape index: {}]
  %s8 = inlined_call_operand.vmem [shape: f32[1,4], index: 8, kind: input, shape index: {}]
  %s9 = inlined_call_operand.vmem [shape: f32[8,4], index: 9, kind: output, shape index: {}]
  %s10 = sld [smem:[#allocation0]]
  $region46: #{tpu_custom_call.1} parent=0
    _
  %s12 = ssub.s32 1, %s10
  %s13 = scalar_select 0, %s12, %s10
  // Predicated region
  $region2: #{tpu_custom_call.1} parent=0 // pred_check
    _
  $region3: #{tpu_custom_call.1} parent=0 // pred_check_branch
    %15 = sbr.rel (0) target = $region5
  $region4: #{tpu_custom_call.1} parent=0 // pred_region
    _
  $region5: #{tpu_custom_call.1} parent=0 // pred_fallthru
    _
  // Predicated region
  $region6: #{tpu_custom_call.1} parent=0 // pred_check
    _
  $region7: #{tpu_custom_call.1} parent=0 // pred_check_branch
    %17 = sbr.rel (0) target = $region9
  $region8: #{tpu_custom_call.1} parent=0 // pred_region
    _
  $region9: #{tpu_custom_call.1} parent=0 // pred_fallthru
    _
  // Predicated region
  $region10: #{tpu_custom_call.1} parent=0 // pred_check
    _
  $region11: #{tpu_custom_call.1} parent=0 // pred_check_branch
    %19 = sbr.rel (0) target = $region13
  $region12: #{tpu_custom_call.1} parent=0 // pred_region
    _
  $region13: #{tpu_custom_call.1} parent=0 // pred_fallthru
    _
  // Predicated region
  $region14: #{tpu_custom_call.1} parent=0 // pred_check
    _
  $region15: #{tpu_custom_call.1} parent=0 // pred_check_branch
    %21 = sbr.rel (0) target = $region17
  $region16: #{tpu_custom_call.1} parent=0 // pred_region
    _
  $region17: #{tpu_custom_call.1} parent=0 // pred_fallthru
    _
  // Predicated region
  $region18: #{tpu_custom_call.1} parent=0 // pred_check
    _
  $region19: #{tpu_custom_call.1} parent=0 // pred_check_branch
    %23 = sbr.rel (0) target = $region21
  $region20: #{tpu_custom_call.1} parent=0 // pred_region
    _
  $region21: #{tpu_custom_call.1} parent=0 // pred_fallthru
    _
  // Predicated region
  $region22: #{tpu_custom_call.1} parent=0 // pred_check
    _
  $region23: #{tpu_custom_call.1} parent=0 // pred_check_branch
    %25 = sbr.rel (0) target = $region25
  $region24: #{tpu_custom_call.1} parent=0 // pred_region
    _
  $region25: #{tpu_custom_call.1} parent=0 // pred_fallthru
    _
  // Predicated region
  $region26: #{tpu_custom_call.1} parent=0 // pred_check
    _
  $region27: #{tpu_custom_call.1} parent=0 // pred_check_branch
    %27 = sbr.rel (0) target = $region29
  $region28: #{tpu_custom_call.1} parent=0 // pred_region
    _
  $region29: #{tpu_custom_call.1} parent=0 // pred_fallthru
    _
  // Predicated region
  $region30: #{tpu_custom_call.1} parent=0 // pred_check
    _
  $region31: #{tpu_custom_call.1} parent=0 // pred_check_branch
    %29 = sbr.rel (0) target = $region33
  $region32: #{tpu_custom_call.1} parent=0 // pred_region
    _
  $region33: #{tpu_custom_call.1} parent=0 // pred_fallthru
    _
  // Predicated region
  $region34: #{tpu_custom_call.1} parent=0 // pred_check
    _
  $region35: #{tpu_custom_call.1} parent=0 // pred_check_branch
    %31 = sbr.rel (0) target = $region37
  $region36: #{tpu_custom_call.1} parent=0 // pred_region
    _
  $region37: #{tpu_custom_call.1} parent=0 // pred_fallthru
    _
  %v32 = vld [vmem:[%s0] sm:$0xff]
  %v33 = vld [vmem:[%s0 + $0x8] sm:$0xff]
  %v34 = vld [vmem:[%s0 + $0x10] sm:$0xff]
  %v35 = vld [vmem:[%s0 + $0x18] sm:$0xff]
  %v36 = vld [vmem:[%s0 + $0x20] sm:$0xff]
  %v37 = vld [vmem:[%s0 + $0x28] sm:$0xff]
  %v38 = vld [vmem:[%s0 + $0x30] sm:$0xff]
  %v39 = vld [vmem:[%s0 + $0x38] sm:$0xff]
  %v40 = vld [vmem:[%s1] sm:$0xf]
  %v41 = vld [vmem:[%s3] sm:$0x1]
  %v43 = vlaneseq
  %v44 = vshrl.u32 %v43, 7
  %v45 = vsub.s32 0, %v44
  %v46 = vrot.slane %v41, %v45
  %vm48 = vcmask 31744
  %v50 = vsel %vm48, %v32, 0
  %v53 = vsel %vm48, %v33, 0
  %v56 = vsel %vm48, %v34, 0
  %v59 = vsel %vm48, %v35, 0
  %v62 = vsel %vm48, %v36, 0
  %v65 = vsel %vm48, %v37, 0
  %v68 = vsel %vm48, %v38, 0
  %v71 = vsel %vm48, %v39, 0
  %vm73 = vcmask 1043456
  %v75 = vsel %vm73, %v40, 0
  %77 = vmatprep.subr.mxu0 0.0
  %78 = vmatpush1.msra.mxu0 %v75
  %79 = vmatprep.subr.mxu0 0.0
  %80 = vmatpush1.msra.mxu0 0.0
  %81 = vmatprep.subr.mxu0 0.0
  %82 = vmatpush1.msra.mxu0 0.0
  %83 = vmatprep.subr.mxu0 0.0
  %84 = vmatpush1.msra.mxu0 0.0
  %85 = vmatprep.subr.mxu0 0.0
  %86 = vmatpush1.msra.mxu0 0.0
  %87 = vmatprep.subr.mxu0 0.0
  %88 = vmatpush1.msra.mxu0 0.0
  %89 = vmatprep.subr.mxu0 0.0
  %90 = vmatpush1.msra.mxu0 0.0
  %91 = vmatprep.subr.mxu0 0.0
  %92 = vmatpush1.msra.mxu0 0.0
  %93 = vmatprep.subr.mxu0 0.0
  %94 = vmatpush1.msra.mxu0 0.0
  %95 = vmatprep.subr.mxu0 0.0
  %96 = vmatpush1.msra.mxu0 0.0
  %97 = vmatprep.subr.mxu0 0.0
  %98 = vmatpush1.msra.mxu0 0.0
  %99 = vmatprep.subr.mxu0 0.0
  %100 = vmatpush1.msra.mxu0 0.0
  %101 = vmatprep.subr.mxu0 0.0
  %102 = vmatpush1.msra.mxu0 0.0
  %103 = vmatprep.subr.mxu0 0.0
  %104 = vmatpush1.msra.mxu0 0.0
  %105 = vmatprep.subr.mxu0 0.0
  %106 = vmatpush1.msra.mxu0 0.0
  %107 = vmatprep.subr.mxu0 0.0
  %108 = vmatpush1.msra.mxu0 0.0
  %109 = vmatprep.subr.mxu0 0.0
  %110 = vmatpush1.msra.mxu0 0.0
  %111 = vmatprep.subr.mxu0 0.0
  %112 = vmatpush1.msra.mxu0 0.0
  %113 = vmatprep.subr.mxu0 0.0
  %114 = vmatpush1.msra.mxu0 0.0
  %115 = vmatprep.subr.mxu0 0.0
  %116 = vmatpush1.msra.mxu0 0.0
  %117 = vmatprep.subr.mxu0 0.0
  %118 = vmatpush1.msra.mxu0 0.0
  %119 = vmatprep.subr.mxu0 0.0
  %120 = vmatpush1.msra.mxu0 0.0
  %121 = vmatprep.subr.mxu0 0.0
  %122 = vmatpush1.msra.mxu0 0.0
  %123 = vmatprep.subr.mxu0 0.0
  %124 = vmatpush1.msra.mxu0 0.0
  %125 = vmatprep.subr.mxu0 0.0
  %126 = vmatpush1.msra.mxu0 0.0
  %127 = vmatprep.subr.mxu0 0.0
  %128 = vmatpush1.msra.mxu0 0.0
  %129 = vmatprep.subr.mxu0 0.0
  %130 = vmatpush1.msra.mxu0 0.0
  %131 = vmatprep.subr.mxu0 0.0
  %132 = vmatpush1.msra.mxu0 0.0
  %133 = vmatprep.subr.mxu0 0.0
  %134 = vmatpush1.msra.mxu0 0.0
  %135 = vmatprep.subr.mxu0 0.0
  %136 = vmatpush1.msra.mxu0 0.0
  %137 = vmatprep.subr.mxu0 0.0
  %138 = vmatpush1.msra.mxu0 0.0
  %139 = vmatprep.subr.mxu0 0.0
  %140 = vmatpush1.msra.mxu0 0.0
  %141 = vmatprep.mubr.f32.mxu0 0.0
  %142 = vmatmul.mubr.f32.gmra.mrb[0].mxu0 %v50
  %v143 = vpop.f32.mrb[0].mxu0
  %v144 = vadd.f32 %v46, %v143
  %v145 = vpop.f32.mrb[0].mxu0
  %146 = vmatprep.mubr.f32.mxu0 0.0
  %147 = vmatmul.mubr.f32.gmra.mrb[0].mxu0 %v53
  %v148 = vpop.f32.mrb[0].mxu0
  %v149 = vadd.f32 %v46, %v148
  %v150 = vpop.f32.mrb[0].mxu0
  %151 = vmatprep.mubr.f32.mxu0 0.0
  %152 = vmatmul.mubr.f32.gmra.mrb[0].mxu0 %v56
  %v153 = vpop.f32.mrb[0].mxu0
  %v154 = vadd.f32 %v46, %v153
  %v155 = vpop.f32.mrb[0].mxu0
  %156 = vmatprep.mubr.f32.mxu0 0.0
  %157 = vmatmul.mubr.f32.gmra.mrb[0].mxu0 %v59
  %v158 = vpop.f32.mrb[0].mxu0
  %v159 = vadd.f32 %v46, %v158
  %v160 = vpop.f32.mrb[0].mxu0
  %161 = vmatprep.mubr.f32.mxu0 0.0
  %162 = vmatmul.mubr.f32.gmra.mrb[0].mxu0 %v62
  %v163 = vpop.f32.mrb[0].mxu0
  %v164 = vadd.f32 %v46, %v163
  %v165 = vpop.f32.mrb[0].mxu0
  %166 = vmatprep.mubr.f32.mxu0 0.0
  %167 = vmatmul.mubr.f32.gmra.mrb[0].mxu0 %v65
  %v168 = vpop.f32.mrb[0].mxu0
  %v169 = vadd.f32 %v46, %v168
  %v170 = vpop.f32.mrb[0].mxu0
  %171 = vmatprep.mubr.f32.mxu0 0.0
  %172 = vmatmul.mubr.f32.gmra.mrb[0].mxu0 %v68
  %v173 = vpop.f32.mrb[0].mxu0
  %v174 = vadd.f32 %v46, %v173
  %v175 = vpop.f32.mrb[0].mxu0
  %176 = vmatprep.mubr.f32.mxu0 0.0
  %177 = vmatmul.mubr.f32.gmra.mrb[0].mxu0 %v71
  %v178 = vpop.f32.mrb[0].mxu0
  %v179 = vadd.f32 %v46, %v178
  %v180 = vpop.f32.mrb[0].mxu0
  %181 = vdwg.mxu0
  %182 = vst [vmem:[#allocation2] sm:$0xff] %v144
  %183 = vst [vmem:[#allocation2 + $0x8] sm:$0xff] %v149
  %184 = vst [vmem:[#allocation2 + $0x10] sm:$0xff] %v154
  %185 = vst [vmem:[#allocation2 + $0x18] sm:$0xff] %v159
  %186 = vst [vmem:[#allocation2 + $0x20] sm:$0xff] %v164
  %187 = vst [vmem:[#allocation2 + $0x28] sm:$0xff] %v169
  %188 = vst [vmem:[#allocation2 + $0x30] sm:$0xff] %v174
  %189 = vst [vmem:[#allocation2 + $0x38] sm:$0xff] %v179
  %vm190 = vcmask 261120
  %191 = vst.msk [vmem:[#allocation4] sm:$0xff] %vm190, 0.0
  %192 = vst.msk [vmem:[#allocation5] sm:$0xff] %vm190, 0.0
  %v193 = vld [vmem:[%s2] sm:$0xff]
  %v194 = vld [vmem:[%s2 + $0x8] sm:$0xff]
  %v195 = vld [vmem:[%s2 + $0x10] sm:$0xff]
  %v196 = vld [vmem:[%s2 + $0x18] sm:$0xff]
  %v197 = vld [vmem:[#allocation2] sm:$0xff]
  %v198 = vld [vmem:[#allocation4] sm:$0xff]
  %v200 = vsel %vm190, %v198, 0
  %202 = vmatprep.subr.mxu0 0.0
  %203 = vmatpush1.msra.mxu0 %v193
  %204 = vmatprep.subr.mxu0 0.0
  %205 = vmatpush1.msra.mxu0 %v194
  %206 = vmatprep.subr.mxu0 0.0
  %207 = vmatpush1.msra.mxu0 %v195
  %208 = vmatprep.subr.mxu0 0.0
  %209 = vmatpush1.msra.mxu0 %v196
  %210 = vmatprep.subr.mxu0 0.0
  %211 = vmatpush1.msra.mxu0 0.0
  %212 = vmatprep.subr.mxu0 0.0
  %213 = vmatpush1.msra.mxu0 0.0
  %214 = vmatprep.subr.mxu0 0.0
  %215 = vmatpush1.msra.mxu0 0.0
  %216 = vmatprep.subr.mxu0 0.0
  %217 = vmatpush1.msra.mxu0 0.0
  %218 = vmatprep.subr.mxu0 0.0
  %219 = vmatpush1.msra.mxu0 0.0
  %220 = vmatprep.subr.mxu0 0.0
  %221 = vmatpush1.msra.mxu0 0.0
  %222 = vmatprep.subr.mxu0 0.0
  %223 = vmatpush1.msra.mxu0 0.0
  %224 = vmatprep.subr.mxu0 0.0
  %225 = vmatpush1.msra.mxu0 0.0
  %226 = vmatprep.subr.mxu0 0.0
  %227 = vmatpush1.msra.mxu0 0.0
  %228 = vmatprep.subr.mxu0 0.0
  %229 = vmatpush1.msra.mxu0 0.0
  %230 = vmatprep.subr.mxu0 0.0
  %231 = vmatpush1.msra.mxu0 0.0
  %232 = vmatprep.subr.mxu0 0.0
  %233 = vmatpush1.msra.mxu0 0.0
  %234 = vmatprep.subr.mxu0 0.0
  %235 = vmatpush1.msra.mxu0 0.0
  %236 = vmatprep.subr.mxu0 0.0
  %237 = vmatpush1.msra.mxu0 0.0
  %238 = vmatprep.subr.mxu0 0.0
  %239 = vmatpush1.msra.mxu0 0.0
  %240 = vmatprep.subr.mxu0 0.0
  %241 = vmatpush1.msra.mxu0 0.0
  %242 = vmatprep.subr.mxu0 0.0
  %243 = vmatpush1.msra.mxu0 0.0
  %244 = vmatprep.subr.mxu0 0.0
  %245 = vmatpush1.msra.mxu0 0.0
  %246 = vmatprep.subr.mxu0 0.0
  %247 = vmatpush1.msra.mxu0 0.0
  %248 = vmatprep.subr.mxu0 0.0
  %249 = vmatpush1.msra.mxu0 0.0
  %250 = vmatprep.subr.mxu0 0.0
  %251 = vmatpush1.msra.mxu0 0.0
  %252 = vmatprep.subr.mxu0 0.0
  %253 = vmatpush1.msra.mxu0 0.0
  %254 = vmatprep.subr.mxu0 0.0
  %255 = vmatpush1.msra.mxu0 0.0
  %256 = vmatprep.subr.mxu0 0.0
  %257 = vmatpush1.msra.mxu0 0.0
  %258 = vmatprep.subr.mxu0 0.0
  %259 = vmatpush1.msra.mxu0 0.0
  %260 = vmatprep.subr.mxu0 0.0
  %261 = vmatpush1.msra.mxu0 0.0
  %262 = vmatprep.subr.mxu0 0.0
  %263 = vmatpush1.msra.mxu0 0.0
  %264 = vmatprep.subr.mxu0 0.0
  %265 = vmatpush1.msra.mxu0 0.0
  %266 = vmatprep.mubr.f32.mxu0 0.0
  %267 = vmatmul.mubr.f32.gmra.mrb[0].mxu0 %v200
  %v268 = vpop.f32.mrb[0].mxu0
  %v269 = vadd.f32 0.0, %v268
  %v270 = vpop.f32.mrb[0].mxu0
  %271 = vdwg.mxu0
  %v272 = vadd.f32 %v197, %v269
  %v273 = vld [vmem:[#allocation5] sm:$0xff]
  %v274 = vxor.u32 %v272, 2147483648
  %v275 = vmul.f32 %v274, 1.442695
  %v276 = vpow.pop %v275
  %v277 = vadd.f32 %v276, 1.0
  %v278 = vrcp.pop %v277
  %v279 = vmul.f32 1.0, %v278
  %v280 = vtanh.pop %v272
  %282 = vrot.lane.b32.xlu0 %v273, 32
  %v283 = vpop.permute.xlu0 %282
  %v285 = vmul.f32 %v279, %v283
  %287 = vrot.lane.b32.xlu0 %v280, 64
  %v288 = vpop.permute.xlu0 %287
  %v290 = vmul.f32 %v279, %v288
  %292 = vrot.lane.b32.xlu0 %v290, 32
  %v293 = vpop.permute.xlu0 %292
  %v295 = vadd.f32 %v285, %v293
  %v296 = vtanh.pop %v295
  %298 = vrot.lane.b32.xlu0 %v296, 64
  %v299 = vpop.permute.xlu0 %298
  %v301 = vmul.f32 %v279, %v299
  %303 = vrot.lane.b32.xlu0 %v301, 32
  %v304 = vpop.permute.xlu0 %303
  %306 = vst.msk [vmem:[#allocation4] sm:$0xff] %vm190, %v304
  %308 = vrot.lane.b32.xlu0 %v295, 96
  %v309 = vpop.permute.xlu0 %308
  %311 = vst.msk [vmem:[#allocation5] sm:$0xff] %vm190, %v309
  %312 = vst.msk [vmem:[#allocation3] sm:$0xff] %vm190, %v304
  %v313 = vld [vmem:[#allocation2 + $0x8] sm:$0xff]
  %v314 = vld [vmem:[#allocation4] sm:$0xff]
  %v316 = vsel %vm190, %v314, 0
  %318 = vmatprep.subr.mxu0 0.0
  %319 = vmatpush1.msra.mxu0 %v193
  %320 = vmatprep.subr.mxu0 0.0
  %321 = vmatpush1.msra.mxu0 %v194
  %322 = vmatprep.subr.mxu0 0.0
  %323 = vmatpush1.msra.mxu0 %v195
  %324 = vmatprep.subr.mxu0 0.0
  %325 = vmatpush1.msra.mxu0 %v196
  %326 = vmatprep.subr.mxu0 0.0
  %327 = vmatpush1.msra.mxu0 0.0
  %328 = vmatprep.subr.mxu0 0.0
  %329 = vmatpush1.msra.mxu0 0.0
  %330 = vmatprep.subr.mxu0 0.0
  %331 = vmatpush1.msra.mxu0 0.0
  %332 = vmatprep.subr.mxu0 0.0
  %333 = vmatpush1.msra.mxu0 0.0
  %334 = vmatprep.subr.mxu0 0.0
  %335 = vmatpush1.msra.mxu0 0.0
  %336 = vmatprep.subr.mxu0 0.0
  %337 = vmatpush1.msra.mxu0 0.0
  %338 = vmatprep.subr.mxu0 0.0
  %339 = vmatpush1.msra.mxu0 0.0
  %340 = vmatprep.subr.mxu0 0.0
  %341 = vmatpush1.msra.mxu0 0.0
  %342 = vmatprep.subr.mxu0 0.0
  %343 = vmatpush1.msra.mxu0 0.0
  %344 = vmatprep.subr.mxu0 0.0
  %345 = vmatpush1.msra.mxu0 0.0
  %346 = vmatprep.subr.mxu0 0.0
  %347 = vmatpush1.msra.mxu0 0.0
  %348 = vmatprep.subr.mxu0 0.0
  %349 = vmatpush1.msra.mxu0 0.0
  %350 = vmatprep.subr.mxu0 0.0
  %351 = vmatpush1.msra.mxu0 0.0
  %352 = vmatprep.subr.mxu0 0.0
  %353 = vmatpush1.msra.mxu0 0.0
  %354 = vmatprep.subr.mxu0 0.0
  %355 = vmatpush1.msra.mxu0 0.0
  %356 = vmatprep.subr.mxu0 0.0
  %357 = vmatpush1.msra.mxu0 0.0
  %358 = vmatprep.subr.mxu0 0.0
  %359 = vmatpush1.msra.mxu0 0.0
  %360 = vmatprep.subr.mxu0 0.0
  %361 = vmatpush1.msra.mxu0 0.0
  %362 = vmatprep.subr.mxu0 0.0
  %363 = vmatpush1.msra.mxu0 0.0
  %364 = vmatprep.subr.mxu0 0.0
  %365 = vmatpush1.msra.mxu0 0.0
  %366 = vmatprep.subr.mxu0 0.0
  %367 = vmatpush1.msra.mxu0 0.0
  %368 = vmatprep.subr.mxu0 0.0
  %369 = vmatpush1.msra.mxu0 0.0
  %370 = vmatprep.subr.mxu0 0.0
  %371 = vmatpush1.msra.mxu0 0.0
  %372 = vmatprep.subr.mxu0 0.0
  %373 = vmatpush1.msra.mxu0 0.0
  %374 = vmatprep.subr.mxu0 0.0
  %375 = vmatpush1.msra.mxu0 0.0
  %376 = vmatprep.subr.mxu0 0.0
  %377 = vmatpush1.msra.mxu0 0.0
  %378 = vmatprep.subr.mxu0 0.0
  %379 = vmatpush1.msra.mxu0 0.0
  %380 = vmatprep.subr.mxu0 0.0
  %381 = vmatpush1.msra.mxu0 0.0
  %382 = vmatprep.mubr.f32.mxu0 0.0
  %383 = vmatmul.mubr.f32.gmra.mrb[0].mxu0 %v316
  %v384 = vpop.f32.mrb[0].mxu0
  %v385 = vadd.f32 0.0, %v384
  %v386 = vpop.f32.mrb[0].mxu0
  %387 = vdwg.mxu0
  %v388 = vadd.f32 %v313, %v385
  %v389 = vld [vmem:[#allocation5] sm:$0xff]
  %v390 = vxor.u32 %v388, 2147483648
  %v391 = vmul.f32 %v390, 1.442695
  %v392 = vpow.pop %v391
  %v393 = vadd.f32 %v392, 1.0
  %v394 = vrcp.pop %v393
  %v395 = vmul.f32 1.0, %v394
  %v396 = vtanh.pop %v388
  %398 = vrot.lane.b32.xlu0 %v389, 32
  %v399 = vpop.permute.xlu0 %398
  %v401 = vmul.f32 %v395, %v399
  %403 = vrot.lane.b32.xlu0 %v396, 64
  %v404 = vpop.permute.xlu0 %403
  %v406 = vmul.f32 %v395, %v404
  %408 = vrot.lane.b32.xlu0 %v406, 32
  %v409 = vpop.permute.xlu0 %408
  %v411 = vadd.f32 %v401, %v409
  %v412 = vtanh.pop %v411
  %414 = vrot.lane.b32.xlu0 %v412, 64
  %v415 = vpop.permute.xlu0 %414
  %v417 = vmul.f32 %v395, %v415
  %419 = vrot.lane.b32.xlu0 %v417, 32
  %v420 = vpop.permute.xlu0 %419
  %422 = vst.msk [vmem:[#allocation4] sm:$0xff] %vm190, %v420
  %424 = vrot.lane.b32.xlu0 %v411, 96
  %v425 = vpop.permute.xlu0 %424
  %427 = vst.msk [vmem:[#allocation5] sm:$0xff] %vm190, %v425
  %428 = vst.msk [vmem:[#allocation3 + $0x8] sm:$0xff] %vm190, %v420
  %v429 = vld [vmem:[#allocation2 + $0x10] sm:$0xff]
  %v430 = vld [vmem:[#allocation4] sm:$0xff]
  %v432 = vsel %vm190, %v430, 0
  %434 = vmatprep.subr.mxu0 0.0
  %435 = vmatpush1.msra.mxu0 %v193
  %436 = vmatprep.subr.mxu0 0.0
  %437 = vmatpush1.msra.mxu0 %v194
  %438 = vmatprep.subr.mxu0 0.0
  %439 = vmatpush1.msra.mxu0 %v195
  %440 = vmatprep.subr.mxu0 0.0
  %441 = vmatpush1.msra.mxu0 %v196
  %442 = vmatprep.subr.mxu0 0.0
  %443 = vmatpush1.msra.mxu0 0.0
  %444 = vmatprep.subr.mxu0 0.0
  %445 = vmatpush1.msra.mxu0 0.0
  %446 = vmatprep.subr.mxu0 0.0
  %447 = vmatpush1.msra.mxu0 0.0
  %448 = vmatprep.subr.mxu0 0.0
  %449 = vmatpush1.msra.mxu0 0.0
  %450 = vmatprep.subr.mxu0 0.0
  %451 = vmatpush1.msra.mxu0 0.0
  %452 = vmatprep.subr.mxu0 0.0
  %453 = vmatpush1.msra.mxu0 0.0
  %454 = vmatprep.subr.mxu0 0.0
  %455 = vmatpush1.msra.mxu0 0.0
  %456 = vmatprep.subr.mxu0 0.0
  %457 = vmatpush1.msra.mxu0 0.0
  %458 = vmatprep.subr.mxu0 0.0
  %459 = vmatpush1.msra.mxu0 0.0
  %460 = vmatprep.subr.mxu0 0.0
  %461 = vmatpush1.msra.mxu0 0.0
  %462 = vmatprep.subr.mxu0 0.0
  %463 = vmatpush1.msra.mxu0 0.0
  %464 = vmatprep.subr.mxu0 0.0
  %465 = vmatpush1.msra.mxu0 0.0
  %466 = vmatprep.subr.mxu0 0.0
  %467 = vmatpush1.msra.mxu0 0.0
  %468 = vmatprep.subr.mxu0 0.0
  %469 = vmatpush1.msra.mxu0 0.0
  %470 = vmatprep.subr.mxu0 0.0
  %471 = vmatpush1.msra.mxu0 0.0
  %472 = vmatprep.subr.mxu0 0.0
  %473 = vmatpush1.msra.mxu0 0.0
  %474 = vmatprep.subr.mxu0 0.0
  %475 = vmatpush1.msra.mxu0 0.0
  %476 = vmatprep.subr.mxu0 0.0
  %477 = vmatpush1.msra.mxu0 0.0
  %478 = vmatprep.subr.mxu0 0.0
  %479 = vmatpush1.msra.mxu0 0.0
  %480 = vmatprep.subr.mxu0 0.0
  %481 = vmatpush1.msra.mxu0 0.0
  %482 = vmatprep.subr.mxu0 0.0
  %483 = vmatpush1.msra.mxu0 0.0
  %484 = vmatprep.subr.mxu0 0.0
  %485 = vmatpush1.msra.mxu0 0.0
  %486 = vmatprep.subr.mxu0 0.0
  %487 = vmatpush1.msra.mxu0 0.0
  %488 = vmatprep.subr.mxu0 0.0
  %489 = vmatpush1.msra.mxu0 0.0
  %490 = vmatprep.subr.mxu0 0.0
  %491 = vmatpush1.msra.mxu0 0.0
  %492 = vmatprep.subr.mxu0 0.0
  %493 = vmatpush1.msra.mxu0 0.0
  %494 = vmatprep.subr.mxu0 0.0
  %495 = vmatpush1.msra.mxu0 0.0
  %496 = vmatprep.subr.mxu0 0.0
  %497 = vmatpush1.msra.mxu0 0.0
  %498 = vmatprep.mubr.f32.mxu0 0.0
  %499 = vmatmul.mubr.f32.gmra.mrb[0].mxu0 %v432
  %v500 = vpop.f32.mrb[0].mxu0
  %v501 = vadd.f32 0.0, %v500
  %v502 = vpop.f32.mrb[0].mxu0
  %503 = vdwg.mxu0
  %v504 = vadd.f32 %v429, %v501
  %v505 = vld [vmem:[#allocation5] sm:$0xff]
  %v506 = vxor.u32 %v504, 2147483648
  %v507 = vmul.f32 %v506, 1.442695
  %v508 = vpow.pop %v507
  %v509 = vadd.f32 %v508, 1.0
  %v510 = vrcp.pop %v509
  %v511 = vmul.f32 1.0, %v510
  %v512 = vtanh.pop %v504
  %514 = vrot.lane.b32.xlu0 %v505, 32
  %v515 = vpop.permute.xlu0 %514
  %v517 = vmul.f32 %v511, %v515
  %519 = vrot.lane.b32.xlu0 %v512, 64
  %v520 = vpop.permute.xlu0 %519
  %v522 = vmul.f32 %v511, %v520
  %524 = vrot.lane.b32.xlu0 %v522, 32
  %v525 = vpop.permute.xlu0 %524
  %v527 = vadd.f32 %v517, %v525
  %v528 = vtanh.pop %v527
  %530 = vrot.lane.b32.xlu0 %v528, 64
  %v531 = vpop.permute.xlu0 %530
  %v533 = vmul.f32 %v511, %v531
  %535 = vrot.lane.b32.xlu0 %v533, 32
  %v536 = vpop.permute.xlu0 %535
  %538 = vst.msk [vmem:[#allocation4] sm:$0xff] %vm190, %v536
  %540 = vrot.lane.b32.xlu0 %v527, 96
  %v541 = vpop.permute.xlu0 %540
  %543 = vst.msk [vmem:[#allocation5] sm:$0xff] %vm190, %v541
  %544 = vst.msk [vmem:[#allocation3 + $0x10] sm:$0xff] %vm190, %v536
  %v545 = vld [vmem:[#allocation2 + $0x18] sm:$0xff]
  %v546 = vld [vmem:[#allocation4] sm:$0xff]
  %v548 = vsel %vm190, %v546, 0
  %550 = vmatprep.subr.mxu0 0.0
  %551 = vmatpush1.msra.mxu0 %v193
  %552 = vmatprep.subr.mxu0 0.0
  %553 = vmatpush1.msra.mxu0 %v194
  %554 = vmatprep.subr.mxu0 0.0
  %555 = vmatpush1.msra.mxu0 %v195
  %556 = vmatprep.subr.mxu0 0.0
  %557 = vmatpush1.msra.mxu0 %v196
  %558 = vmatprep.subr.mxu0 0.0
  %559 = vmatpush1.msra.mxu0 0.0
  %560 = vmatprep.subr.mxu0 0.0
  %561 = vmatpush1.msra.mxu0 0.0
  %562 = vmatprep.subr.mxu0 0.0
  %563 = vmatpush1.msra.mxu0 0.0
  %564 = vmatprep.subr.mxu0 0.0
  %565 = vmatpush1.msra.mxu0 0.0
  %566 = vmatprep.subr.mxu0 0.0
  %567 = vmatpush1.msra.mxu0 0.0
  %568 = vmatprep.subr.mxu0 0.0
  %569 = vmatpush1.msra.mxu0 0.0
  %570 = vmatprep.subr.mxu0 0.0
  %571 = vmatpush1.msra.mxu0 0.0
  %572 = vmatprep.subr.mxu0 0.0
  %573 = vmatpush1.msra.mxu0 0.0
  %574 = vmatprep.subr.mxu0 0.0
  %575 = vmatpush1.msra.mxu0 0.0
  %576 = vmatprep.subr.mxu0 0.0
  %577 = vmatpush1.msra.mxu0 0.0
  %578 = vmatprep.subr.mxu0 0.0
  %579 = vmatpush1.msra.mxu0 0.0
  %580 = vmatprep.subr.mxu0 0.0
  %581 = vmatpush1.msra.mxu0 0.0
  %582 = vmatprep.subr.mxu0 0.0
  %583 = vmatpush1.msra.mxu0 0.0
  %584 = vmatprep.subr.mxu0 0.0
  %585 = vmatpush1.msra.mxu0 0.0
  %586 = vmatprep.subr.mxu0 0.0
  %587 = vmatpush1.msra.mxu0 0.0
  %588 = vmatprep.subr.mxu0 0.0
  %589 = vmatpush1.msra.mxu0 0.0
  %590 = vmatprep.subr.mxu0 0.0
  %591 = vmatpush1.msra.mxu0 0.0
  %592 = vmatprep.subr.mxu0 0.0
  %593 = vmatpush1.msra.mxu0 0.0
  %594 = vmatprep.subr.mxu0 0.0
  %595 = vmatpush1.msra.mxu0 0.0
  %596 = vmatprep.subr.mxu0 0.0
  %597 = vmatpush1.msra.mxu0 0.0
  %598 = vmatprep.subr.mxu0 0.0
  %599 = vmatpush1.msra.mxu0 0.0
  %600 = vmatprep.subr.mxu0 0.0
  %601 = vmatpush1.msra.mxu0 0.0
  %602 = vmatprep.subr.mxu0 0.0
  %603 = vmatpush1.msra.mxu0 0.0
  %604 = vmatprep.subr.mxu0 0.0
  %605 = vmatpush1.msra.mxu0 0.0
  %606 = vmatprep.subr.mxu0 0.0
  %607 = vmatpush1.msra.mxu0 0.0
  %608 = vmatprep.subr.mxu0 0.0
  %609 = vmatpush1.msra.mxu0 0.0
  %610 = vmatprep.subr.mxu0 0.0
  %611 = vmatpush1.msra.mxu0 0.0
  %612 = vmatprep.subr.mxu0 0.0
  %613 = vmatpush1.msra.mxu0 0.0
  %614 = vmatprep.mubr.f32.mxu0 0.0
  %615 = vmatmul.mubr.f32.gmra.mrb[0].mxu0 %v548
  %v616 = vpop.f32.mrb[0].mxu0
  %v617 = vadd.f32 0.0, %v616
  %v618 = vpop.f32.mrb[0].mxu0
  %619 = vdwg.mxu0
  %v620 = vadd.f32 %v545, %v617
  %v621 = vld [vmem:[#allocation5] sm:$0xff]
  %v622 = vxor.u32 %v620, 2147483648
  %v623 = vmul.f32 %v622, 1.442695
  %v624 = vpow.pop %v623
  %v625 = vadd.f32 %v624, 1.0
  %v626 = vrcp.pop %v625
  %v627 = vmul.f32 1.0, %v626
  %v628 = vtanh.pop %v620
  %630 = vrot.lane.b32.xlu0 %v621, 32
  %v631 = vpop.permute.xlu0 %630
  %v633 = vmul.f32 %v627, %v631
  %635 = vrot.lane.b32.xlu0 %v628, 64
  %v636 = vpop.permute.xlu0 %635
  %v638 = vmul.f32 %v627, %v636
  %640 = vrot.lane.b32.xlu0 %v638, 32
  %v641 = vpop.permute.xlu0 %640
  %v643 = vadd.f32 %v633, %v641
  %v644 = vtanh.pop %v643
  %646 = vrot.lane.b32.xlu0 %v644, 64
  %v647 = vpop.permute.xlu0 %646
  %v649 = vmul.f32 %v627, %v647
  %651 = vrot.lane.b32.xlu0 %v649, 32
  %v652 = vpop.permute.xlu0 %651
  %654 = vst.msk [vmem:[#allocation4] sm:$0xff] %vm190, %v652
  %656 = vrot.lane.b32.xlu0 %v643, 96
  %v657 = vpop.permute.xlu0 %656
  %659 = vst.msk [vmem:[#allocation5] sm:$0xff] %vm190, %v657
  %660 = vst.msk [vmem:[#allocation3 + $0x18] sm:$0xff] %vm190, %v652
  %v661 = vld [vmem:[#allocation2 + $0x20] sm:$0xff]
  %v662 = vld [vmem:[#allocation4] sm:$0xff]
  %v664 = vsel %vm190, %v662, 0
  %666 = vmatprep.subr.mxu0 0.0
  %667 = vmatpush1.msra.mxu0 %v193
  %668 = vmatprep.subr.mxu0 0.0
  %669 = vmatpush1.msra.mxu0 %v194
  %670 = vmatprep.subr.mxu0 0.0
  %671 = vmatpush1.msra.mxu0 %v195
  %672 = vmatprep.subr.mxu0 0.0
  %673 = vmatpush1.msra.mxu0 %v196
  %674 = vmatprep.subr.mxu0 0.0
  %675 = vmatpush1.msra.mxu0 0.0
  %676 = vmatprep.subr.mxu0 0.0
  %677 = vmatpush1.msra.mxu0 0.0
  %678 = vmatprep.subr.mxu0 0.0
  %679 = vmatpush1.msra.mxu0 0.0
  %680 = vmatprep.subr.mxu0 0.0
  %681 = vmatpush1.msra.mxu0 0.0
  %682 = vmatprep.subr.mxu0 0.0
  %683 = vmatpush1.msra.mxu0 0.0
  %684 = vmatprep.subr.mxu0 0.0
  %685 = vmatpush1.msra.mxu0 0.0
  %686 = vmatprep.subr.mxu0 0.0
  %687 = vmatpush1.msra.mxu0 0.0
  %688 = vmatprep.subr.mxu0 0.0
  %689 = vmatpush1.msra.mxu0 0.0
  %690 = vmatprep.subr.mxu0 0.0
  %691 = vmatpush1.msra.mxu0 0.0
  %692 = vmatprep.subr.mxu0 0.0
  %693 = vmatpush1.msra.mxu0 0.0
  %694 = vmatprep.subr.mxu0 0.0
  %695 = vmatpush1.msra.mxu0 0.0
  %696 = vmatprep.subr.mxu0 0.0
  %697 = vmatpush1.msra.mxu0 0.0
  %698 = vmatprep.subr.mxu0 0.0
  %699 = vmatpush1.msra.mxu0 0.0
  %700 = vmatprep.subr.mxu0 0.0
  %701 = vmatpush1.msra.mxu0 0.0
  %702 = vmatprep.subr.mxu0 0.0
  %703 = vmatpush1.msra.mxu0 0.0
  %704 = vmatprep.subr.mxu0 0.0
  %705 = vmatpush1.msra.mxu0 0.0
  %706 = vmatprep.subr.mxu0 0.0
  %707 = vmatpush1.msra.mxu0 0.0
  %708 = vmatprep.subr.mxu0 0.0
  %709 = vmatpush1.msra.mxu0 0.0
  %710 = vmatprep.subr.mxu0 0.0
  %711 = vmatpush1.msra.mxu0 0.0
  %712 = vmatprep.subr.mxu0 0.0
  %713 = vmatpush1.msra.mxu0 0.0
  %714 = vmatprep.subr.mxu0 0.0
  %715 = vmatpush1.msra.mxu0 0.0
  %716 = vmatprep.subr.mxu0 0.0
  %717 = vmatpush1.msra.mxu0 0.0
  %718 = vmatprep.subr.mxu0 0.0
  %719 = vmatpush1.msra.mxu0 0.0
  %720 = vmatprep.subr.mxu0 0.0
  %721 = vmatpush1.msra.mxu0 0.0
  %722 = vmatprep.subr.mxu0 0.0
  %723 = vmatpush1.msra.mxu0 0.0
  %724 = vmatprep.subr.mxu0 0.0
  %725 = vmatpush1.msra.mxu0 0.0
  %726 = vmatprep.subr.mxu0 0.0
  %727 = vmatpush1.msra.mxu0 0.0
  %728 = vmatprep.subr.mxu0 0.0
  %729 = vmatpush1.msra.mxu0 0.0
  %730 = vmatprep.mubr.f32.mxu0 0.0
  %731 = vmatmul.mubr.f32.gmra.mrb[0].mxu0 %v664
  %v732 = vpop.f32.mrb[0].mxu0
  %v733 = vadd.f32 0.0, %v732
  %v734 = vpop.f32.mrb[0].mxu0
  %735 = vdwg.mxu0
  %v736 = vadd.f32 %v661, %v733
  %v737 = vld [vmem:[#allocation5] sm:$0xff]
  %v738 = vxor.u32 %v736, 2147483648
  %v739 = vmul.f32 %v738, 1.442695
  %v740 = vpow.pop %v739
  %v741 = vadd.f32 %v740, 1.0
  %v742 = vrcp.pop %v741
  %v743 = vmul.f32 1.0, %v742
  %v744 = vtanh.pop %v736
  %746 = vrot.lane.b32.xlu0 %v737, 32
  %v747 = vpop.permute.xlu0 %746
  %v749 = vmul.f32 %v743, %v747
  %751 = vrot.lane.b32.xlu0 %v744, 64
  %v752 = vpop.permute.xlu0 %751
  %v754 = vmul.f32 %v743, %v752
  %756 = vrot.lane.b32.xlu0 %v754, 32
  %v757 = vpop.permute.xlu0 %756
  %v759 = vadd.f32 %v749, %v757
  %v760 = vtanh.pop %v759
  %762 = vrot.lane.b32.xlu0 %v760, 64
  %v763 = vpop.permute.xlu0 %762
  %v765 = vmul.f32 %v743, %v763
  %767 = vrot.lane.b32.xlu0 %v765, 32
  %v768 = vpop.permute.xlu0 %767
  %770 = vst.msk [vmem:[#allocation4] sm:$0xff] %vm190, %v768
  %772 = vrot.lane.b32.xlu0 %v759, 96
  %v773 = vpop.permute.xlu0 %772
  %775 = vst.msk [vmem:[#allocation5] sm:$0xff] %vm190, %v773
  %776 = vst.msk [vmem:[#allocation3 + $0x20] sm:$0xff] %vm190, %v768
  %v777 = vld [vmem:[#allocation2 + $0x28] sm:$0xff]
  %v778 = vld [vmem:[#allocation4] sm:$0xff]
  %v780 = vsel %vm190, %v778, 0
  %782 = vmatprep.subr.mxu0 0.0
  %783 = vmatpush1.msra.mxu0 %v193
  %784 = vmatprep.subr.mxu0 0.0
  %785 = vmatpush1.msra.mxu0 %v194
  %786 = vmatprep.subr.mxu0 0.0
  %787 = vmatpush1.msra.mxu0 %v195
  %788 = vmatprep.subr.mxu0 0.0
  %789 = vmatpush1.msra.mxu0 %v196
  %790 = vmatprep.subr.mxu0 0.0
  %791 = vmatpush1.msra.mxu0 0.0
  %792 = vmatprep.subr.mxu0 0.0
  %793 = vmatpush1.msra.mxu0 0.0
  %794 = vmatprep.subr.mxu0 0.0
  %795 = vmatpush1.msra.mxu0 0.0
  %796 = vmatprep.subr.mxu0 0.0
  %797 = vmatpush1.msra.mxu0 0.0
  %798 = vmatprep.subr.mxu0 0.0
  %799 = vmatpush1.msra.mxu0 0.0
  %800 = vmatprep.subr.mxu0 0.0
  %801 = vmatpush1.msra.mxu0 0.0
  %802 = vmatprep.subr.mxu0 0.0
  %803 = vmatpush1.msra.mxu0 0.0
  %804 = vmatprep.subr.mxu0 0.0
  %805 = vmatpush1.msra.mxu0 0.0
  %806 = vmatprep.subr.mxu0 0.0
  %807 = vmatpush1.msra.mxu0 0.0
  %808 = vmatprep.subr.mxu0 0.0
  %809 = vmatpush1.msra.mxu0 0.0
  %810 = vmatprep.subr.mxu0 0.0
  %811 = vmatpush1.msra.mxu0 0.0
  %812 = vmatprep.subr.mxu0 0.0
  %813 = vmatpush1.msra.mxu0 0.0
  %814 = vmatprep.subr.mxu0 0.0
  %815 = vmatpush1.msra.mxu0 0.0
  %816 = vmatprep.subr.mxu0 0.0
  %817 = vmatpush1.msra.mxu0 0.0
  %818 = vmatprep.subr.mxu0 0.0
  %819 = vmatpush1.msra.mxu0 0.0
  %820 = vmatprep.subr.mxu0 0.0
  %821 = vmatpush1.msra.mxu0 0.0
  %822 = vmatprep.subr.mxu0 0.0
  %823 = vmatpush1.msra.mxu0 0.0
  %824 = vmatprep.subr.mxu0 0.0
  %825 = vmatpush1.msra.mxu0 0.0
  %826 = vmatprep.subr.mxu0 0.0
  %827 = vmatpush1.msra.mxu0 0.0
  %828 = vmatprep.subr.mxu0 0.0
  %829 = vmatpush1.msra.mxu0 0.0
  %830 = vmatprep.subr.mxu0 0.0
  %831 = vmatpush1.msra.mxu0 0.0
  %832 = vmatprep.subr.mxu0 0.0
  %833 = vmatpush1.msra.mxu0 0.0
  %834 = vmatprep.subr.mxu0 0.0
  %835 = vmatpush1.msra.mxu0 0.0
  %836 = vmatprep.subr.mxu0 0.0
  %837 = vmatpush1.msra.mxu0 0.0
  %838 = vmatprep.subr.mxu0 0.0
  %839 = vmatpush1.msra.mxu0 0.0
  %840 = vmatprep.subr.mxu0 0.0
  %841 = vmatpush1.msra.mxu0 0.0
  %842 = vmatprep.subr.mxu0 0.0
  %843 = vmatpush1.msra.mxu0 0.0
  %844 = vmatprep.subr.mxu0 0.0
  %845 = vmatpush1.msra.mxu0 0.0
  %846 = vmatprep.mubr.f32.mxu0 0.0
  %847 = vmatmul.mubr.f32.gmra.mrb[0].mxu0 %v780
  %v848 = vpop.f32.mrb[0].mxu0
  %v849 = vadd.f32 0.0, %v848
  %v850 = vpop.f32.mrb[0].mxu0
  %851 = vdwg.mxu0
  %v852 = vadd.f32 %v777, %v849
  %v853 = vld [vmem:[#allocation5] sm:$0xff]
  %v854 = vxor.u32 %v852, 2147483648
  %v855 = vmul.f32 %v854, 1.442695
  %v856 = vpow.pop %v855
  %v857 = vadd.f32 %v856, 1.0
  %v858 = vrcp.pop %v857
  %v859 = vmul.f32 1.0, %v858
  %v860 = vtanh.pop %v852
  %862 = vrot.lane.b32.xlu0 %v853, 32
  %v863 = vpop.permute.xlu0 %862
  %v865 = vmul.f32 %v859, %v863
  %867 = vrot.lane.b32.xlu0 %v860, 64
  %v868 = vpop.permute.xlu0 %867
  %v870 = vmul.f32 %v859, %v868
  %872 = vrot.lane.b32.xlu0 %v870, 32
  %v873 = vpop.permute.xlu0 %872
  %v875 = vadd.f32 %v865, %v873
  %v876 = vtanh.pop %v875
  %878 = vrot.lane.b32.xlu0 %v876, 64
  %v879 = vpop.permute.xlu0 %878
  %v881 = vmul.f32 %v859, %v879
  %883 = vrot.lane.b32.xlu0 %v881, 32
  %v884 = vpop.permute.xlu0 %883
  %886 = vst.msk [vmem:[#allocation4] sm:$0xff] %vm190, %v884
  %888 = vrot.lane.b32.xlu0 %v875, 96
  %v889 = vpop.permute.xlu0 %888
  %891 = vst.msk [vmem:[#allocation5] sm:$0xff] %vm190, %v889
  %892 = vst.msk [vmem:[#allocation3 + $0x28] sm:$0xff] %vm190, %v884
  %v893 = vld [vmem:[#allocation2 + $0x30] sm:$0xff]
  %v894 = vld [vmem:[#allocation4] sm:$0xff]
  %v896 = vsel %vm190, %v894, 0
  %898 = vmatprep.subr.mxu0 0.0
  %899 = vmatpush1.msra.mxu0 %v193
  %900 = vmatprep.subr.mxu0 0.0
  %901 = vmatpush1.msra.mxu0 %v194
  %902 = vmatprep.subr.mxu0 0.0
  %903 = vmatpush1.msra.mxu0 %v195
  %904 = vmatprep.subr.mxu0 0.0
  %905 = vmatpush1.msra.mxu0 %v196
  %906 = vmatprep.subr.mxu0 0.0
  %907 = vmatpush1.msra.mxu0 0.0
  %908 = vmatprep.subr.mxu0 0.0
  %909 = vmatpush1.msra.mxu0 0.0
  %910 = vmatprep.subr.mxu0 0.0
  %911 = vmatpush1.msra.mxu0 0.0
  %912 = vmatprep.subr.mxu0 0.0
  %913 = vmatpush1.msra.mxu0 0.0
  %914 = vmatprep.subr.mxu0 0.0
  %915 = vmatpush1.msra.mxu0 0.0
  %916 = vmatprep.subr.mxu0 0.0
  %917 = vmatpush1.msra.mxu0 0.0
  %918 = vmatprep.subr.mxu0 0.0
  %919 = vmatpush1.msra.mxu0 0.0
  %920 = vmatprep.subr.mxu0 0.0
  %921 = vmatpush1.msra.mxu0 0.0
  %922 = vmatprep.subr.mxu0 0.0
  %923 = vmatpush1.msra.mxu0 0.0
  %924 = vmatprep.subr.mxu0 0.0
  %925 = vmatpush1.msra.mxu0 0.0
  %926 = vmatprep.subr.mxu0 0.0
  %927 = vmatpush1.msra.mxu0 0.0
  %928 = vmatprep.subr.mxu0 0.0
  %929 = vmatpush1.msra.mxu0 0.0
  %930 = vmatprep.subr.mxu0 0.0
  %931 = vmatpush1.msra.mxu0 0.0
  %932 = vmatprep.subr.mxu0 0.0
  %933 = vmatpush1.msra.mxu0 0.0
  %934 = vmatprep.subr.mxu0 0.0
  %935 = vmatpush1.msra.mxu0 0.0
  %936 = vmatprep.subr.mxu0 0.0
  %937 = vmatpush1.msra.mxu0 0.0
  %938 = vmatprep.subr.mxu0 0.0
  %939 = vmatpush1.msra.mxu0 0.0
  %940 = vmatprep.subr.mxu0 0.0
  %941 = vmatpush1.msra.mxu0 0.0
  %942 = vmatprep.subr.mxu0 0.0
  %943 = vmatpush1.msra.mxu0 0.0
  %944 = vmatprep.subr.mxu0 0.0
  %945 = vmatpush1.msra.mxu0 0.0
  %946 = vmatprep.subr.mxu0 0.0
  %947 = vmatpush1.msra.mxu0 0.0
  %948 = vmatprep.subr.mxu0 0.0
  %949 = vmatpush1.msra.mxu0 0.0
  %950 = vmatprep.subr.mxu0 0.0
  %951 = vmatpush1.msra.mxu0 0.0
  %952 = vmatprep.subr.mxu0 0.0
  %953 = vmatpush1.msra.mxu0 0.0
  %954 = vmatprep.subr.mxu0 0.0
  %955 = vmatpush1.msra.mxu0 0.0
  %956 = vmatprep.subr.mxu0 0.0
  %957 = vmatpush1.msra.mxu0 0.0
  %958 = vmatprep.subr.mxu0 0.0
  %959 = vmatpush1.msra.mxu0 0.0
  %960 = vmatprep.subr.mxu0 0.0
  %961 = vmatpush1.msra.mxu0 0.0
  %962 = vmatprep.mubr.f32.mxu0 0.0
  %963 = vmatmul.mubr.f32.gmra.mrb[0].mxu0 %v896
  %v964 = vpop.f32.mrb[0].mxu0
  %v965 = vadd.f32 0.0, %v964
  %v966 = vpop.f32.mrb[0].mxu0
  %967 = vdwg.mxu0
  %v968 = vadd.f32 %v893, %v965
  %v969 = vld [vmem:[#allocation5] sm:$0xff]
  %v970 = vxor.u32 %v968, 2147483648
  %v971 = vmul.f32 %v970, 1.442695
  %v972 = vpow.pop %v971
  %v973 = vadd.f32 %v972, 1.0
  %v974 = vrcp.pop %v973
  %v975 = vmul.f32 1.0, %v974
  %v976 = vtanh.pop %v968
  %978 = vrot.lane.b32.xlu0 %v969, 32
  %v979 = vpop.permute.xlu0 %978
  %v981 = vmul.f32 %v975, %v979
  %983 = vrot.lane.b32.xlu0 %v976, 64
  %v984 = vpop.permute.xlu0 %983
  %v986 = vmul.f32 %v975, %v984
  %988 = vrot.lane.b32.xlu0 %v986, 32
  %v989 = vpop.permute.xlu0 %988
  %v991 = vadd.f32 %v981, %v989
  %v992 = vtanh.pop %v991
  %994 = vrot.lane.b32.xlu0 %v992, 64
  %v995 = vpop.permute.xlu0 %994
  %v997 = vmul.f32 %v975, %v995
  %999 = vrot.lane.b32.xlu0 %v997, 32
  %v1000 = vpop.permute.xlu0 %999
  %1002 = vst.msk [vmem:[#allocation4] sm:$0xff] %vm190, %v1000
  %1004 = vrot.lane.b32.xlu0 %v991, 96
  %v1005 = vpop.permute.xlu0 %1004
  %1007 = vst.msk [vmem:[#allocation5] sm:$0xff] %vm190, %v1005
  %1008 = vst.msk [vmem:[#allocation3 + $0x30] sm:$0xff] %vm190, %v1000
  %v1009 = vld [vmem:[#allocation2 + $0x38] sm:$0xff]
  %v1010 = vld [vmem:[#allocation4] sm:$0xff]
  %v1012 = vsel %vm190, %v1010, 0
  %1014 = vmatprep.subr.mxu0 0.0
  %1015 = vmatpush1.msra.mxu0 %v193
  %1016 = vmatprep.subr.mxu0 0.0
  %1017 = vmatpush1.msra.mxu0 %v194
  %1018 = vmatprep.subr.mxu0 0.0
  %1019 = vmatpush1.msra.mxu0 %v195
  %1020 = vmatprep.subr.mxu0 0.0
  %1021 = vmatpush1.msra.mxu0 %v196
  %1022 = vmatprep.subr.mxu0 0.0
  %1023 = vmatpush1.msra.mxu0 0.0
  %1024 = vmatprep.subr.mxu0 0.0
  %1025 = vmatpush1.msra.mxu0 0.0
  %1026 = vmatprep.subr.mxu0 0.0
  %1027 = vmatpush1.msra.mxu0 0.0
  %1028 = vmatprep.subr.mxu0 0.0
  %1029 = vmatpush1.msra.mxu0 0.0
  %1030 = vmatprep.subr.mxu0 0.0
  %1031 = vmatpush1.msra.mxu0 0.0
  %1032 = vmatprep.subr.mxu0 0.0
  %1033 = vmatpush1.msra.mxu0 0.0
  %1034 = vmatprep.subr.mxu0 0.0
  %1035 = vmatpush1.msra.mxu0 0.0
  %1036 = vmatprep.subr.mxu0 0.0
  %1037 = vmatpush1.msra.mxu0 0.0
  %1038 = vmatprep.subr.mxu0 0.0
  %1039 = vmatpush1.msra.mxu0 0.0
  %1040 = vmatprep.subr.mxu0 0.0
  %1041 = vmatpush1.msra.mxu0 0.0
  %1042 = vmatprep.subr.mxu0 0.0
  %1043 = vmatpush1.msra.mxu0 0.0
  %1044 = vmatprep.subr.mxu0 0.0
  %1045 = vmatpush1.msra.mxu0 0.0
  %1046 = vmatprep.subr.mxu0 0.0
  %1047 = vmatpush1.msra.mxu0 0.0
  %1048 = vmatprep.subr.mxu0 0.0
  %1049 = vmatpush1.msra.mxu0 0.0
  %1050 = vmatprep.subr.mxu0 0.0
  %1051 = vmatpush1.msra.mxu0 0.0
  %1052 = vmatprep.subr.mxu0 0.0
  %1053 = vmatpush1.msra.mxu0 0.0
  %1054 = vmatprep.subr.mxu0 0.0
  %1055 = vmatpush1.msra.mxu0 0.0
  %1056 = vmatprep.subr.mxu0 0.0
  %1057 = vmatpush1.msra.mxu0 0.0
  %1058 = vmatprep.subr.mxu0 0.0
  %1059 = vmatpush1.msra.mxu0 0.0
  %1060 = vmatprep.subr.mxu0 0.0
  %1061 = vmatpush1.msra.mxu0 0.0
  %1062 = vmatprep.subr.mxu0 0.0
  %1063 = vmatpush1.msra.mxu0 0.0
  %1064 = vmatprep.subr.mxu0 0.0
  %1065 = vmatpush1.msra.mxu0 0.0
  %1066 = vmatprep.subr.mxu0 0.0
  %1067 = vmatpush1.msra.mxu0 0.0
  %1068 = vmatprep.subr.mxu0 0.0
  %1069 = vmatpush1.msra.mxu0 0.0
  %1070 = vmatprep.subr.mxu0 0.0
  %1071 = vmatpush1.msra.mxu0 0.0
  %1072 = vmatprep.subr.mxu0 0.0
  %1073 = vmatpush1.msra.mxu0 0.0
  %1074 = vmatprep.subr.mxu0 0.0
  %1075 = vmatpush1.msra.mxu0 0.0
  %1076 = vmatprep.subr.mxu0 0.0
  %1077 = vmatpush1.msra.mxu0 0.0
  %1078 = vmatprep.mubr.f32.mxu0 0.0
  %1079 = vmatmul.mubr.f32.gmra.mrb[0].mxu0 %v1012
  %v1080 = vpop.f32.mrb[0].mxu0
  %v1081 = vadd.f32 0.0, %v1080
  %v1082 = vpop.f32.mrb[0].mxu0
  %1083 = vdwg.mxu0
  %v1084 = vadd.f32 %v1009, %v1081
  %v1085 = vld [vmem:[#allocation5] sm:$0xff]
  %v1086 = vxor.u32 %v1084, 2147483648
  %v1087 = vmul.f32 %v1086, 1.442695
  %v1088 = vpow.pop %v1087
  %v1089 = vadd.f32 %v1088, 1.0
  %v1090 = vrcp.pop %v1089
  %v1091 = vmul.f32 1.0, %v1090
  %v1092 = vtanh.pop %v1084
  %1094 = vrot.lane.b32.xlu0 %v1085, 32
  %v1095 = vpop.permute.xlu0 %1094
  %v1097 = vmul.f32 %v1091, %v1095
  %1099 = vrot.lane.b32.xlu0 %v1092, 64
  %v1100 = vpop.permute.xlu0 %1099
  %v1102 = vmul.f32 %v1091, %v1100
  %1104 = vrot.lane.b32.xlu0 %v1102, 32
  %v1105 = vpop.permute.xlu0 %1104
  %v1107 = vadd.f32 %v1097, %v1105
  %v1108 = vtanh.pop %v1107
  %1110 = vrot.lane.b32.xlu0 %v1108, 64
  %v1111 = vpop.permute.xlu0 %1110
  %v1113 = vmul.f32 %v1091, %v1111
  %1115 = vrot.lane.b32.xlu0 %v1113, 32
  %v1116 = vpop.permute.xlu0 %1115
  %1118 = vst.msk [vmem:[#allocation4] sm:$0xff] %vm190, %v1116
  %1120 = vrot.lane.b32.xlu0 %v1107, 96
  %v1121 = vpop.permute.xlu0 %1120
  %1123 = vst.msk [vmem:[#allocation5] sm:$0xff] %vm190, %v1121
  %1124 = vst.msk [vmem:[#allocation3 + $0x38] sm:$0xff] %vm190, %v1116
  %v1125 = vld [vmem:[#allocation3] sm:$0xff]
  %v1126 = vld [vmem:[#allocation3 + $0x8] sm:$0xff]
  %v1127 = vld [vmem:[#allocation3 + $0x10] sm:$0xff]
  %v1128 = vld [vmem:[#allocation3 + $0x18] sm:$0xff]
  %v1129 = vld [vmem:[#allocation3 + $0x20] sm:$0xff]
  %v1130 = vld [vmem:[#allocation3 + $0x28] sm:$0xff]
  %v1131 = vld [vmem:[#allocation3 + $0x30] sm:$0xff]
  %v1132 = vld [vmem:[#allocation3 + $0x38] sm:$0xff]
  %v1133 = vld [vmem:[%s4] sm:$0xff]
  %v1134 = vld [vmem:[%s4 + $0x8] sm:$0xff]
  %v1135 = vld [vmem:[%s4 + $0x10] sm:$0xff]
  %v1136 = vld [vmem:[%s4 + $0x18] sm:$0xff]
  %v1137 = vld [vmem:[%s6] sm:$0x1]
  %v1139 = vlaneseq
  %v1140 = vshrl.u32 %v1139, 7
  %v1141 = vsub.s32 0, %v1140
  %v1142 = vrot.slane %v1137, %v1141
  %v1145 = vsel %vm190, %v1125, 0
  %v1148 = vsel %vm190, %v1126, 0
  %v1151 = vsel %vm190, %v1127, 0
  %v1154 = vsel %vm190, %v1128, 0
  %v1157 = vsel %vm190, %v1129, 0
  %v1160 = vsel %vm190, %v1130, 0
  %v1163 = vsel %vm190, %v1131, 0
  %v1166 = vsel %vm190, %v1132, 0
  %1168 = vmatprep.subr.mxu0 0.0
  %1169 = vmatpush1.msra.mxu0 %v1133
  %1170 = vmatprep.subr.mxu0 0.0
  %1171 = vmatpush1.msra.mxu0 %v1134
  %1172 = vmatprep.subr.mxu0 0.0
  %1173 = vmatpush1.msra.mxu0 %v1135
  %1174 = vmatprep.subr.mxu0 0.0
  %1175 = vmatpush1.msra.mxu0 %v1136
  %1176 = vmatprep.subr.mxu0 0.0
  %1177 = vmatpush1.msra.mxu0 0.0
  %1178 = vmatprep.subr.mxu0 0.0
  %1179 = vmatpush1.msra.mxu0 0.0
  %1180 = vmatprep.subr.mxu0 0.0
  %1181 = vmatpush1.msra.mxu0 0.0
  %1182 = vmatprep.subr.mxu0 0.0
  %1183 = vmatpush1.msra.mxu0 0.0
  %1184 = vmatprep.subr.mxu0 0.0
  %1185 = vmatpush1.msra.mxu0 0.0
  %1186 = vmatprep.subr.mxu0 0.0
  %1187 = vmatpush1.msra.mxu0 0.0
  %1188 = vmatprep.subr.mxu0 0.0
  %1189 = vmatpush1.msra.mxu0 0.0
  %1190 = vmatprep.subr.mxu0 0.0
  %1191 = vmatpush1.msra.mxu0 0.0
  %1192 = vmatprep.subr.mxu0 0.0
  %1193 = vmatpush1.msra.mxu0 0.0
  %1194 = vmatprep.subr.mxu0 0.0
  %1195 = vmatpush1.msra.mxu0 0.0
  %1196 = vmatprep.subr.mxu0 0.0
  %1197 = vmatpush1.msra.mxu0 0.0
  %1198 = vmatprep.subr.mxu0 0.0
  %1199 = vmatpush1.msra.mxu0 0.0
  %1200 = vmatprep.subr.mxu0 0.0
  %1201 = vmatpush1.msra.mxu0 0.0
  %1202 = vmatprep.subr.mxu0 0.0
  %1203 = vmatpush1.msra.mxu0 0.0
  %1204 = vmatprep.subr.mxu0 0.0
  %1205 = vmatpush1.msra.mxu0 0.0
  %1206 = vmatprep.subr.mxu0 0.0
  %1207 = vmatpush1.msra.mxu0 0.0
  %1208 = vmatprep.subr.mxu0 0.0
  %1209 = vmatpush1.msra.mxu0 0.0
  %1210 = vmatprep.subr.mxu0 0.0
  %1211 = vmatpush1.msra.mxu0 0.0
  %1212 = vmatprep.subr.mxu0 0.0
  %1213 = vmatpush1.msra.mxu0 0.0
  %1214 = vmatprep.subr.mxu0 0.0
  %1215 = vmatpush1.msra.mxu0 0.0
  %1216 = vmatprep.subr.mxu0 0.0
  %1217 = vmatpush1.msra.mxu0 0.0
  %1218 = vmatprep.subr.mxu0 0.0
  %1219 = vmatpush1.msra.mxu0 0.0
  %1220 = vmatprep.subr.mxu0 0.0
  %1221 = vmatpush1.msra.mxu0 0.0
  %1222 = vmatprep.subr.mxu0 0.0
  %1223 = vmatpush1.msra.mxu0 0.0
  %1224 = vmatprep.subr.mxu0 0.0
  %1225 = vmatpush1.msra.mxu0 0.0
  %1226 = vmatprep.subr.mxu0 0.0
  %1227 = vmatpush1.msra.mxu0 0.0
  %1228 = vmatprep.subr.mxu0 0.0
  %1229 = vmatpush1.msra.mxu0 0.0
  %1230 = vmatprep.subr.mxu0 0.0
  %1231 = vmatpush1.msra.mxu0 0.0
  %1232 = vmatprep.mubr.f32.mxu0 0.0
  %1233 = vmatmul.mubr.f32.gmra.mrb[0].mxu0 %v1145
  %v1234 = vpop.f32.mrb[0].mxu0
  %v1235 = vadd.f32 %v1142, %v1234
  %v1236 = vpop.f32.mrb[0].mxu0
  %1237 = vmatprep.mubr.f32.mxu0 0.0
  %1238 = vmatmul.mubr.f32.gmra.mrb[0].mxu0 %v1148
  %v1239 = vpop.f32.mrb[0].mxu0
  %v1240 = vadd.f32 %v1142, %v1239
  %v1241 = vpop.f32.mrb[0].mxu0
  %1242 = vmatprep.mubr.f32.mxu0 0.0
  %1243 = vmatmul.mubr.f32.gmra.mrb[0].mxu0 %v1151
  %v1244 = vpop.f32.mrb[0].mxu0
  %v1245 = vadd.f32 %v1142, %v1244
  %v1246 = vpop.f32.mrb[0].mxu0
  %1247 = vmatprep.mubr.f32.mxu0 0.0
  %1248 = vmatmul.mubr.f32.gmra.mrb[0].mxu0 %v1154
  %v1249 = vpop.f32.mrb[0].mxu0
  %v1250 = vadd.f32 %v1142, %v1249
  %v1251 = vpop.f32.mrb[0].mxu0
  %1252 = vmatprep.mubr.f32.mxu0 0.0
  %1253 = vmatmul.mubr.f32.gmra.mrb[0].mxu0 %v1157
  %v1254 = vpop.f32.mrb[0].mxu0
  %v1255 = vadd.f32 %v1142, %v1254
  %v1256 = vpop.f32.mrb[0].mxu0
  %1257 = vmatprep.mubr.f32.mxu0 0.0
  %1258 = vmatmul.mubr.f32.gmra.mrb[0].mxu0 %v1160
  %v1259 = vpop.f32.mrb[0].mxu0
  %v1260 = vadd.f32 %v1142, %v1259
  %v1261 = vpop.f32.mrb[0].mxu0
  %1262 = vmatprep.mubr.f32.mxu0 0.0
  %1263 = vmatmul.mubr.f32.gmra.mrb[0].mxu0 %v1163
  %v1264 = vpop.f32.mrb[0].mxu0
  %v1265 = vadd.f32 %v1142, %v1264
  %v1266 = vpop.f32.mrb[0].mxu0
  %1267 = vmatprep.mubr.f32.mxu0 0.0
  %1268 = vmatmul.mubr.f32.gmra.mrb[0].mxu0 %v1166
  %v1269 = vpop.f32.mrb[0].mxu0
  %v1270 = vadd.f32 %v1142, %v1269
  %v1271 = vpop.f32.mrb[0].mxu0
  %1272 = vdwg.mxu0
  %1273 = vst [vmem:[#allocation2] sm:$0xff] %v1235
  %1274 = vst [vmem:[#allocation2 + $0x8] sm:$0xff] %v1240
  %1275 = vst [vmem:[#allocation2 + $0x10] sm:$0xff] %v1245
  %1276 = vst [vmem:[#allocation2 + $0x18] sm:$0xff] %v1250
  %1277 = vst [vmem:[#allocation2 + $0x20] sm:$0xff] %v1255
  %1278 = vst [vmem:[#allocation2 + $0x28] sm:$0xff] %v1260
  %1279 = vst [vmem:[#allocation2 + $0x30] sm:$0xff] %v1265
  %1280 = vst [vmem:[#allocation2 + $0x38] sm:$0xff] %v1270
  %1281 = vst.msk [vmem:[#allocation4] sm:$0xff] %vm190, 0.0
  %1282 = vst.msk [vmem:[#allocation5] sm:$0xff] %vm190, 0.0
  %v1283 = vld [vmem:[%s5] sm:$0xff]
  %v1284 = vld [vmem:[%s5 + $0x8] sm:$0xff]
  %v1285 = vld [vmem:[%s5 + $0x10] sm:$0xff]
  %v1286 = vld [vmem:[%s5 + $0x18] sm:$0xff]
  %v1287 = vld [vmem:[#allocation2] sm:$0xff]
  %v1288 = vld [vmem:[#allocation4] sm:$0xff]
  %v1290 = vsel %vm190, %v1288, 0
  %1292 = vmatprep.subr.mxu0 0.0
  %1293 = vmatpush1.msra.mxu0 %v1283
  %1294 = vmatprep.subr.mxu0 0.0
  %1295 = vmatpush1.msra.mxu0 %v1284
  %1296 = vmatprep.subr.mxu0 0.0
  %1297 = vmatpush1.msra.mxu0 %v1285
  %1298 = vmatprep.subr.mxu0 0.0
  %1299 = vmatpush1.msra.mxu0 %v1286
  %1300 = vmatprep.subr.mxu0 0.0
  %1301 = vmatpush1.msra.mxu0 0.0
  %1302 = vmatprep.subr.mxu0 0.0
  %1303 = vmatpush1.msra.mxu0 0.0
  %1304 = vmatprep.subr.mxu0 0.0
  %1305 = vmatpush1.msra.mxu0 0.0
  %1306 = vmatprep.subr.mxu0 0.0
  %1307 = vmatpush1.msra.mxu0 0.0
  %1308 = vmatprep.subr.mxu0 0.0
  %1309 = vmatpush1.msra.mxu0 0.0
  %1310 = vmatprep.subr.mxu0 0.0
  %1311 = vmatpush1.msra.mxu0 0.0
  %1312 = vmatprep.subr.mxu0 0.0
  %1313 = vmatpush1.msra.mxu0 0.0
  %1314 = vmatprep.subr.mxu0 0.0
  %1315 = vmatpush1.msra.mxu0 0.0
  %1316 = vmatprep.subr.mxu0 0.0
  %1317 = vmatpush1.msra.mxu0 0.0
  %1318 = vmatprep.subr.mxu0 0.0
  %1319 = vmatpush1.msra.mxu0 0.0
  %1320 = vmatprep.subr.mxu0 0.0
  %1321 = vmatpush1.msra.mxu0 0.0
  %1322 = vmatprep.subr.mxu0 0.0
  %1323 = vmatpush1.msra.mxu0 0.0
  %1324 = vmatprep.subr.mxu0 0.0
  %1325 = vmatpush1.msra.mxu0 0.0
  %1326 = vmatprep.subr.mxu0 0.0
  %1327 = vmatpush1.msra.mxu0 0.0
  %1328 = vmatprep.subr.mxu0 0.0
  %1329 = vmatpush1.msra.mxu0 0.0
  %1330 = vmatprep.subr.mxu0 0.0
  %1331 = vmatpush1.msra.mxu0 0.0
  %1332 = vmatprep.subr.mxu0 0.0
  %1333 = vmatpush1.msra.mxu0 0.0
  %1334 = vmatprep.subr.mxu0 0.0
  %1335 = vmatpush1.msra.mxu0 0.0
  %1336 = vmatprep.subr.mxu0 0.0
  %1337 = vmatpush1.msra.mxu0 0.0
  %1338 = vmatprep.subr.mxu0 0.0
  %1339 = vmatpush1.msra.mxu0 0.0
  %1340 = vmatprep.subr.mxu0 0.0
  %1341 = vmatpush1.msra.mxu0 0.0
  %1342 = vmatprep.subr.mxu0 0.0
  %1343 = vmatpush1.msra.mxu0 0.0
  %1344 = vmatprep.subr.mxu0 0.0
  %1345 = vmatpush1.msra.mxu0 0.0
  %1346 = vmatprep.subr.mxu0 0.0
  %1347 = vmatpush1.msra.mxu0 0.0
  %1348 = vmatprep.subr.mxu0 0.0
  %1349 = vmatpush1.msra.mxu0 0.0
  %1350 = vmatprep.subr.mxu0 0.0
  %1351 = vmatpush1.msra.mxu0 0.0
  %1352 = vmatprep.subr.mxu0 0.0
  %1353 = vmatpush1.msra.mxu0 0.0
  %1354 = vmatprep.subr.mxu0 0.0
  %1355 = vmatpush1.msra.mxu0 0.0
  %1356 = vmatprep.mubr.f32.mxu0 0.0
  %1357 = vmatmul.mubr.f32.gmra.mrb[0].mxu0 %v1290
  %v1358 = vpop.f32.mrb[0].mxu0
  %v1359 = vadd.f32 0.0, %v1358
  %v1360 = vpop.f32.mrb[0].mxu0
  %1361 = vdwg.mxu0
  %v1362 = vadd.f32 %v1287, %v1359
  %v1363 = vld [vmem:[#allocation5] sm:$0xff]
  %v1364 = vxor.u32 %v1362, 2147483648
  %v1365 = vmul.f32 %v1364, 1.442695
  %v1366 = vpow.pop %v1365
  %v1367 = vadd.f32 %v1366, 1.0
  %v1368 = vrcp.pop %v1367
  %v1369 = vmul.f32 1.0, %v1368
  %v1370 = vtanh.pop %v1362
  %1372 = vrot.lane.b32.xlu0 %v1363, 32
  %v1373 = vpop.permute.xlu0 %1372
  %v1375 = vmul.f32 %v1369, %v1373
  %1377 = vrot.lane.b32.xlu0 %v1370, 64
  %v1378 = vpop.permute.xlu0 %1377
  %v1380 = vmul.f32 %v1369, %v1378
  %1382 = vrot.lane.b32.xlu0 %v1380, 32
  %v1383 = vpop.permute.xlu0 %1382
  %v1385 = vadd.f32 %v1375, %v1383
  %v1386 = vtanh.pop %v1385
  %1388 = vrot.lane.b32.xlu0 %v1386, 64
  %v1389 = vpop.permute.xlu0 %1388
  %v1391 = vmul.f32 %v1369, %v1389
  %1393 = vrot.lane.b32.xlu0 %v1391, 32
  %v1394 = vpop.permute.xlu0 %1393
  %1396 = vst.msk [vmem:[#allocation4] sm:$0xff] %vm190, %v1394
  %1398 = vrot.lane.b32.xlu0 %v1385, 96
  %v1399 = vpop.permute.xlu0 %1398
  %1401 = vst.msk [vmem:[#allocation5] sm:$0xff] %vm190, %v1399
  %v1402 = vld [vmem:[#allocation2 + $0x8] sm:$0xff]
  %v1403 = vld [vmem:[#allocation4] sm:$0xff]
  %v1405 = vsel %vm190, %v1403, 0
  %1407 = vmatprep.subr.mxu0 0.0
  %1408 = vmatpush1.msra.mxu0 %v1283
  %1409 = vmatprep.subr.mxu0 0.0
  %1410 = vmatpush1.msra.mxu0 %v1284
  %1411 = vmatprep.subr.mxu0 0.0
  %1412 = vmatpush1.msra.mxu0 %v1285
  %1413 = vmatprep.subr.mxu0 0.0
  %1414 = vmatpush1.msra.mxu0 %v1286
  %1415 = vmatprep.subr.mxu0 0.0
  %1416 = vmatpush1.msra.mxu0 0.0
  %1417 = vmatprep.subr.mxu0 0.0
  %1418 = vmatpush1.msra.mxu0 0.0
  %1419 = vmatprep.subr.mxu0 0.0
  %1420 = vmatpush1.msra.mxu0 0.0
  %1421 = vmatprep.subr.mxu0 0.0
  %1422 = vmatpush1.msra.mxu0 0.0
  %1423 = vmatprep.subr.mxu0 0.0
  %1424 = vmatpush1.msra.mxu0 0.0
  %1425 = vmatprep.subr.mxu0 0.0
  %1426 = vmatpush1.msra.mxu0 0.0
  %1427 = vmatprep.subr.mxu0 0.0
  %1428 = vmatpush1.msra.mxu0 0.0
  %1429 = vmatprep.subr.mxu0 0.0
  %1430 = vmatpush1.msra.mxu0 0.0
  %1431 = vmatprep.subr.mxu0 0.0
  %1432 = vmatpush1.msra.mxu0 0.0
  %1433 = vmatprep.subr.mxu0 0.0
  %1434 = vmatpush1.msra.mxu0 0.0
  %1435 = vmatprep.subr.mxu0 0.0
  %1436 = vmatpush1.msra.mxu0 0.0
  %1437 = vmatprep.subr.mxu0 0.0
  %1438 = vmatpush1.msra.mxu0 0.0
  %1439 = vmatprep.subr.mxu0 0.0
  %1440 = vmatpush1.msra.mxu0 0.0
  %1441 = vmatprep.subr.mxu0 0.0
  %1442 = vmatpush1.msra.mxu0 0.0
  %1443 = vmatprep.subr.mxu0 0.0
  %1444 = vmatpush1.msra.mxu0 0.0
  %1445 = vmatprep.subr.mxu0 0.0
  %1446 = vmatpush1.msra.mxu0 0.0
  %1447 = vmatprep.subr.mxu0 0.0
  %1448 = vmatpush1.msra.mxu0 0.0
  %1449 = vmatprep.subr.mxu0 0.0
  %1450 = vmatpush1.msra.mxu0 0.0
  %1451 = vmatprep.subr.mxu0 0.0
  %1452 = vmatpush1.msra.mxu0 0.0
  %1453 = vmatprep.subr.mxu0 0.0
  %1454 = vmatpush1.msra.mxu0 0.0
  %1455 = vmatprep.subr.mxu0 0.0
  %1456 = vmatpush1.msra.mxu0 0.0
  %1457 = vmatprep.subr.mxu0 0.0
  %1458 = vmatpush1.msra.mxu0 0.0
  %1459 = vmatprep.subr.mxu0 0.0
  %1460 = vmatpush1.msra.mxu0 0.0
  %1461 = vmatprep.subr.mxu0 0.0
  %1462 = vmatpush1.msra.mxu0 0.0
  %1463 = vmatprep.subr.mxu0 0.0
  %1464 = vmatpush1.msra.mxu0 0.0
  %1465 = vmatprep.subr.mxu0 0.0
  %1466 = vmatpush1.msra.mxu0 0.0
  %1467 = vmatprep.subr.mxu0 0.0
  %1468 = vmatpush1.msra.mxu0 0.0
  %1469 = vmatprep.subr.mxu0 0.0
  %1470 = vmatpush1.msra.mxu0 0.0
  %1471 = vmatprep.mubr.f32.mxu0 0.0
  %1472 = vmatmul.mubr.f32.gmra.mrb[0].mxu0 %v1405
  %v1473 = vpop.f32.mrb[0].mxu0
  %v1474 = vadd.f32 0.0, %v1473
  %v1475 = vpop.f32.mrb[0].mxu0
  %1476 = vdwg.mxu0
  %v1477 = vadd.f32 %v1402, %v1474
  %v1478 = vld [vmem:[#allocation5] sm:$0xff]
  %v1479 = vxor.u32 %v1477, 2147483648
  %v1480 = vmul.f32 %v1479, 1.442695
  %v1481 = vpow.pop %v1480
  %v1482 = vadd.f32 %v1481, 1.0
  %v1483 = vrcp.pop %v1482
  %v1484 = vmul.f32 1.0, %v1483
  %v1485 = vtanh.pop %v1477
  %1487 = vrot.lane.b32.xlu0 %v1478, 32
  %v1488 = vpop.permute.xlu0 %1487
  %v1490 = vmul.f32 %v1484, %v1488
  %1492 = vrot.lane.b32.xlu0 %v1485, 64
  %v1493 = vpop.permute.xlu0 %1492
  %v1495 = vmul.f32 %v1484, %v1493
  %1497 = vrot.lane.b32.xlu0 %v1495, 32
  %v1498 = vpop.permute.xlu0 %1497
  %v1500 = vadd.f32 %v1490, %v1498
  %v1501 = vtanh.pop %v1500
  %1503 = vrot.lane.b32.xlu0 %v1501, 64
  %v1504 = vpop.permute.xlu0 %1503
  %v1506 = vmul.f32 %v1484, %v1504
  %1508 = vrot.lane.b32.xlu0 %v1506, 32
  %v1509 = vpop.permute.xlu0 %1508
  %1511 = vst.msk [vmem:[#allocation4] sm:$0xff] %vm190, %v1509
  %1513 = vrot.lane.b32.xlu0 %v1500, 96
  %v1514 = vpop.permute.xlu0 %1513
  %1516 = vst.msk [vmem:[#allocation5] sm:$0xff] %vm190, %v1514
  %v1517 = vld [vmem:[#allocation2 + $0x10] sm:$0xff]
  %v1518 = vld [vmem:[#allocation4] sm:$0xff]
  %v1520 = vsel %vm190, %v1518, 0
  %1522 = vmatprep.subr.mxu0 0.0
  %1523 = vmatpush1.msra.mxu0 %v1283
  %1524 = vmatprep.subr.mxu0 0.0
  %1525 = vmatpush1.msra.mxu0 %v1284
  %1526 = vmatprep.subr.mxu0 0.0
  %1527 = vmatpush1.msra.mxu0 %v1285
  %1528 = vmatprep.subr.mxu0 0.0
  %1529 = vmatpush1.msra.mxu0 %v1286
  %1530 = vmatprep.subr.mxu0 0.0
  %1531 = vmatpush1.msra.mxu0 0.0
  %1532 = vmatprep.subr.mxu0 0.0
  %1533 = vmatpush1.msra.mxu0 0.0
  %1534 = vmatprep.subr.mxu0 0.0
  %1535 = vmatpush1.msra.mxu0 0.0
  %1536 = vmatprep.subr.mxu0 0.0
  %1537 = vmatpush1.msra.mxu0 0.0
  %1538 = vmatprep.subr.mxu0 0.0
  %1539 = vmatpush1.msra.mxu0 0.0
  %1540 = vmatprep.subr.mxu0 0.0
  %1541 = vmatpush1.msra.mxu0 0.0
  %1542 = vmatprep.subr.mxu0 0.0
  %1543 = vmatpush1.msra.mxu0 0.0
  %1544 = vmatprep.subr.mxu0 0.0
  %1545 = vmatpush1.msra.mxu0 0.0
  %1546 = vmatprep.subr.mxu0 0.0
  %1547 = vmatpush1.msra.mxu0 0.0
  %1548 = vmatprep.subr.mxu0 0.0
  %1549 = vmatpush1.msra.mxu0 0.0
  %1550 = vmatprep.subr.mxu0 0.0
  %1551 = vmatpush1.msra.mxu0 0.0
  %1552 = vmatprep.subr.mxu0 0.0
  %1553 = vmatpush1.msra.mxu0 0.0
  %1554 = vmatprep.subr.mxu0 0.0
  %1555 = vmatpush1.msra.mxu0 0.0
  %1556 = vmatprep.subr.mxu0 0.0
  %1557 = vmatpush1.msra.mxu0 0.0
  %1558 = vmatprep.subr.mxu0 0.0
  %1559 = vmatpush1.msra.mxu0 0.0
  %1560 = vmatprep.subr.mxu0 0.0
  %1561 = vmatpush1.msra.mxu0 0.0
  %1562 = vmatprep.subr.mxu0 0.0
  %1563 = vmatpush1.msra.mxu0 0.0
  %1564 = vmatprep.subr.mxu0 0.0
  %1565 = vmatpush1.msra.mxu0 0.0
  %1566 = vmatprep.subr.mxu0 0.0
  %1567 = vmatpush1.msra.mxu0 0.0
  %1568 = vmatprep.subr.mxu0 0.0
  %1569 = vmatpush1.msra.mxu0 0.0
  %1570 = vmatprep.subr.mxu0 0.0
  %1571 = vmatpush1.msra.mxu0 0.0
  %1572 = vmatprep.subr.mxu0 0.0
  %1573 = vmatpush1.msra.mxu0 0.0
  %1574 = vmatprep.subr.mxu0 0.0
  %1575 = vmatpush1.msra.mxu0 0.0
  %1576 = vmatprep.subr.mxu0 0.0
  %1577 = vmatpush1.msra.mxu0 0.0
  %1578 = vmatprep.subr.mxu0 0.0
  %1579 = vmatpush1.msra.mxu0 0.0
  %1580 = vmatprep.subr.mxu0 0.0
  %1581 = vmatpush1.msra.mxu0 0.0
  %1582 = vmatprep.subr.mxu0 0.0
  %1583 = vmatpush1.msra.mxu0 0.0
  %1584 = vmatprep.subr.mxu0 0.0
  %1585 = vmatpush1.msra.mxu0 0.0
  %1586 = vmatprep.mubr.f32.mxu0 0.0
  %1587 = vmatmul.mubr.f32.gmra.mrb[0].mxu0 %v1520
  %v1588 = vpop.f32.mrb[0].mxu0
  %v1589 = vadd.f32 0.0, %v1588
  %v1590 = vpop.f32.mrb[0].mxu0
  %1591 = vdwg.mxu0
  %v1592 = vadd.f32 %v1517, %v1589
  %v1593 = vld [vmem:[#allocation5] sm:$0xff]
  %v1594 = vxor.u32 %v1592, 2147483648
  %v1595 = vmul.f32 %v1594, 1.442695
  %v1596 = vpow.pop %v1595
  %v1597 = vadd.f32 %v1596, 1.0
  %v1598 = vrcp.pop %v1597
  %v1599 = vmul.f32 1.0, %v1598
  %v1600 = vtanh.pop %v1592
  %1602 = vrot.lane.b32.xlu0 %v1593, 32
  %v1603 = vpop.permute.xlu0 %1602
  %v1605 = vmul.f32 %v1599, %v1603
  %1607 = vrot.lane.b32.xlu0 %v1600, 64
  %v1608 = vpop.permute.xlu0 %1607
  %v1610 = vmul.f32 %v1599, %v1608
  %1612 = vrot.lane.b32.xlu0 %v1610, 32
  %v1613 = vpop.permute.xlu0 %1612
  %v1615 = vadd.f32 %v1605, %v1613
  %v1616 = vtanh.pop %v1615
  %1618 = vrot.lane.b32.xlu0 %v1616, 64
  %v1619 = vpop.permute.xlu0 %1618
  %v1621 = vmul.f32 %v1599, %v1619
  %1623 = vrot.lane.b32.xlu0 %v1621, 32
  %v1624 = vpop.permute.xlu0 %1623
  %1626 = vst.msk [vmem:[#allocation4] sm:$0xff] %vm190, %v1624
  %1628 = vrot.lane.b32.xlu0 %v1615, 96
  %v1629 = vpop.permute.xlu0 %1628
  %1631 = vst.msk [vmem:[#allocation5] sm:$0xff] %vm190, %v1629
  %v1632 = vld [vmem:[#allocation2 + $0x18] sm:$0xff]
  %v1633 = vld [vmem:[#allocation4] sm:$0xff]
  %v1635 = vsel %vm190, %v1633, 0
  %1637 = vmatprep.subr.mxu0 0.0
  %1638 = vmatpush1.msra.mxu0 %v1283
  %1639 = vmatprep.subr.mxu0 0.0
  %1640 = vmatpush1.msra.mxu0 %v1284
  %1641 = vmatprep.subr.mxu0 0.0
  %1642 = vmatpush1.msra.mxu0 %v1285
  %1643 = vmatprep.subr.mxu0 0.0
  %1644 = vmatpush1.msra.mxu0 %v1286
  %1645 = vmatprep.subr.mxu0 0.0
  %1646 = vmatpush1.msra.mxu0 0.0
  %1647 = vmatprep.subr.mxu0 0.0
  %1648 = vmatpush1.msra.mxu0 0.0
  %1649 = vmatprep.subr.mxu0 0.0
  %1650 = vmatpush1.msra.mxu0 0.0
  %1651 = vmatprep.subr.mxu0 0.0
  %1652 = vmatpush1.msra.mxu0 0.0
  %1653 = vmatprep.subr.mxu0 0.0
  %1654 = vmatpush1.msra.mxu0 0.0
  %1655 = vmatprep.subr.mxu0 0.0
  %1656 = vmatpush1.msra.mxu0 0.0
  %1657 = vmatprep.subr.mxu0 0.0
  %1658 = vmatpush1.msra.mxu0 0.0
  %1659 = vmatprep.subr.mxu0 0.0
  %1660 = vmatpush1.msra.mxu0 0.0
  %1661 = vmatprep.subr.mxu0 0.0
  %1662 = vmatpush1.msra.mxu0 0.0
  %1663 = vmatprep.subr.mxu0 0.0
  %1664 = vmatpush1.msra.mxu0 0.0
  %1665 = vmatprep.subr.mxu0 0.0
  %1666 = vmatpush1.msra.mxu0 0.0
  %1667 = vmatprep.subr.mxu0 0.0
  %1668 = vmatpush1.msra.mxu0 0.0
  %1669 = vmatprep.subr.mxu0 0.0
  %1670 = vmatpush1.msra.mxu0 0.0
  %1671 = vmatprep.subr.mxu0 0.0
  %1672 = vmatpush1.msra.mxu0 0.0
  %1673 = vmatprep.subr.mxu0 0.0
  %1674 = vmatpush1.msra.mxu0 0.0
  %1675 = vmatprep.subr.mxu0 0.0
  %1676 = vmatpush1.msra.mxu0 0.0
  %1677 = vmatprep.subr.mxu0 0.0
  %1678 = vmatpush1.msra.mxu0 0.0
  %1679 = vmatprep.subr.mxu0 0.0
  %1680 = vmatpush1.msra.mxu0 0.0
  %1681 = vmatprep.subr.mxu0 0.0
  %1682 = vmatpush1.msra.mxu0 0.0
  %1683 = vmatprep.subr.mxu0 0.0
  %1684 = vmatpush1.msra.mxu0 0.0
  %1685 = vmatprep.subr.mxu0 0.0
  %1686 = vmatpush1.msra.mxu0 0.0
  %1687 = vmatprep.subr.mxu0 0.0
  %1688 = vmatpush1.msra.mxu0 0.0
  %1689 = vmatprep.subr.mxu0 0.0
  %1690 = vmatpush1.msra.mxu0 0.0
  %1691 = vmatprep.subr.mxu0 0.0
  %1692 = vmatpush1.msra.mxu0 0.0
  %1693 = vmatprep.subr.mxu0 0.0
  %1694 = vmatpush1.msra.mxu0 0.0
  %1695 = vmatprep.subr.mxu0 0.0
  %1696 = vmatpush1.msra.mxu0 0.0
  %1697 = vmatprep.subr.mxu0 0.0
  %1698 = vmatpush1.msra.mxu0 0.0
  %1699 = vmatprep.subr.mxu0 0.0
  %1700 = vmatpush1.msra.mxu0 0.0
  %1701 = vmatprep.mubr.f32.mxu0 0.0
  %1702 = vmatmul.mubr.f32.gmra.mrb[0].mxu0 %v1635
  %v1703 = vpop.f32.mrb[0].mxu0
  %v1704 = vadd.f32 0.0, %v1703
  %v1705 = vpop.f32.mrb[0].mxu0
  %1706 = vdwg.mxu0
  %v1707 = vadd.f32 %v1632, %v1704
  %v1708 = vld [vmem:[#allocation5] sm:$0xff]
  %v1709 = vxor.u32 %v1707, 2147483648
  %v1710 = vmul.f32 %v1709, 1.442695
  %v1711 = vpow.pop %v1710
  %v1712 = vadd.f32 %v1711, 1.0
  %v1713 = vrcp.pop %v1712
  %v1714 = vmul.f32 1.0, %v1713
  %v1715 = vtanh.pop %v1707
  %1717 = vrot.lane.b32.xlu0 %v1708, 32
  %v1718 = vpop.permute.xlu0 %1717
  %v1720 = vmul.f32 %v1714, %v1718
  %1722 = vrot.lane.b32.xlu0 %v1715, 64
  %v1723 = vpop.permute.xlu0 %1722
  %v1725 = vmul.f32 %v1714, %v1723
  %1727 = vrot.lane.b32.xlu0 %v1725, 32
  %v1728 = vpop.permute.xlu0 %1727
  %v1730 = vadd.f32 %v1720, %v1728
  %v1731 = vtanh.pop %v1730
  %1733 = vrot.lane.b32.xlu0 %v1731, 64
  %v1734 = vpop.permute.xlu0 %1733
  %v1736 = vmul.f32 %v1714, %v1734
  %1738 = vrot.lane.b32.xlu0 %v1736, 32
  %v1739 = vpop.permute.xlu0 %1738
  %1741 = vst.msk [vmem:[#allocation4] sm:$0xff] %vm190, %v1739
  %1743 = vrot.lane.b32.xlu0 %v1730, 96
  %v1744 = vpop.permute.xlu0 %1743
  %1746 = vst.msk [vmem:[#allocation5] sm:$0xff] %vm190, %v1744
  %v1747 = vld [vmem:[#allocation2 + $0x20] sm:$0xff]
  %v1748 = vld [vmem:[#allocation4] sm:$0xff]
  %v1750 = vsel %vm190, %v1748, 0
  %1752 = vmatprep.subr.mxu0 0.0
  %1753 = vmatpush1.msra.mxu0 %v1283
  %1754 = vmatprep.subr.mxu0 0.0
  %1755 = vmatpush1.msra.mxu0 %v1284
  %1756 = vmatprep.subr.mxu0 0.0
  %1757 = vmatpush1.msra.mxu0 %v1285
  %1758 = vmatprep.subr.mxu0 0.0
  %1759 = vmatpush1.msra.mxu0 %v1286
  %1760 = vmatprep.subr.mxu0 0.0
  %1761 = vmatpush1.msra.mxu0 0.0
  %1762 = vmatprep.subr.mxu0 0.0
  %1763 = vmatpush1.msra.mxu0 0.0
  %1764 = vmatprep.subr.mxu0 0.0
  %1765 = vmatpush1.msra.mxu0 0.0
  %1766 = vmatprep.subr.mxu0 0.0
  %1767 = vmatpush1.msra.mxu0 0.0
  %1768 = vmatprep.subr.mxu0 0.0
  %1769 = vmatpush1.msra.mxu0 0.0
  %1770 = vmatprep.subr.mxu0 0.0
  %1771 = vmatpush1.msra.mxu0 0.0
  %1772 = vmatprep.subr.mxu0 0.0
  %1773 = vmatpush1.msra.mxu0 0.0
  %1774 = vmatprep.subr.mxu0 0.0
  %1775 = vmatpush1.msra.mxu0 0.0
  %1776 = vmatprep.subr.mxu0 0.0
  %1777 = vmatpush1.msra.mxu0 0.0
  %1778 = vmatprep.subr.mxu0 0.0
  %1779 = vmatpush1.msra.mxu0 0.0
  %1780 = vmatprep.subr.mxu0 0.0
  %1781 = vmatpush1.msra.mxu0 0.0
  %1782 = vmatprep.subr.mxu0 0.0
  %1783 = vmatpush1.msra.mxu0 0.0
  %1784 = vmatprep.subr.mxu0 0.0
  %1785 = vmatpush1.msra.mxu0 0.0
  %1786 = vmatprep.subr.mxu0 0.0
  %1787 = vmatpush1.msra.mxu0 0.0
  %1788 = vmatprep.subr.mxu0 0.0
  %1789 = vmatpush1.msra.mxu0 0.0
  %1790 = vmatprep.subr.mxu0 0.0
  %1791 = vmatpush1.msra.mxu0 0.0
  %1792 = vmatprep.subr.mxu0 0.0
  %1793 = vmatpush1.msra.mxu0 0.0
  %1794 = vmatprep.subr.mxu0 0.0
  %1795 = vmatpush1.msra.mxu0 0.0
  %1796 = vmatprep.subr.mxu0 0.0
  %1797 = vmatpush1.msra.mxu0 0.0
  %1798 = vmatprep.subr.mxu0 0.0
  %1799 = vmatpush1.msra.mxu0 0.0
  %1800 = vmatprep.subr.mxu0 0.0
  %1801 = vmatpush1.msra.mxu0 0.0
  %1802 = vmatprep.subr.mxu0 0.0
  %1803 = vmatpush1.msra.mxu0 0.0
  %1804 = vmatprep.subr.mxu0 0.0
  %1805 = vmatpush1.msra.mxu0 0.0
  %1806 = vmatprep.subr.mxu0 0.0
  %1807 = vmatpush1.msra.mxu0 0.0
  %1808 = vmatprep.subr.mxu0 0.0
  %1809 = vmatpush1.msra.mxu0 0.0
  %1810 = vmatprep.subr.mxu0 0.0
  %1811 = vmatpush1.msra.mxu0 0.0
  %1812 = vmatprep.subr.mxu0 0.0
  %1813 = vmatpush1.msra.mxu0 0.0
  %1814 = vmatprep.subr.mxu0 0.0
  %1815 = vmatpush1.msra.mxu0 0.0
  %1816 = vmatprep.mubr.f32.mxu0 0.0
  %1817 = vmatmul.mubr.f32.gmra.mrb[0].mxu0 %v1750
  %v1818 = vpop.f32.mrb[0].mxu0
  %v1819 = vadd.f32 0.0, %v1818
  %v1820 = vpop.f32.mrb[0].mxu0
  %1821 = vdwg.mxu0
  %v1822 = vadd.f32 %v1747, %v1819
  %v1823 = vld [vmem:[#allocation5] sm:$0xff]
  %v1824 = vxor.u32 %v1822, 2147483648
  %v1825 = vmul.f32 %v1824, 1.442695
  %v1826 = vpow.pop %v1825
  %v1827 = vadd.f32 %v1826, 1.0
  %v1828 = vrcp.pop %v1827
  %v1829 = vmul.f32 1.0, %v1828
  %v1830 = vtanh.pop %v1822
  %1832 = vrot.lane.b32.xlu0 %v1823, 32
  %v1833 = vpop.permute.xlu0 %1832
  %v1835 = vmul.f32 %v1829, %v1833
  %1837 = vrot.lane.b32.xlu0 %v1830, 64
  %v1838 = vpop.permute.xlu0 %1837
  %v1840 = vmul.f32 %v1829, %v1838
  %1842 = vrot.lane.b32.xlu0 %v1840, 32
  %v1843 = vpop.permute.xlu0 %1842
  %v1845 = vadd.f32 %v1835, %v1843
  %v1846 = vtanh.pop %v1845
  %1848 = vrot.lane.b32.xlu0 %v1846, 64
  %v1849 = vpop.permute.xlu0 %1848
  %v1851 = vmul.f32 %v1829, %v1849
  %1853 = vrot.lane.b32.xlu0 %v1851, 32
  %v1854 = vpop.permute.xlu0 %1853
  %1856 = vst.msk [vmem:[#allocation4] sm:$0xff] %vm190, %v1854
  %1858 = vrot.lane.b32.xlu0 %v1845, 96
  %v1859 = vpop.permute.xlu0 %1858
  %1861 = vst.msk [vmem:[#allocation5] sm:$0xff] %vm190, %v1859
  %v1862 = vld [vmem:[#allocation2 + $0x28] sm:$0xff]
  %v1863 = vld [vmem:[#allocation4] sm:$0xff]
  %v1865 = vsel %vm190, %v1863, 0
  %1867 = vmatprep.subr.mxu0 0.0
  %1868 = vmatpush1.msra.mxu0 %v1283
  %1869 = vmatprep.subr.mxu0 0.0
  %1870 = vmatpush1.msra.mxu0 %v1284
  %1871 = vmatprep.subr.mxu0 0.0
  %1872 = vmatpush1.msra.mxu0 %v1285
  %1873 = vmatprep.subr.mxu0 0.0
  %1874 = vmatpush1.msra.mxu0 %v1286
  %1875 = vmatprep.subr.mxu0 0.0
  %1876 = vmatpush1.msra.mxu0 0.0
  %1877 = vmatprep.subr.mxu0 0.0
  %1878 = vmatpush1.msra.mxu0 0.0
  %1879 = vmatprep.subr.mxu0 0.0
  %1880 = vmatpush1.msra.mxu0 0.0
  %1881 = vmatprep.subr.mxu0 0.0
  %1882 = vmatpush1.msra.mxu0 0.0
  %1883 = vmatprep.subr.mxu0 0.0
  %1884 = vmatpush1.msra.mxu0 0.0
  %1885 = vmatprep.subr.mxu0 0.0
  %1886 = vmatpush1.msra.mxu0 0.0
  %1887 = vmatprep.subr.mxu0 0.0
  %1888 = vmatpush1.msra.mxu0 0.0
  %1889 = vmatprep.subr.mxu0 0.0
  %1890 = vmatpush1.msra.mxu0 0.0
  %1891 = vmatprep.subr.mxu0 0.0
  %1892 = vmatpush1.msra.mxu0 0.0
  %1893 = vmatprep.subr.mxu0 0.0
  %1894 = vmatpush1.msra.mxu0 0.0
  %1895 = vmatprep.subr.mxu0 0.0
  %1896 = vmatpush1.msra.mxu0 0.0
  %1897 = vmatprep.subr.mxu0 0.0
  %1898 = vmatpush1.msra.mxu0 0.0
  %1899 = vmatprep.subr.mxu0 0.0
  %1900 = vmatpush1.msra.mxu0 0.0
  %1901 = vmatprep.subr.mxu0 0.0
  %1902 = vmatpush1.msra.mxu0 0.0
  %1903 = vmatprep.subr.mxu0 0.0
  %1904 = vmatpush1.msra.mxu0 0.0
  %1905 = vmatprep.subr.mxu0 0.0
  %1906 = vmatpush1.msra.mxu0 0.0
  %1907 = vmatprep.subr.mxu0 0.0
  %1908 = vmatpush1.msra.mxu0 0.0
  %1909 = vmatprep.subr.mxu0 0.0
  %1910 = vmatpush1.msra.mxu0 0.0
  %1911 = vmatprep.subr.mxu0 0.0
  %1912 = vmatpush1.msra.mxu0 0.0
  %1913 = vmatprep.subr.mxu0 0.0
  %1914 = vmatpush1.msra.mxu0 0.0
  %1915 = vmatprep.subr.mxu0 0.0
  %1916 = vmatpush1.msra.mxu0 0.0
  %1917 = vmatprep.subr.mxu0 0.0
  %1918 = vmatpush1.msra.mxu0 0.0
  %1919 = vmatprep.subr.mxu0 0.0
  %1920 = vmatpush1.msra.mxu0 0.0
  %1921 = vmatprep.subr.mxu0 0.0
  %1922 = vmatpush1.msra.mxu0 0.0
  %1923 = vmatprep.subr.mxu0 0.0
  %1924 = vmatpush1.msra.mxu0 0.0
  %1925 = vmatprep.subr.mxu0 0.0
  %1926 = vmatpush1.msra.mxu0 0.0
  %1927 = vmatprep.subr.mxu0 0.0
  %1928 = vmatpush1.msra.mxu0 0.0
  %1929 = vmatprep.subr.mxu0 0.0
  %1930 = vmatpush1.msra.mxu0 0.0
  %1931 = vmatprep.mubr.f32.mxu0 0.0
  %1932 = vmatmul.mubr.f32.gmra.mrb[0].mxu0 %v1865
  %v1933 = vpop.f32.mrb[0].mxu0
  %v1934 = vadd.f32 0.0, %v1933
  %v1935 = vpop.f32.mrb[0].mxu0
  %1936 = vdwg.mxu0
  %v1937 = vadd.f32 %v1862, %v1934
  %v1938 = vld [vmem:[#allocation5] sm:$0xff]
  %v1939 = vxor.u32 %v1937, 2147483648
  %v1940 = vmul.f32 %v1939, 1.442695
  %v1941 = vpow.pop %v1940
  %v1942 = vadd.f32 %v1941, 1.0
  %v1943 = vrcp.pop %v1942
  %v1944 = vmul.f32 1.0, %v1943
  %v1945 = vtanh.pop %v1937
  %1947 = vrot.lane.b32.xlu0 %v1938, 32
  %v1948 = vpop.permute.xlu0 %1947
  %v1950 = vmul.f32 %v1944, %v1948
  %1952 = vrot.lane.b32.xlu0 %v1945, 64
  %v1953 = vpop.permute.xlu0 %1952
  %v1955 = vmul.f32 %v1944, %v1953
  %1957 = vrot.lane.b32.xlu0 %v1955, 32
  %v1958 = vpop.permute.xlu0 %1957
  %v1960 = vadd.f32 %v1950, %v1958
  %v1961 = vtanh.pop %v1960
  %1963 = vrot.lane.b32.xlu0 %v1961, 64
  %v1964 = vpop.permute.xlu0 %1963
  %v1966 = vmul.f32 %v1944, %v1964
  %1968 = vrot.lane.b32.xlu0 %v1966, 32
  %v1969 = vpop.permute.xlu0 %1968
  %1971 = vst.msk [vmem:[#allocation4] sm:$0xff] %vm190, %v1969
  %1973 = vrot.lane.b32.xlu0 %v1960, 96
  %v1974 = vpop.permute.xlu0 %1973
  %1976 = vst.msk [vmem:[#allocation5] sm:$0xff] %vm190, %v1974
  %v1977 = vld [vmem:[#allocation2 + $0x30] sm:$0xff]
  %v1978 = vld [vmem:[#allocation4] sm:$0xff]
  %v1980 = vsel %vm190, %v1978, 0
  %1982 = vmatprep.subr.mxu0 0.0
  %1983 = vmatpush1.msra.mxu0 %v1283
  %1984 = vmatprep.subr.mxu0 0.0
  %1985 = vmatpush1.msra.mxu0 %v1284
  %1986 = vmatprep.subr.mxu0 0.0
  %1987 = vmatpush1.msra.mxu0 %v1285
  %1988 = vmatprep.subr.mxu0 0.0
  %1989 = vmatpush1.msra.mxu0 %v1286
  %1990 = vmatprep.subr.mxu0 0.0
  %1991 = vmatpush1.msra.mxu0 0.0
  %1992 = vmatprep.subr.mxu0 0.0
  %1993 = vmatpush1.msra.mxu0 0.0
  %1994 = vmatprep.subr.mxu0 0.0
  %1995 = vmatpush1.msra.mxu0 0.0
  %1996 = vmatprep.subr.mxu0 0.0
  %1997 = vmatpush1.msra.mxu0 0.0
  %1998 = vmatprep.subr.mxu0 0.0
  %1999 = vmatpush1.msra.mxu0 0.0
  %2000 = vmatprep.subr.mxu0 0.0
  %2001 = vmatpush1.msra.mxu0 0.0
  %2002 = vmatprep.subr.mxu0 0.0
  %2003 = vmatpush1.msra.mxu0 0.0
  %2004 = vmatprep.subr.mxu0 0.0
  %2005 = vmatpush1.msra.mxu0 0.0
  %2006 = vmatprep.subr.mxu0 0.0
  %2007 = vmatpush1.msra.mxu0 0.0
  %2008 = vmatprep.subr.mxu0 0.0
  %2009 = vmatpush1.msra.mxu0 0.0
  %2010 = vmatprep.subr.mxu0 0.0
  %2011 = vmatpush1.msra.mxu0 0.0
  %2012 = vmatprep.subr.mxu0 0.0
  %2013 = vmatpush1.msra.mxu0 0.0
  %2014 = vmatprep.subr.mxu0 0.0
  %2015 = vmatpush1.msra.mxu0 0.0
  %2016 = vmatprep.subr.mxu0 0.0
  %2017 = vmatpush1.msra.mxu0 0.0
  %2018 = vmatprep.subr.mxu0 0.0
  %2019 = vmatpush1.msra.mxu0 0.0
  %2020 = vmatprep.subr.mxu0 0.0
  %2021 = vmatpush1.msra.mxu0 0.0
  %2022 = vmatprep.subr.mxu0 0.0
  %2023 = vmatpush1.msra.mxu0 0.0
  %2024 = vmatprep.subr.mxu0 0.0
  %2025 = vmatpush1.msra.mxu0 0.0
  %2026 = vmatprep.subr.mxu0 0.0
  %2027 = vmatpush1.msra.mxu0 0.0
  %2028 = vmatprep.subr.mxu0 0.0
  %2029 = vmatpush1.msra.mxu0 0.0
  %2030 = vmatprep.subr.mxu0 0.0
  %2031 = vmatpush1.msra.mxu0 0.0
  %2032 = vmatprep.subr.mxu0 0.0
  %2033 = vmatpush1.msra.mxu0 0.0
  %2034 = vmatprep.subr.mxu0 0.0
  %2035 = vmatpush1.msra.mxu0 0.0
  %2036 = vmatprep.subr.mxu0 0.0
  %2037 = vmatpush1.msra.mxu0 0.0
  %2038 = vmatprep.subr.mxu0 0.0
  %2039 = vmatpush1.msra.mxu0 0.0
  %2040 = vmatprep.subr.mxu0 0.0
  %2041 = vmatpush1.msra.mxu0 0.0
  %2042 = vmatprep.subr.mxu0 0.0
  %2043 = vmatpush1.msra.mxu0 0.0
  %2044 = vmatprep.subr.mxu0 0.0
  %2045 = vmatpush1.msra.mxu0 0.0
  %2046 = vmatprep.mubr.f32.mxu0 0.0
  %2047 = vmatmul.mubr.f32.gmra.mrb[0].mxu0 %v1980
  %v2048 = vpop.f32.mrb[0].mxu0
  %v2049 = vadd.f32 0.0, %v2048
  %v2050 = vpop.f32.mrb[0].mxu0
  %2051 = vdwg.mxu0
  %v2052 = vadd.f32 %v1977, %v2049
  %v2053 = vld [vmem:[#allocation5] sm:$0xff]
  %v2054 = vxor.u32 %v2052, 2147483648
  %v2055 = vmul.f32 %v2054, 1.442695
  %v2056 = vpow.pop %v2055
  %v2057 = vadd.f32 %v2056, 1.0
  %v2058 = vrcp.pop %v2057
  %v2059 = vmul.f32 1.0, %v2058
  %v2060 = vtanh.pop %v2052
  %2062 = vrot.lane.b32.xlu0 %v2053, 32
  %v2063 = vpop.permute.xlu0 %2062
  %v2065 = vmul.f32 %v2059, %v2063
  %2067 = vrot.lane.b32.xlu0 %v2060, 64
  %v2068 = vpop.permute.xlu0 %2067
  %v2070 = vmul.f32 %v2059, %v2068
  %2072 = vrot.lane.b32.xlu0 %v2070, 32
  %v2073 = vpop.permute.xlu0 %2072
  %v2075 = vadd.f32 %v2065, %v2073
  %v2076 = vtanh.pop %v2075
  %2078 = vrot.lane.b32.xlu0 %v2076, 64
  %v2079 = vpop.permute.xlu0 %2078
  %v2081 = vmul.f32 %v2059, %v2079
  %2083 = vrot.lane.b32.xlu0 %v2081, 32
  %v2084 = vpop.permute.xlu0 %2083
  %2086 = vst.msk [vmem:[#allocation4] sm:$0xff] %vm190, %v2084
  %2088 = vrot.lane.b32.xlu0 %v2075, 96
  %v2089 = vpop.permute.xlu0 %2088
  %2091 = vst.msk [vmem:[#allocation5] sm:$0xff] %vm190, %v2089
  %v2092 = vld [vmem:[#allocation2 + $0x38] sm:$0xff]
  %v2093 = vld [vmem:[#allocation4] sm:$0xff]
  %v2095 = vsel %vm190, %v2093, 0
  %2097 = vmatprep.subr.mxu0 0.0
  %2098 = vmatpush1.msra.mxu0 %v1283
  %2099 = vmatprep.subr.mxu0 0.0
  %2100 = vmatpush1.msra.mxu0 %v1284
  %2101 = vmatprep.subr.mxu0 0.0
  %2102 = vmatpush1.msra.mxu0 %v1285
  %2103 = vmatprep.subr.mxu0 0.0
  %2104 = vmatpush1.msra.mxu0 %v1286
  %2105 = vmatprep.subr.mxu0 0.0
  %2106 = vmatpush1.msra.mxu0 0.0
  %2107 = vmatprep.subr.mxu0 0.0
  %2108 = vmatpush1.msra.mxu0 0.0
  %2109 = vmatprep.subr.mxu0 0.0
  %2110 = vmatpush1.msra.mxu0 0.0
  %2111 = vmatprep.subr.mxu0 0.0
  %2112 = vmatpush1.msra.mxu0 0.0
  %2113 = vmatprep.subr.mxu0 0.0
  %2114 = vmatpush1.msra.mxu0 0.0
  %2115 = vmatprep.subr.mxu0 0.0
  %2116 = vmatpush1.msra.mxu0 0.0
  %2117 = vmatprep.subr.mxu0 0.0
  %2118 = vmatpush1.msra.mxu0 0.0
  %2119 = vmatprep.subr.mxu0 0.0
  %2120 = vmatpush1.msra.mxu0 0.0
  %2121 = vmatprep.subr.mxu0 0.0
  %2122 = vmatpush1.msra.mxu0 0.0
  %2123 = vmatprep.subr.mxu0 0.0
  %2124 = vmatpush1.msra.mxu0 0.0
  %2125 = vmatprep.subr.mxu0 0.0
  %2126 = vmatpush1.msra.mxu0 0.0
  %2127 = vmatprep.subr.mxu0 0.0
  %2128 = vmatpush1.msra.mxu0 0.0
  %2129 = vmatprep.subr.mxu0 0.0
  %2130 = vmatpush1.msra.mxu0 0.0
  %2131 = vmatprep.subr.mxu0 0.0
  %2132 = vmatpush1.msra.mxu0 0.0
  %2133 = vmatprep.subr.mxu0 0.0
  %2134 = vmatpush1.msra.mxu0 0.0
  %2135 = vmatprep.subr.mxu0 0.0
  %2136 = vmatpush1.msra.mxu0 0.0
  %2137 = vmatprep.subr.mxu0 0.0
  %2138 = vmatpush1.msra.mxu0 0.0
  %2139 = vmatprep.subr.mxu0 0.0
  %2140 = vmatpush1.msra.mxu0 0.0
  %2141 = vmatprep.subr.mxu0 0.0
  %2142 = vmatpush1.msra.mxu0 0.0
  %2143 = vmatprep.subr.mxu0 0.0
  %2144 = vmatpush1.msra.mxu0 0.0
  %2145 = vmatprep.subr.mxu0 0.0
  %2146 = vmatpush1.msra.mxu0 0.0
  %2147 = vmatprep.subr.mxu0 0.0
  %2148 = vmatpush1.msra.mxu0 0.0
  %2149 = vmatprep.subr.mxu0 0.0
  %2150 = vmatpush1.msra.mxu0 0.0
  %2151 = vmatprep.subr.mxu0 0.0
  %2152 = vmatpush1.msra.mxu0 0.0
  %2153 = vmatprep.subr.mxu0 0.0
  %2154 = vmatpush1.msra.mxu0 0.0
  %2155 = vmatprep.subr.mxu0 0.0
  %2156 = vmatpush1.msra.mxu0 0.0
  %2157 = vmatprep.subr.mxu0 0.0
  %2158 = vmatpush1.msra.mxu0 0.0
  %2159 = vmatprep.subr.mxu0 0.0
  %2160 = vmatpush1.msra.mxu0 0.0
  %2161 = vmatprep.mubr.f32.mxu0 0.0
  %2162 = vmatmul.mubr.f32.gmra.mrb[0].mxu0 %v2095
  %v2163 = vpop.f32.mrb[0].mxu0
  %v2164 = vadd.f32 0.0, %v2163
  %v2165 = vpop.f32.mrb[0].mxu0
  %2166 = vdwg.mxu0
  %v2167 = vadd.f32 %v2092, %v2164
  %v2168 = vld [vmem:[#allocation5] sm:$0xff]
  %v2169 = vxor.u32 %v2167, 2147483648
  %v2170 = vmul.f32 %v2169, 1.442695
  %v2171 = vpow.pop %v2170
  %v2172 = vadd.f32 %v2171, 1.0
  %v2173 = vrcp.pop %v2172
  %v2174 = vmul.f32 1.0, %v2173
  %v2175 = vtanh.pop %v2167
  %2177 = vrot.lane.b32.xlu0 %v2168, 32
  %v2178 = vpop.permute.xlu0 %2177
  %v2180 = vmul.f32 %v2174, %v2178
  %2182 = vrot.lane.b32.xlu0 %v2175, 64
  %v2183 = vpop.permute.xlu0 %2182
  %v2185 = vmul.f32 %v2174, %v2183
  %2187 = vrot.lane.b32.xlu0 %v2185, 32
  %v2188 = vpop.permute.xlu0 %2187
  %v2190 = vadd.f32 %v2180, %v2188
  %v2191 = vtanh.pop %v2190
  %2193 = vrot.lane.b32.xlu0 %v2191, 64
  %v2194 = vpop.permute.xlu0 %2193
  %v2196 = vmul.f32 %v2174, %v2194
  %2198 = vrot.lane.b32.xlu0 %v2196, 32
  %v2199 = vpop.permute.xlu0 %2198
  %2201 = vst.msk [vmem:[#allocation4] sm:$0xff] %vm190, %v2199
  %2203 = vrot.lane.b32.xlu0 %v2190, 96
  %v2204 = vpop.permute.xlu0 %2203
  %2206 = vst.msk [vmem:[#allocation5] sm:$0xff] %vm190, %v2204
  %v2207 = vld [vmem:[#allocation4] sm:$0xff]
  %v2208 = vld [vmem:[%s7] sm:$0xff]
  %v2209 = vld [vmem:[%s7 + $0x8] sm:$0xff]
  %v2210 = vld [vmem:[%s7 + $0x10] sm:$0xff]
  %v2211 = vld [vmem:[%s7 + $0x18] sm:$0xff]
  %v2212 = vld [vmem:[%s8] sm:$0x1]
  %v2214 = vlaneseq
  %v2215 = vshrl.u32 %v2214, 7
  %v2216 = vsub.s32 0, %v2215
  %v2217 = vrot.slane %v2212, %v2216
  %v2220 = vsel %vm190, %v2207, 0
  %2222 = vmatprep.subr.mxu0 0.0
  %2223 = vmatpush1.msra.mxu0 %v2208
  %2224 = vmatprep.subr.mxu0 0.0
  %2225 = vmatpush1.msra.mxu0 %v2209
  %2226 = vmatprep.subr.mxu0 0.0
  %2227 = vmatpush1.msra.mxu0 %v2210
  %2228 = vmatprep.subr.mxu0 0.0
  %2229 = vmatpush1.msra.mxu0 %v2211
  %2230 = vmatprep.subr.mxu0 0.0
  %2231 = vmatpush1.msra.mxu0 0.0
  %2232 = vmatprep.subr.mxu0 0.0
  %2233 = vmatpush1.msra.mxu0 0.0
  %2234 = vmatprep.subr.mxu0 0.0
  %2235 = vmatpush1.msra.mxu0 0.0
  %2236 = vmatprep.subr.mxu0 0.0
  %2237 = vmatpush1.msra.mxu0 0.0
  %2238 = vmatprep.subr.mxu0 0.0
  %2239 = vmatpush1.msra.mxu0 0.0
  %2240 = vmatprep.subr.mxu0 0.0
  %2241 = vmatpush1.msra.mxu0 0.0
  %2242 = vmatprep.subr.mxu0 0.0
  %2243 = vmatpush1.msra.mxu0 0.0
  %2244 = vmatprep.subr.mxu0 0.0
  %2245 = vmatpush1.msra.mxu0 0.0
  %2246 = vmatprep.subr.mxu0 0.0
  %2247 = vmatpush1.msra.mxu0 0.0
  %2248 = vmatprep.subr.mxu0 0.0
  %2249 = vmatpush1.msra.mxu0 0.0
  %2250 = vmatprep.subr.mxu0 0.0
  %2251 = vmatpush1.msra.mxu0 0.0
  %2252 = vmatprep.subr.mxu0 0.0
  %2253 = vmatpush1.msra.mxu0 0.0
  %2254 = vmatprep.subr.mxu0 0.0
  %2255 = vmatpush1.msra.mxu0 0.0
  %2256 = vmatprep.subr.mxu0 0.0
  %2257 = vmatpush1.msra.mxu0 0.0
  %2258 = vmatprep.subr.mxu0 0.0
  %2259 = vmatpush1.msra.mxu0 0.0
  %2260 = vmatprep.subr.mxu0 0.0
  %2261 = vmatpush1.msra.mxu0 0.0
  %2262 = vmatprep.subr.mxu0 0.0
  %2263 = vmatpush1.msra.mxu0 0.0
  %2264 = vmatprep.subr.mxu0 0.0
  %2265 = vmatpush1.msra.mxu0 0.0
  %2266 = vmatprep.subr.mxu0 0.0
  %2267 = vmatpush1.msra.mxu0 0.0
  %2268 = vmatprep.subr.mxu0 0.0
  %2269 = vmatpush1.msra.mxu0 0.0
  %2270 = vmatprep.subr.mxu0 0.0
  %2271 = vmatpush1.msra.mxu0 0.0
  %2272 = vmatprep.subr.mxu0 0.0
  %2273 = vmatpush1.msra.mxu0 0.0
  %2274 = vmatprep.subr.mxu0 0.0
  %2275 = vmatpush1.msra.mxu0 0.0
  %2276 = vmatprep.subr.mxu0 0.0
  %2277 = vmatpush1.msra.mxu0 0.0
  %2278 = vmatprep.subr.mxu0 0.0
  %2279 = vmatpush1.msra.mxu0 0.0
  %2280 = vmatprep.subr.mxu0 0.0
  %2281 = vmatpush1.msra.mxu0 0.0
  %2282 = vmatprep.subr.mxu0 0.0
  %2283 = vmatpush1.msra.mxu0 0.0
  %2284 = vmatprep.subr.mxu0 0.0
  %2285 = vmatpush1.msra.mxu0 0.0
  %2286 = vmatprep.mubr.f32.mxu0 0.0
  %2287 = vmatmul.mubr.f32.gmra.mrb[0].mxu0 %v2220
  %v2288 = vpop.f32.mrb[0].mxu0
  %v2289 = vadd.f32 %v2217, %v2288
  %v2290 = vpop.f32.mrb[0].mxu0
  %2291 = vdwg.mxu0
  %2292 = vst.msk [vmem:[%s9] sm:$0xff] %vm48, %v2289
  // Predicated region
  $region38: #{tpu_custom_call.1} parent=0 // pred_check
    _
  $region39: #{tpu_custom_call.1} parent=0 // pred_check_branch
    %2294 = sbr.rel (0) target = $region41
  $region40: #{tpu_custom_call.1} parent=0 // pred_region
    _
  $region41: #{tpu_custom_call.1} parent=0 // pred_fallthru
    _
  // Predicated region
  $region42: #{tpu_custom_call.1} parent=0 // pred_check
    _
  $region43: #{tpu_custom_call.1} parent=0 // pred_check_branch
    %2296 = sbr.rel (0) target = $region45
  $region44: #{tpu_custom_call.1} parent=0 // pred_region
    _
  $region45: #{tpu_custom_call.1} parent=0 // pred_fallthru
    _

</llo_original>
